<compile_context>
chip_gen: v5e
topology: v5e:2x2
jax: 0.10.0
libtpu: 0.0.40
codegen_flags: <defaults>
</compile_context>

<pallas_src>
import math

import jax
import jax.numpy as jnp
from jax.experimental import pallas as pl
from jax.experimental.pallas import tpu as pltpu

HIDDEN = 300
NUM_EXPERTS = 3
CAPACITY_FACTOR = 1.0        # training capacity factor (module default mode)
EVAL_CAPACITY_FACTOR = 2.0
MIN_CAPACITY = 0
SMALL_S_FALLBACK = 128       # below this token count use the XLA dense path


def _round_up(x, m):
    return (x + m - 1) // m * m


def _cdiv(a, b):
    return -(-a // b)


def _phys_vmem_bytes():
    try:
        return int(pltpu.get_tpu_info().vmem_capacity_bytes)
    except Exception:
        return 64 * 2 ** 20   # conservative (v7x per-TC VMEM)


# ----------------------------------------------------------------------------
# Fused dispatch + expert Linear + combine Pallas kernel
# ----------------------------------------------------------------------------
def _moe_kernel(x_ref, cw_ref, w_ref, b_ref, out_ref, acc_ref):
    """grid = (token tile i, capacity chunk c).

    x_ref   : (TS, Hp)     bf16  token tile (resident across c)
    cw_ref  : (E, TS, TC)  bf16  combine weights for (tile i, chunk c)
    w_ref   : (E, Hp, Hp)  bf16  expert weights stored as W^T (VMEM-resident)
    b_ref   : (E, 1, Hp)   f32   expert biases (VMEM-resident)
    out_ref : (TS, Hp)     f32   output tile (written once, on last chunk)
    acc_ref : (TS, Hp)     f32   VMEM scratch accumulator
    """
    c = pl.program_id(1)

    @pl.when(c == 0)
    def _():
        acc_ref[...] = jnp.zeros_like(acc_ref)

    x_bf = x_ref[...]                                       # (TS, Hp) bf16
    acc = acc_ref[...]                                      # (TS, Hp) f32

    # E = 3 experts, statically unrolled; weights already resident in VMEM.
    for e in range(w_ref.shape[0]):
        cw = cw_ref[e]                                      # (TS, TC) bf16
        # Dispatch mask derived in-kernel; top-1 softmax gates are >= 1/E so
        # the bf16 transport never flushes a kept token's weight to zero.
        dmask = (cw != 0).astype(jnp.bfloat16)

        # dispatch: disp[c, m] = sum_s dmask[s, c] * x[s, m]
        # TODO(synk): contraction is on the leading (sublane) dim of both
        # operands; if the Mosaic lowering materializes a vxpose here, ship
        # the mask pre-transposed instead.
        disp = jnp.einsum("sc,sm->cm", dmask, x_bf,
                          preferred_element_type=jnp.float32)   # (TC, Hp)

        # expert Linear: y = disp @ W_e^T + b_e  (bf16 MXU, f32 acc, f32 bias)
        y = jnp.dot(disp.astype(jnp.bfloat16), w_ref[e],
                    preferred_element_type=jnp.float32) + b_ref[e]

        # combine: acc[s, m] += sum_c cw[s, c] * y[c, m]
        acc = acc + jnp.dot(cw, y.astype(jnp.bfloat16),
                            preferred_element_type=jnp.float32)

    acc_ref[...] = acc

    @pl.when(c == pl.num_programs(1) - 1)
    def _():
        out_ref[...] = acc_ref[...]
        # NOTE(v5e): could store bf16 here to relieve the single vst slot if
        # downstream accepts it; kept f32 because the module output is f32.


def moe_dispatch_expert_combine(x_bf, cw, w_t, b, *, ts, tc, vmem_cap):
    S_pad, Hp = x_bf.shape
    E, _, Cp = cw.shape
    n_s = S_pad // ts
    n_c = Cp // tc

    # Explicit VMEM budget: double-buffered blocks + scratch + intermediates.
    needed = (
        2 * ts * Hp * 2            # x tile (bf16, double buffered)
        + 2 * E * ts * tc * 2      # combine-weight block (bf16)
        + 2 * E * Hp * Hp * 2      # resident expert weights (bf16)
        + 2 * E * 8 * 128 * 4      # biases (f32, layout-padded)
        + 2 * ts * Hp * 4          # output tile (f32)
        + ts * Hp * 4              # accumulator scratch
        + 3 * tc * Hp * 4          # disp / y intermediates (f32)
        + ts * tc * 2              # dispatch mask
        + 2 * ts * Hp * 4          # partial combine products
    )
    # Leave headroom on-chip: never request more than ~75% of physical VMEM
    # (v7x has only 64 MiB per TC; v5e/v6e have 128 MiB).
    vmem_limit = int(min(0.75 * vmem_cap, max(32 * 2 ** 20, 1.5 * needed)))

    return pl.pallas_call(
        _moe_kernel,
        out_shape=jax.ShapeDtypeStruct((S_pad, Hp), jnp.float32),
        grid_spec=pltpu.PrefetchScalarGridSpec(
            num_scalar_prefetch=0,
            grid=(n_s, n_c),
            in_specs=[
                pl.BlockSpec((ts, Hp), lambda i, c: (i, 0)),
                pl.BlockSpec((E, ts, tc), lambda i, c: (0, i, c)),
                # constant index_map -> weights/bias fetched once, VMEM-resident
                pl.BlockSpec((E, Hp, Hp), lambda i, c: (0, 0, 0)),
                pl.BlockSpec((E, 1, Hp), lambda i, c: (0, 0, 0)),
            ],
            out_specs=pl.BlockSpec((ts, Hp), lambda i, c: (i, 0)),
            scratch_shapes=[pltpu.VMEM((ts, Hp), jnp.float32)],
        ),
        compiler_params=pltpu.CompilerParams(
            dimension_semantics=("parallel", "arbitrary"),
            vmem_limit_bytes=vmem_limit),
    )(x_bf, cw, w_t, b)


# ----------------------------------------------------------------------------
# Top-1 gating (DeepSpeed top1gating semantics) — tiny (S, E) control logic
# kept in plain JAX.  RTS noise uses a deterministic jax.random key instead
# of torch's global RNG.
# ----------------------------------------------------------------------------
def top1gating(logits, capacity, rts_key):
    S, E = logits.shape
    gates = jax.nn.softmax(logits, axis=1)                          # (S, E)

    indices1_s = jnp.argmax(gates, axis=1)
    mask1 = jax.nn.one_hot(indices1_s, E, dtype=jnp.float32)        # (S, E)

    # aux loss (computed on pre-capacity mask, as in DeepSpeed)
    me = jnp.mean(gates, axis=0)
    ce = jnp.mean(mask1, axis=0)
    l_aux = jnp.sum(me * ce) * E

    # Random Token Selection: keep top-`capacity` tokens per expert by random
    # score.
    uniform = jax.random.uniform(rts_key, mask1.shape, dtype=jnp.float32)
    mask1_rand = mask1 * uniform
    _, top_idx = jax.lax.top_k(mask1_rand.T, capacity)              # (E, C)
    keep = jnp.max(jax.nn.one_hot(top_idx, S, dtype=jnp.float32), axis=1)
    mask1 = mask1 * keep.T

    # location of each surviving token inside its expert's capacity buffer
    locations1 = jnp.cumsum(mask1, axis=0) - 1.0
    locations1_s = jnp.sum(locations1 * mask1, axis=1).astype(jnp.int32)

    gates_masked = gates * mask1
    locations1_sc = jax.nn.one_hot(locations1_s, capacity, dtype=jnp.float32)
    # Build directly in (E, S, C) layout — the layout the kernel consumes.
    combine_esc = jnp.einsum("se,sc->esc", gates_masked, locations1_sc)
    return l_aux, combine_esc


def _dense_moe(x, combine_esc, w, b):
    """Pure-XLA dense reference / small-S path (f32).

    x: (S, H); combine_esc: (E, S, C); w: (E, H, H) torch (out,in); b: (E, H).
    """
    dmask = (combine_esc != 0).astype(x.dtype)
    disp = jnp.einsum("esc,sm->ecm", dmask, x)
    y = jnp.einsum("ecm,enm->ecn", disp, w) + b[:, None, :]
    return jnp.einsum("esc,ecn->sn", combine_esc, y)


# ----------------------------------------------------------------------------
# Module
# ----------------------------------------------------------------------------
class Type2MoEPallas:
    def __init__(self, hidden_size=HIDDEN, key=None):
        if key is None:
            key = jax.random.PRNGKey(0)
        E = NUM_EXPERTS
        H = hidden_size
        Hp = _round_up(H, 128)           # lane-dense padded hidden dim
        k1, k2, k3, k4 = jax.random.split(key, 4)
        bound = 1.0 / math.sqrt(H)

        # gate: nn.Linear(hidden_size, num_experts, bias=False); stored (H, E)
        self.wg = jax.random.uniform(k1, (H, E), jnp.float32, -bound, bound)

        # expert: nn.Linear(hidden_size, hidden_size).  DeepSpeed deepcopies
        # the same module per local expert -> identical initial experts.
        w = jax.random.uniform(k2, (H, H), jnp.float32, -bound, bound)
        b = jax.random.uniform(k3, (H,), jnp.float32, -bound, bound)

        # f32 copies for the reference / small-S dense path (torch layout).
        self.w_f32 = jnp.tile(w[None], (E, 1, 1))            # (E, H, H)
        self.b_f32 = jnp.tile(b[None], (E, 1))               # (E, H)

        # padded, transposed bf16 weights for the kernel; f32 bias.
        w_t_pad = jnp.zeros((Hp, Hp), jnp.float32).at[:H, :H].set(w.T)
        b_pad = jnp.zeros((Hp,), jnp.float32).at[:H].set(b)
        self.w_t = jnp.tile(w_t_pad[None], (E, 1, 1)).astype(jnp.bfloat16)
        self.b_pad = jnp.tile(b_pad[None, None, :], (E, 1, 1)).astype(
            jnp.float32)

        self.hidden_size = H
        self.hidden_padded = Hp
        self.rts_key = k4
        self.training = True           # nn.Module default -> capacity_factor=1
        self.vmem_cap = _phys_vmem_bytes()

    # ---- tile selection ------------------------------------------------
    def _pick_tiles(self, S, capacity):
        S16 = _round_up(S, 16)                      # bf16 sublane packing
        big_vmem = self.vmem_cap >= 100 * 2 ** 20   # v5e/v6e (128 MiB)
        max_ts = 512 if big_vmem else 256
        # >= 2 token tiles whenever possible so the "parallel" axis can be
        # sharded across TensorCores (v7x megacore).
        n_tiles = max(2, _cdiv(S16, max_ts))
        ts = _round_up(_cdiv(S16, n_tiles), 16)
        S_pad = _round_up(S16, ts)

        Cp = _round_up(max(capacity, 1), 128)
        if Cp <= 512:
            tc = Cp
        else:                       # tile capacity; pick a divisor <= 512
            tc = 128
            for cand in (512, 384, 256):
                if Cp % cand == 0:
                    tc = cand
                    break
        return ts, S_pad, tc, Cp

    def _pallas_forward(self, x, combine_esc, S, capacity):
        H, Hp, E = self.hidden_size, self.hidden_padded, NUM_EXPERTS
        ts, S_pad, tc, Cp = self._pick_tiles(S, capacity)

        x_bf = jnp.zeros((S_pad, Hp), jnp.bfloat16).at[:S, :H].set(
            x.astype(jnp.bfloat16))
        cw = jnp.zeros((E, S_pad, Cp), jnp.bfloat16).at[:, :S, :capacity].set(
            combine_esc.astype(jnp.bfloat16))

        out = moe_dispatch_expert_combine(
            x_bf, cw, self.w_t, self.b_pad, ts=ts, tc=tc,
            vmem_cap=self.vmem_cap)
        return out[:S, :H]

    def _forward(self, features, use_pallas):
        H = self.hidden_size
        E = NUM_EXPERTS
        orig_shape = features.shape
        x = features.reshape(-1, H).astype(jnp.float32)     # (S, H)
        S = x.shape[0]

        cf = CAPACITY_FACTOR if self.training else EVAL_CAPACITY_FACTOR
        capacity = max(MIN_CAPACITY, int(math.ceil(S / E * cf)))
        capacity = min(max(capacity, 1), S)      # top_k requires k <= S

        # gate logits: tiny (S,H)@(H,3) — left to XLA.
        logits = x @ self.wg
        l_aux, combine_esc = top1gating(logits, capacity, self.rts_key)

        if use_pallas and S >= SMALL_S_FALLBACK:
            out = self._pallas_forward(x, combine_esc, S, capacity)
        else:
            # tiny batches: padding + launch overhead dominate -> plain XLA.
            out = _dense_moe(x, combine_esc, self.w_f32, self.b_f32)

        out = out.reshape(orig_shape).astype(features.dtype)
        # MoE layer returns (output, l_aux, exp_counts); Type2MoE returns
        # only the first two.
        return out, l_aux

    def __call__(self, features):
        return self._forward(features, use_pallas=True)

    def forward_reference(self, features):
        """Pure-JAX f32 dense path with identical routing (same RTS key)."""
        return self._forward(features, use_pallas=False)


if __name__ == "__main__":
    key = jax.random.PRNGKey(0)
    pkey, xkey, xkey2 = jax.random.split(key, 3)
    model = Type2MoEPallas(hidden_size=HIDDEN, key=pkey)

    # Pallas path: (batch=2, seq=64, hidden=300) -> 128 tokens.
    features = jax.random.normal(xkey, (2, 64, HIDDEN), jnp.float32)
    out, l_aux = model(features)
    jax.block_until_ready(out)
    jax.block_until_ready(l_aux)
    assert out.shape == features.shape
    assert out.dtype == features.dtype
    assert l_aux.shape == ()
    assert bool(jnp.all(jnp.isfinite(out)))

    # Correctness vs pure-JAX f32 dense reference (same params / routing).
    # bf16 MXU transport gives ~1e-2-level differences by design.
    out_ref, l_aux_ref = model.forward_reference(features)
    jax.block_until_ready(out_ref)
    max_err = float(jnp.max(jnp.abs(out - out_ref)))
    assert max_err < 0.1, f"max abs err {max_err}"
    assert float(jnp.abs(l_aux - l_aux_ref)) < 1e-6

    # Tiny input exercises the small-S XLA fallback path.
    feats_small = jax.random.normal(xkey2, (2, 8, HIDDEN), jnp.float32)
    out_s, l_aux_s = model(feats_small)
    jax.block_until_ready(out_s)
    assert out_s.shape == feats_small.shape
    assert bool(jnp.all(jnp.isfinite(out_s)))

    print("KERNEL_OK")
</pallas_src>

<mosaic_0001>
module attributes {stable_mosaic.version = 11 : i64} {
  func.func @_moe_kernel(%arg0: i32, %arg1: i32, %arg2: memref<64x384xbf16, #tpu.memory_space<vmem>>, %arg3: memref<3x64x128xbf16, #tpu.memory_space<vmem>>, %arg4: memref<3x384x384xbf16, #tpu.memory_space<vmem>>, %arg5: memref<3x1x384xf32, #tpu.memory_space<vmem>>, %arg6: memref<64x384xf32, #tpu.memory_space<vmem>>, %arg7: memref<64x384xf32, #tpu.memory_space<vmem>>) attributes {dimension_semantics = [#tpu.dimension_semantics<parallel>, #tpu.dimension_semantics<arbitrary>], iteration_bounds = array<i64: 2, 1>, scalar_prefetch = 0 : i64, scratch_operands = 1 : i64, tpu.core_type = #tpu.core_type<tc>, window_params = [{transform_indices = @transform_0, window_bounds = array<i64: 64, 384>}, {transform_indices = @transform_1, window_bounds = array<i64: 3, 64, 128>}, {pipeline_mode = #tpu.pipeline_mode<synchronous>, transform_indices = @transform_2, window_bounds = array<i64: 3, 384, 384>}, {pipeline_mode = #tpu.pipeline_mode<synchronous>, transform_indices = @transform_3, window_bounds = array<i64: 3, 1, 384>}, {transform_indices = @transform_4, window_bounds = array<i64: 64, 384>}]} {
    %c0_i32 = arith.constant 0 : i32
    %0 = arith.cmpi eq, %arg1, %c0_i32 : i32
    %1 = arith.extui %0 : i1 to i32
    %c0_i32_0 = arith.constant 0 : i32
    %2 = arith.cmpi ne, %1, %c0_i32_0 : i32
    scf.if %2 {
      %cst_44 = arith.constant 0.000000e+00 : f32
      %66 = vector.broadcast %cst_44 : f32 to vector<64x384xf32>
      %c0_45 = arith.constant 0 : index
      %c0_46 = arith.constant 0 : index
      %67 = vector.load %arg7[%c0_45, %c0_46] : memref<64x384xf32, #tpu.memory_space<vmem>>, vector<64x384xf32>
      tpu.vector_store %arg7[%c0_45, %c0_46], %66 {strides = array<i32>} : memref<64x384xf32, #tpu.memory_space<vmem>>, vector<64x384xf32>,
    } else {
    }
    %c0 = arith.constant 0 : index
    %c0_1 = arith.constant 0 : index
    %3 = vector.load %arg2[%c0, %c0_1] : memref<64x384xbf16, #tpu.memory_space<vmem>>, vector<64x384xbf16>
    %c0_2 = arith.constant 0 : index
    %c0_3 = arith.constant 0 : index
    %4 = vector.load %arg7[%c0_2, %c0_3] : memref<64x384xf32, #tpu.memory_space<vmem>>, vector<64x384xf32>
    %c0_4 = arith.constant 0 : index
    %c0_5 = arith.constant 0 : index
    %c0_6 = arith.constant 0 : index
    %5 = vector.load %arg3[%c0_4, %c0_5, %c0_6] : memref<3x64x128xbf16, #tpu.memory_space<vmem>>, vector<1x64x128xbf16>
    %6 = vector.shape_cast %5 : vector<1x64x128xbf16> to vector<64x128xbf16>
    %cst = arith.constant 0.000000e+00 : bf16
    %7 = vector.broadcast %cst : bf16 to vector<64x128xbf16>
    %8 = arith.cmpf one, %6, %7 : vector<64x128xbf16>
    %9 = arith.extui %8 : vector<64x128xi1> to vector<64x128xi32>
    %10 = arith.sitofp %9 : vector<64x128xi32> to vector<64x128xf32>
    %11 = arith.truncf %10 : vector<64x128xf32> to vector<64x128xbf16>
    "tpu.trace_start"() <{level = 10 : i32, message = "sc,sm->cm"}> : () -> ()
    %cst_7 = arith.constant dense<0.000000e+00> : vector<128x384xf32>
    %12 = tpu.matmul %11, %3, %cst_7 {dimension_numbers = #tpu.dot_dimension_numbers<[0], [0], [1], [1], [0, 1, 1, 1], [], []>} : vector<64x128xbf16>, vector<64x384xbf16>, vector<128x384xf32> -> vector<128x384xf32>
    "tpu.trace_stop"() : () -> ()
    %13 = arith.truncf %12 : vector<128x384xf32> to vector<128x384xbf16>
    %c0_8 = arith.constant 0 : index
    %c0_9 = arith.constant 0 : index
    %c0_10 = arith.constant 0 : index
    %14 = vector.load %arg4[%c0_8, %c0_9, %c0_10] : memref<3x384x384xbf16, #tpu.memory_space<vmem>>, vector<1x384x384xbf16>
    %15 = vector.shape_cast %14 : vector<1x384x384xbf16> to vector<384x384xbf16>
    %cst_11 = arith.constant dense<0.000000e+00> : vector<128x384xf32>
    %16 = tpu.matmul %13, %15, %cst_11 {dimension_numbers = #tpu.dot_dimension_numbers<[1], [0], [0], [1], [0, 0, 1, 1], [], []>} : vector<128x384xbf16>, vector<384x384xbf16>, vector<128x384xf32> -> vector<128x384xf32>
    %c0_12 = arith.constant 0 : index
    %c0_13 = arith.constant 0 : index
    %c0_14 = arith.constant 0 : index
    %17 = vector.load %arg5[%c0_12, %c0_13, %c0_14] : memref<3x1x384xf32, #tpu.memory_space<vmem>>, vector<1x1x384xf32>
    %18 = vector.shape_cast %17 : vector<1x1x384xf32> to vector<1x384xf32>
    %19 = vector.broadcast %18 : vector<1x384xf32> to vector<128x384xf32>
    %20 = arith.addf %16, %19 : vector<128x384xf32>
    %21 = arith.truncf %20 : vector<128x384xf32> to vector<128x384xbf16>
    %cst_15 = arith.constant dense<0.000000e+00> : vector<64x384xf32>
    %22 = tpu.matmul %6, %21, %cst_15 {dimension_numbers = #tpu.dot_dimension_numbers<[1], [0], [0], [1], [0, 0, 1, 1], [], []>} : vector<64x128xbf16>, vector<128x384xbf16>, vector<64x384xf32> -> vector<64x384xf32>
    %23 = arith.addf %4, %22 : vector<64x384xf32>
    %c1 = arith.constant 1 : index
    %c0_16 = arith.constant 0 : index
    %c0_17 = arith.constant 0 : index
    %24 = vector.load %arg3[%c1, %c0_16, %c0_17] : memref<3x64x128xbf16, #tpu.memory_space<vmem>>, vector<1x64x128xbf16>
    %25 = vector.shape_cast %24 : vector<1x64x128xbf16> to vector<64x128xbf16>
    %cst_18 = arith.constant 0.000000e+00 : bf16
    %26 = vector.broadcast %cst_18 : bf16 to vector<64x128xbf16>
    %27 = arith.cmpf one, %25, %26 : vector<64x128xbf16>
    %28 = arith.extui %27 : vector<64x128xi1> to vector<64x128xi32>
    %29 = arith.sitofp %28 : vector<64x128xi32> to vector<64x128xf32>
    %30 = arith.truncf %29 : vector<64x128xf32> to vector<64x128xbf16>
    "tpu.trace_start"() <{level = 10 : i32, message = "sc,sm->cm"}> : () -> ()
    %cst_19 = arith.constant dense<0.000000e+00> : vector<128x384xf32>
    %31 = tpu.matmul %30, %3, %cst_19 {dimension_numbers = #tpu.dot_dimension_numbers<[0], [0], [1], [1], [0, 1, 1, 1], [], []>} : vector<64x128xbf16>, vector<64x384xbf16>, vector<128x384xf32> -> vector<128x384xf32>
    "tpu.trace_stop"() : () -> ()
    %32 = arith.truncf %31 : vector<128x384xf32> to vector<128x384xbf16>
    %c1_20 = arith.constant 1 : index
    %c0_21 = arith.constant 0 : index
    %c0_22 = arith.constant 0 : index
    %33 = vector.load %arg4[%c1_20, %c0_21, %c0_22] : memref<3x384x384xbf16, #tpu.memory_space<vmem>>, vector<1x384x384xbf16>
    %34 = vector.shape_cast %33 : vector<1x384x384xbf16> to vector<384x384xbf16>
    %cst_23 = arith.constant dense<0.000000e+00> : vector<128x384xf32>
    %35 = tpu.matmul %32, %34, %cst_23 {dimension_numbers = #tpu.dot_dimension_numbers<[1], [0], [0], [1], [0, 0, 1, 1], [], []>} : vector<128x384xbf16>, vector<384x384xbf16>, vector<128x384xf32> -> vector<128x384xf32>
    %c1_24 = arith.constant 1 : index
    %c0_25 = arith.constant 0 : index
    %c0_26 = arith.constant 0 : index
    %36 = vector.load %arg5[%c1_24, %c0_25, %c0_26] : memref<3x1x384xf32, #tpu.memory_space<vmem>>, vector<1x1x384xf32>
    %37 = vector.shape_cast %36 : vector<1x1x384xf32> to vector<1x384xf32>
    %38 = vector.broadcast %37 : vector<1x384xf32> to vector<128x384xf32>
    %39 = arith.addf %35, %38 : vector<128x384xf32>
    %40 = arith.truncf %39 : vector<128x384xf32> to vector<128x384xbf16>
    %cst_27 = arith.constant dense<0.000000e+00> : vector<64x384xf32>
    %41 = tpu.matmul %25, %40, %cst_27 {dimension_numbers = #tpu.dot_dimension_numbers<[1], [0], [0], [1], [0, 0, 1, 1], [], []>} : vector<64x128xbf16>, vector<128x384xbf16>, vector<64x384xf32> -> vector<64x384xf32>
    %42 = arith.addf %23, %41 : vector<64x384xf32>
    %c2 = arith.constant 2 : index
    %c0_28 = arith.constant 0 : index
    %c0_29 = arith.constant 0 : index
    %43 = vector.load %arg3[%c2, %c0_28, %c0_29] : memref<3x64x128xbf16, #tpu.memory_space<vmem>>, vector<1x64x128xbf16>
    %44 = vector.shape_cast %43 : vector<1x64x128xbf16> to vector<64x128xbf16>
    %cst_30 = arith.constant 0.000000e+00 : bf16
    %45 = vector.broadcast %cst_30 : bf16 to vector<64x128xbf16>
    %46 = arith.cmpf one, %44, %45 : vector<64x128xbf16>
    %47 = arith.extui %46 : vector<64x128xi1> to vector<64x128xi32>
    %48 = arith.sitofp %47 : vector<64x128xi32> to vector<64x128xf32>
    %49 = arith.truncf %48 : vector<64x128xf32> to vector<64x128xbf16>
    "tpu.trace_start"() <{level = 10 : i32, message = "sc,sm->cm"}> : () -> ()
    %cst_31 = arith.constant dense<0.000000e+00> : vector<128x384xf32>
    %50 = tpu.matmul %49, %3, %cst_31 {dimension_numbers = #tpu.dot_dimension_numbers<[0], [0], [1], [1], [0, 1, 1, 1], [], []>} : vector<64x128xbf16>, vector<64x384xbf16>, vector<128x384xf32> -> vector<128x384xf32>
    "tpu.trace_stop"() : () -> ()
    %51 = arith.truncf %50 : vector<128x384xf32> to vector<128x384xbf16>
    %c2_32 = arith.constant 2 : index
    %c0_33 = arith.constant 0 : index
    %c0_34 = arith.constant 0 : index
    %52 = vector.load %arg4[%c2_32, %c0_33, %c0_34] : memref<3x384x384xbf16, #tpu.memory_space<vmem>>, vector<1x384x384xbf16>
    %53 = vector.shape_cast %52 : vector<1x384x384xbf16> to vector<384x384xbf16>
    %cst_35 = arith.constant dense<0.000000e+00> : vector<128x384xf32>
    %54 = tpu.matmul %51, %53, %cst_35 {dimension_numbers = #tpu.dot_dimension_numbers<[1], [0], [0], [1], [0, 0, 1, 1], [], []>} : vector<128x384xbf16>, vector<384x384xbf16>, vector<128x384xf32> -> vector<128x384xf32>
    %c2_36 = arith.constant 2 : index
    %c0_37 = arith.constant 0 : index
    %c0_38 = arith.constant 0 : index
    %55 = vector.load %arg5[%c2_36, %c0_37, %c0_38] : memref<3x1x384xf32, #tpu.memory_space<vmem>>, vector<1x1x384xf32>
    %56 = vector.shape_cast %55 : vector<1x1x384xf32> to vector<1x384xf32>
    %57 = vector.broadcast %56 : vector<1x384xf32> to vector<128x384xf32>
    %58 = arith.addf %54, %57 : vector<128x384xf32>
    %59 = arith.truncf %58 : vector<128x384xf32> to vector<128x384xbf16>
    %cst_39 = arith.constant dense<0.000000e+00> : vector<64x384xf32>
    %60 = tpu.matmul %44, %59, %cst_39 {dimension_numbers = #tpu.dot_dimension_numbers<[1], [0], [0], [1], [0, 0, 1, 1], [], []>} : vector<64x128xbf16>, vector<128x384xbf16>, vector<64x384xf32> -> vector<64x384xf32>
    %61 = arith.addf %42, %60 : vector<64x384xf32>
    %c0_40 = arith.constant 0 : index
    %c0_41 = arith.constant 0 : index
    %62 = vector.load %arg7[%c0_40, %c0_41] : memref<64x384xf32, #tpu.memory_space<vmem>>, vector<64x384xf32>
    tpu.vector_store %arg7[%c0_40, %c0_41], %61 {strides = array<i32>} : memref<64x384xf32, #tpu.memory_space<vmem>>, vector<64x384xf32>,
    %c0_i32_42 = arith.constant 0 : i32
    %63 = arith.cmpi eq, %arg1, %c0_i32_42 : i32
    %64 = arith.extui %63 : i1 to i32
    %c0_i32_43 = arith.constant 0 : i32
    %65 = arith.cmpi ne, %64, %c0_i32_43 : i32
    scf.if %65 {
      %c0_44 = arith.constant 0 : index
      %c0_45 = arith.constant 0 : index
      %66 = vector.load %arg7[%c0_44, %c0_45] : memref<64x384xf32, #tpu.memory_space<vmem>>, vector<64x384xf32>
      %c0_46 = arith.constant 0 : index
      %c0_47 = arith.constant 0 : index
      %67 = vector.load %arg6[%c0_46, %c0_47] : memref<64x384xf32, #tpu.memory_space<vmem>>, vector<64x384xf32>
      tpu.vector_store %arg6[%c0_46, %c0_47], %66 {strides = array<i32>} : memref<64x384xf32, #tpu.memory_space<vmem>>, vector<64x384xf32>,
    } else {
    }
    return
  }
  func.func @transform_0(%arg0: i32, %arg1: i32) -> (i32, i32) {
    %c0_i32 = arith.constant 0 : i32
    %c0_i32_0 = arith.constant 0 : i32
    return %arg0, %c0_i32 : i32, i32
  }
  func.func @transform_1(%arg0: i32, %arg1: i32) -> (i32, i32, i32) {
    %c0_i32 = arith.constant 0 : i32
    %c0_i32_0 = arith.constant 0 : i32
    return %c0_i32, %arg0, %arg1 : i32, i32, i32
  }
  func.func @transform_2(%arg0: i32, %arg1: i32) -> (i32, i32, i32) {
    %c0_i32 = arith.constant 0 : i32
    %c0_i32_0 = arith.constant 0 : i32
    %c0_i32_1 = arith.constant 0 : i32
    %c0_i32_2 = arith.constant 0 : i32
    return %c0_i32, %c0_i32_0, %c0_i32_1 : i32, i32, i32
  }
  func.func @transform_3(%arg0: i32, %arg1: i32) -> (i32, i32, i32) {
    %c0_i32 = arith.constant 0 : i32
    %c0_i32_0 = arith.constant 0 : i32
    %c0_i32_1 = arith.constant 0 : i32
    %c0_i32_2 = arith.constant 0 : i32
    return %c0_i32, %c0_i32_0, %c0_i32_1 : i32, i32, i32
  }
  func.func @transform_4(%arg0: i32, %arg1: i32) -> (i32, i32) {
    %c0_i32 = arith.constant 0 : i32
    %c0_i32_0 = arith.constant 0 : i32
    return %arg0, %c0_i32 : i32, i32
  }
}

</mosaic_0001>

<llo_original>
// kernel: tpu_custom_call.1
$region0: #{tpu_custom_call.1}
  #allocation0 [shape = 'u32[]', space=smem, size = 0x4, offset = 0x4, fixed_abs, tag = 'smem constant byte address 0x4 - core index']
  #allocation1 [shape = 'u32[72,128]{1,0:T(1,128)}', space=vmem, size = 0x9000, scoped, tag = 'internal scratch']
  #allocation2 [shape = 'f32[64,384]{1,0:T(8,128)}', space=vmem, size = 0x18000, scoped, tag = 'scratch operand']
  #allocation12 [shape = 's32[]', space=sflag, size = 0x4, offset = 0, fixed_abs, tag = 'sflag constant byte address 0x0 - dummy sync flag']
  %s0 = inlined_call_operand.hbm [shape: bf16[128,384], index: 0, kind: input, shape index: {}]
  %s1 = inlined_call_operand.hbm [shape: bf16[3,128,128], index: 1, kind: input, shape index: {}]
  %s2 = inlined_call_operand.hbm [shape: bf16[3,384,384], index: 2, kind: input, shape index: {}]
  %s3 = inlined_call_operand.hbm [shape: f32[3,1,384], index: 3, kind: input, shape index: {}]
  %s4 = inlined_call_operand.hbm [shape: f32[128,384], index: 4, kind: output, shape index: {}]
  %s5 = sld [smem:[#allocation0]]
  $region73: #{tpu_custom_call.1} parent=0
    _
  %s7 = ssub.s32 1, %s5
  %s8 = scalar_select 0, %s7, %s5
  $region1: #{tpu_custom_call.1} parent=0
    #allocation3 [shape = 'u8[98304]{0}', space=vmem, size = 0x18000, scoped, tag = 'input window, operand 0']
    #allocation4 [shape = 's32[2]{0}', space=sflag, size = 0x8, scoped, tag = 'scoped memory for tpu_custom_call.1']
    #allocation5 [shape = 's32[2]{0}', space=sflag, size = 0x8, scoped, tag = 'scoped memory for tpu_custom_call.1']
    #allocation6 [shape = 'u8[98304]{0}', space=vmem, size = 0x18000, scoped, tag = 'input window, operand 1']
    #allocation7 [shape = 's32[2]{0}', space=sflag, size = 0x8, scoped, tag = 'scoped memory for tpu_custom_call.1']
    #allocation8 [shape = 'u8[884736]{0}', space=vmem, size = 0xd8000, scoped, tag = 'input window, operand 2, single buffered']
    #allocation9 [shape = 'u8[4608]{0}', space=vmem, size = 0x1400, scoped, tag = 'input window, operand 3, single buffered']
    #allocation10 [shape = 's32[1]{0}', space=sflag, size = 0x4, scoped, tag = 'scoped memory for tpu_custom_call.1']
    #allocation11 [shape = 'u8[196608]{0}', space=vmem, size = 0x30000, scoped, tag = 'output window, operand 0']
    %9 = vsyncpa [#allocation4], 0
    %s10 = scalar_lea.sflag [#allocation4], 1
    %11 = vsyncpa %s10, 0
    %12 = vsyncpa [#allocation7], 0
    %s13 = scalar_lea.sflag [#allocation7], 1
    %14 = vsyncpa %s13, 0
    %15 = vsyncpa [#allocation10], 0
    %16 = vsyncpa [#allocation5], 0
    %s17 = scalar_lea.sflag [#allocation5], 1
    %18 = vsyncpa %s17, 0
    loop: start=0, step=1, limit=4
    $region2: #{tpu_custom_call.1} parent=1 // loop_pre_header
      _
    $region3: #{tpu_custom_call.1} parent=1 // loop_header
      %s20 = sphi 0, %s24
      %p21 = scmp.ge.s32.totalorder %s20, 4
      %s27 = sphi 0, %s39
      %s28 = sphi 0, %s35
      %s29 = sphi 0, %s27
      %s30 = sphi 0, %s28
      %s31 = sphi 0, %s29
      %s32 = sphi 0, %s30
      %s42 = sphi 0, %s44
      %s45 = sphi 0, %s42
      %s46 = sphi 0, %s45
      %s62 = sphi 0, %s46
      %s70 = sphi 0, %s72
      %s73 = sphi 0, %s70
      %s74 = sphi 0, %s73
      %s90 = sphi 0, %s74
      %s94 = sphi 0, %s94
      %s96 = sphi 0, %s94
      %s97 = sphi 0, %s96
      %s111 = sphi 0, %s97
      %s115 = sphi 0, %s115
      %s117 = sphi 0, %s115
      %s118 = sphi 0, %s117
      %s132 = sphi 0, %s118
      %s138 = sphi 0, %s140
      %s141 = sphi 0, %s138
      %s142 = sphi 0, %s141
      %s158 = sphi 0, %s142
    $region4: #{tpu_custom_call.1} parent=1 // loop_header_branch
      %23 = sbr.rel (%p21) target = $region8
    $region5: #{tpu_custom_call.1} parent=1 // loop_body
      %s25 = ssub.s32 %s20, 1
      %s26 = ssub.s32 %s20, 2
      %s33 = sadd.s32 1, %s28
      %p34 = scmp.ge.s32.totalorder %s33, 1
      %s35 = scalar_select %p34, 0, %s33
      %s36 = sadd.s32 1, %s27
      %s37 = scalar_select %p34, %s36, %s27
      %p38 = scmp.ge.s32.totalorder %s37, 2
      %s39 = scalar_select %p38, 0, %s37
      %s40 = ssub.s32 %s27, %s39
      %p41 = scmp.eq.s32.totalorder %s40, 0
      %s43 = sadd.s32 %s42, 1
      %s44 = scalar_select %p41, %s42, %s43
      %p47 = pneg %p41
      %p48 = scmp.eq.s32.totalorder %s20, 1
      %p49 = por %p47, %p48
      %p50 = scmp.ne.s32.totalorder %s42, %s45
      %p51 = scmp.eq.s32.totalorder %s20, 0
      %p52 = por %p50, %p51
      %p53 = scmp.ne.s32.totalorder %s42, %s45
      %p54 = scmp.eq.s32.totalorder %s25, 1
      %p55 = por %p53, %p54
      %p56 = scmp.ne.s32.totalorder %s45, %s46
      %p57 = scmp.eq.s32.totalorder %s25, 0
      %p58 = por %p56, %p57
      %p59 = scmp.ne.s32.totalorder %s45, %s46
      %p60 = scmp.eq.s32.totalorder %s26, 1
      %p61 = por %p59, %p60
      %p63 = scmp.ne.s32.totalorder %s46, %s62
      %p64 = scmp.eq.s32.totalorder %s26, 0
      %p65 = por %p63, %p64
      %s66 = ssub.s32 %s27, %s39
      %s67 = ssub.s32 %s28, %s35
      %s68 = sor.u32 %s66, %s67
      %p69 = scmp.eq.s32.totalorder %s68, 0
      %s71 = sadd.s32 %s70, 1
      %s72 = scalar_select %p69, %s70, %s71
      %p75 = pneg %p69
      %p76 = scmp.eq.s32.totalorder %s20, 1
      %p77 = por %p75, %p76
      %p78 = scmp.ne.s32.totalorder %s70, %s73
      %p79 = scmp.eq.s32.totalorder %s20, 0
      %p80 = por %p78, %p79
      %p81 = scmp.ne.s32.totalorder %s70, %s73
      %p82 = scmp.eq.s32.totalorder %s25, 1
      %p83 = por %p81, %p82
      %p84 = scmp.ne.s32.totalorder %s73, %s74
      %p85 = scmp.eq.s32.totalorder %s25, 0
      %p86 = por %p84, %p85
      %p87 = scmp.ne.s32.totalorder %s73, %s74
      %p88 = scmp.eq.s32.totalorder %s26, 1
      %p89 = por %p87, %p88
      %p91 = scmp.ne.s32.totalorder %s74, %s90
      %p92 = scmp.eq.s32.totalorder %s26, 0
      %p93 = por %p91, %p92
      %s95 = sadd.s32 %s94, 1
      %p98 = scmp.eq.s32.totalorder %s20, 1
      %p99 = scmp.ne.s32.totalorder %s94, %s96
      %p100 = scmp.eq.s32.totalorder %s20, 0
      %p101 = por %p99, %p100
      %p102 = scmp.ne.s32.totalorder %s94, %s96
      %p103 = scmp.eq.s32.totalorder %s25, 1
      %p104 = por %p102, %p103
      %p105 = scmp.ne.s32.totalorder %s96, %s97
      %p106 = scmp.eq.s32.totalorder %s25, 0
      %p107 = por %p105, %p106
      %p108 = scmp.ne.s32.totalorder %s96, %s97
      %p109 = scmp.eq.s32.totalorder %s26, 1
      %p110 = por %p108, %p109
      %p112 = scmp.ne.s32.totalorder %s97, %s111
      %p113 = scmp.eq.s32.totalorder %s26, 0
      %p114 = por %p112, %p113
      %s116 = sadd.s32 %s115, 1
      %p119 = scmp.eq.s32.totalorder %s20, 1
      %p120 = scmp.ne.s32.totalorder %s115, %s117
      %p121 = scmp.eq.s32.totalorder %s20, 0
      %p122 = por %p120, %p121
      %p123 = scmp.ne.s32.totalorder %s115, %s117
      %p124 = scmp.eq.s32.totalorder %s25, 1
      %p125 = por %p123, %p124
      %p126 = scmp.ne.s32.totalorder %s117, %s118
      %p127 = scmp.eq.s32.totalorder %s25, 0
      %p128 = por %p126, %p127
      %p129 = scmp.ne.s32.totalorder %s117, %s118
      %p130 = scmp.eq.s32.totalorder %s26, 1
      %p131 = por %p129, %p130
      %p133 = scmp.ne.s32.totalorder %s118, %s132
      %p134 = scmp.eq.s32.totalorder %s26, 0
      %p135 = por %p133, %p134
      %s136 = ssub.s32 %s27, %s39
      %p137 = scmp.eq.s32.totalorder %s136, 0
      %s139 = sadd.s32 %s138, 1
      %s140 = scalar_select %p137, %s138, %s139
      %p143 = pneg %p137
      %p144 = scmp.eq.s32.totalorder %s20, 1
      %p145 = por %p143, %p144
      %p146 = scmp.ne.s32.totalorder %s138, %s141
      %p147 = scmp.eq.s32.totalorder %s20, 0
      %p148 = por %p146, %p147
      %p149 = scmp.ne.s32.totalorder %s138, %s141
      %p150 = scmp.eq.s32.totalorder %s25, 1
      %p151 = por %p149, %p150
      %p152 = scmp.ne.s32.totalorder %s141, %s142
      %p153 = scmp.eq.s32.totalorder %s25, 0
      %p154 = por %p152, %p153
      %p155 = scmp.ne.s32.totalorder %s141, %s142
      %p156 = scmp.eq.s32.totalorder %s26, 1
      %p157 = por %p155, %p156
      %p159 = scmp.ne.s32.totalorder %s142, %s158
      %p160 = scmp.eq.s32.totalorder %s26, 0
      %p161 = por %p159, %p160
      %p162 = scmp.le.s32.totalorder 1, %s20
      %p163 = scmp.lt.s32.totalorder %s20, 3
      %p164 = pnand %p162, %p163
      %p165 = pneg %p164
      // Predicated region
      $region9: #{tpu_custom_call.1} parent=5 // pred_check
        _
      $region10: #{tpu_custom_call.1} parent=5 // pred_check_branch
        %167 = sbr.rel (%p164) target = $region12
      $region11: #{tpu_custom_call.1} parent=5 // pred_region
        %s168 = ssub.s32 %s20, 1
        // Predicated region
        $region13: #{tpu_custom_call.1} parent=11 // pred_check
          %p169 = pneg %p107
        $region14: #{tpu_custom_call.1} parent=11 // pred_check_branch
          %171 = sbr.rel (%p169) target = $region16
        $region15: #{tpu_custom_call.1} parent=11 // pred_region
          %173 = vsyncadd [#allocation7], 0
          %s174 = sshll.u32 %s2, 4
          %s175 = int_to_ptr.hbm [resolvable:$true] %s174
          %s176 = sshll.u32 [#allocation8], 4
          %s177 = int_to_ptr.vmem [resolvable:$true] %s176
          %182 = dma.hbm_to_vmem [thread:$0]  %s175, 27648, %s177, [#allocation7], 192, 192, 12
        $region16: #{tpu_custom_call.1} parent=11 // pred_fallthru
          _
        // Predicated region
        $region17: #{tpu_custom_call.1} parent=11 // pred_check
          %p183 = pneg %p128
        $region18: #{tpu_custom_call.1} parent=11 // pred_check_branch
          %185 = sbr.rel (%p183) target = $region20
        $region19: #{tpu_custom_call.1} parent=11 // pred_region
          %187 = vsyncadd [#allocation10], 0
          %s188 = sshll.u32 %s3, 4
          %s189 = int_to_ptr.hbm [resolvable:$true] %s188
          %s190 = sshll.u32 [#allocation9], 4
          %s191 = int_to_ptr.vmem [resolvable:$true] %s190
          %196 = dma.hbm_to_vmem [thread:$0]  %s189, 144, %s191, [#allocation10], 48, 48, 3
        $region20: #{tpu_custom_call.1} parent=11 // pred_fallthru
          _
      $region12: #{tpu_custom_call.1} parent=5 // pred_fallthru
        _
      %p197 = scmp.lt.s32.totalorder %s20, 2
      // Predicated region
      $region21: #{tpu_custom_call.1} parent=5 // pred_check
        %p198 = pneg %p197
      $region22: #{tpu_custom_call.1} parent=5 // pred_check_branch
        %200 = sbr.rel (%p198) target = $region24
      $region23: #{tpu_custom_call.1} parent=5 // pred_region
        // Predicated region
        $region25: #{tpu_custom_call.1} parent=23 // pred_check
          %p201 = pneg %p52
        $region26: #{tpu_custom_call.1} parent=23 // pred_check_branch
          %203 = sbr.rel (%p201) target = $region28
        $region27: #{tpu_custom_call.1} parent=23 // pred_region
          %s204 = sand.u32 %s42, 1
          %s205 = scalar_lea.sflag [#allocation4], %s204
          %s206 = sand.u32 %s42, 1
          %s207 = smul.addr %s206, 96
          %s208 = scalar_lea.vmem [#allocation3], %s207
          %s209 = smul.u32 8, %s27
          %211 = vsyncadd %s205, 0
          %s212 = smul.addr %s209, 3
          %s213 = smul.addr %s212, 4
          %s214 = scalar_lea.hbm %s0, %s213
          %s215 = sshll.u32 %s214, 4
          %s216 = int_to_ptr.hbm [resolvable:$true] %s215
          %s217 = sshll.u32 %s208, 4
          %s218 = int_to_ptr.vmem [resolvable:$true] %s217
          %223 = dma.hbm_to_vmem [thread:$0]  %s216, 1536, %s218, %s205, 192, 192, 12
        $region28: #{tpu_custom_call.1} parent=23 // pred_fallthru
          _
        // Predicated region
        $region29: #{tpu_custom_call.1} parent=23 // pred_check
          %p224 = pneg %p80
        $region30: #{tpu_custom_call.1} parent=23 // pred_check_branch
          %226 = sbr.rel (%p224) target = $region32
        $region31: #{tpu_custom_call.1} parent=23 // pred_region
          #allocation13 [shape = 'u32[6]{0}', space=smem, size = 0x18, scoped, tag = 'DMA stride descriptor']
          %s227 = sand.u32 %s20, 1
          %s228 = scalar_lea.sflag [#allocation7], %s227
          %s229 = sand.u32 %s70, 1
          %s230 = smul.addr %s229, 96
          %s231 = scalar_lea.vmem [#allocation6], %s230
          %s232 = smul.u32 8, %s27
          %234 = vsyncadd %s228, 0
          %s235 = sadd.s32 %s28, %s232
          %s236 = smul.addr %s235, 4
          %s237 = scalar_lea.hbm %s1, %s236
          %s239 = sshll.u32 1, 14
          %s240 = sxor.u32 4294967295, %s239
          %s242 = sld [smem:[#allocation0]]
          %s243 = sadd.s32 2, %s242
          %s245 = sshll.u32 7, 26
          %s246 = sxor.u32 4294967295, %s245
          %s247 = sand.u32 0, %s246
          %s248 = sshll.u32 %s243, 26
          %s249 = sor.u32 %s247, %s248
          %s250 = sshll.u32 %s237, 4
          %s251 = int_to_ptr.hbm [resolvable:$true] %s250
          %s252 = sshll.u32 %s231, 4
          %s253 = int_to_ptr.vmem [resolvable:$true] %s252
          %259 = sst [smem:[#allocation13]] 1024
          %s260 = scalar_lea.smem [#allocation13], 1
          %261 = sst [smem:[%s260]] 512
          %s262 = scalar_lea.smem [#allocation13], 2
          %263 = sst [smem:[%s262]] 8
          %s264 = scalar_lea.smem [#allocation13], 3
          %265 = sst [smem:[%s264]] 64
          %s266 = scalar_lea.smem [#allocation13], 4
          %267 = sst [smem:[%s266]] 64
          %s268 = scalar_lea.smem [#allocation13], 5
          %269 = sst [smem:[%s268]] 4
          %271 = dma.general %s251, 1536, %s253, %s228, [#allocation12], [#allocation13], %s249, 0
        $region32: #{tpu_custom_call.1} parent=23 // pred_fallthru
          _
      $region24: #{tpu_custom_call.1} parent=5 // pred_fallthru
        _
      %p272 = scmp.le.s32.totalorder 1, %s20
      %p273 = scmp.lt.s32.totalorder %s20, 3
      %p274 = pnand %p272, %p273
      %p275 = pneg %p274
      // Predicated region
      $region33: #{tpu_custom_call.1} parent=5 // pred_check
        _
      $region34: #{tpu_custom_call.1} parent=5 // pred_check_branch
        %277 = sbr.rel (%p274) target = $region36
      $region35: #{tpu_custom_call.1} parent=5 // pred_region
        %s278 = ssub.s32 %s20, 1
        %s279 = sand.u32 %s45, 1
        %s280 = scalar_lea.sflag [#allocation4], %s279
        %s281 = sand.u32 %s45, 1
        %s282 = smul.addr %s281, 96
        %s283 = scalar_lea.vmem [#allocation3], %s282
        // Predicated region
        $region37: #{tpu_custom_call.1} parent=35 // pred_check
          %p284 = pneg %p58
        $region38: #{tpu_custom_call.1} parent=35 // pred_check_branch
          %286 = sbr.rel (%p284) target = $region40
        $region39: #{tpu_custom_call.1} parent=35 // pred_region
          %288 = dma.done %s280, 1536
        $region40: #{tpu_custom_call.1} parent=35 // pred_fallthru
          _
        %s289 = sand.u32 %s25, 1
        %s290 = scalar_lea.sflag [#allocation7], %s289
        %s291 = sand.u32 %s73, 1
        %s292 = smul.addr %s291, 96
        %s293 = scalar_lea.vmem [#allocation6], %s292
        // Predicated region
        $region41: #{tpu_custom_call.1} parent=35 // pred_check
          %p294 = pneg %p86
        $region42: #{tpu_custom_call.1} parent=35 // pred_check_branch
          %296 = sbr.rel (%p294) target = $region44
        $region43: #{tpu_custom_call.1} parent=35 // pred_region
          %298 = dma.done %s290, 1536
        $region44: #{tpu_custom_call.1} parent=35 // pred_fallthru
          _
        // Predicated region
        $region45: #{tpu_custom_call.1} parent=35 // pred_check
          %p299 = pneg %p107
        $region46: #{tpu_custom_call.1} parent=35 // pred_check_branch
          %301 = sbr.rel (%p299) target = $region48
        $region47: #{tpu_custom_call.1} parent=35 // pred_region
          %303 = dma.done [#allocation7], 27648
        $region48: #{tpu_custom_call.1} parent=35 // pred_fallthru
          _
        // Predicated region
        $region49: #{tpu_custom_call.1} parent=35 // pred_check
          %p304 = pneg %p128
        $region50: #{tpu_custom_call.1} parent=35 // pred_check_branch
          %306 = sbr.rel (%p304) target = $region52
        $region51: #{tpu_custom_call.1} parent=35 // pred_region
          %308 = dma.done [#allocation10], 144
        $region52: #{tpu_custom_call.1} parent=35 // pred_fallthru
          _
        %s309 = sand.u32 %s45, 1
        %s310 = scalar_lea.sflag [#allocation4], %s309
        %s311 = sand.u32 %s45, 1
        %s312 = smul.addr %s311, 96
        %s313 = scalar_lea.vmem [#allocation3], %s312
        %p314 = pneg %p58
        %p315 = pneg %p55
        %s316 = sand.u32 %s25, 1
        %s317 = scalar_lea.sflag [#allocation7], %s316
        %s318 = sand.u32 %s73, 1
        %s319 = smul.addr %s318, 96
        %s320 = scalar_lea.vmem [#allocation6], %s319
        %p321 = pneg %p86
        %p322 = pneg %p83
        %p323 = pneg %p107
        %p324 = pneg %p104
        %p325 = pneg %p128
        %p326 = pneg %p125
        %p327 = pneg %p154
        %p328 = pneg %p151
        %s329 = sand.u32 %s141, 1
        %s330 = scalar_lea.sflag [#allocation5], %s329
        %s331 = sand.u32 %s141, 1
        %s332 = smul.addr %s331, 192
        %s333 = scalar_lea.vmem [#allocation11], %s332
        %s334 = smul.u32 8, %s29
        %s335 = smul.u32 8, %s29
        %s336 = smul.u32 8, %s29
        %p338 = scmp.eq.s32.totalorder %s30, 0
        // Predicated region
        $region53: #{tpu_custom_call.1} parent=35 // pred_check
          %p339 = pneg %p338
        $region54: #{tpu_custom_call.1} parent=35 // pred_check_branch
          %341 = sbr.rel (%p339) target = $region56
        $region55: #{tpu_custom_call.1} parent=35 // pred_region
          %342 = vst [vmem:[#allocation2] sm:$0xff] 0.0
          %343 = vst [vmem:[#allocation2 + $0x8] sm:$0xff] 0.0
          %344 = vst [vmem:[#allocation2 + $0x10] sm:$0xff] 0.0
          %345 = vst [vmem:[#allocation2 + $0x18] sm:$0xff] 0.0
          %346 = vst [vmem:[#allocation2 + $0x20] sm:$0xff] 0.0
          %347 = vst [vmem:[#allocation2 + $0x28] sm:$0xff] 0.0
          %348 = vst [vmem:[#allocation2 + $0x30] sm:$0xff] 0.0
          %349 = vst [vmem:[#allocation2 + $0x38] sm:$0xff] 0.0
          %350 = vst [vmem:[#allocation2 + $0x40] sm:$0xff] 0.0
          %351 = vst [vmem:[#allocation2 + $0x48] sm:$0xff] 0.0
          %352 = vst [vmem:[#allocation2 + $0x50] sm:$0xff] 0.0
          %353 = vst [vmem:[#allocation2 + $0x58] sm:$0xff] 0.0
          %354 = vst [vmem:[#allocation2 + $0x60] sm:$0xff] 0.0
          %355 = vst [vmem:[#allocation2 + $0x68] sm:$0xff] 0.0
          %356 = vst [vmem:[#allocation2 + $0x70] sm:$0xff] 0.0
          %357 = vst [vmem:[#allocation2 + $0x78] sm:$0xff] 0.0
          %358 = vst [vmem:[#allocation2 + $0x80] sm:$0xff] 0.0
          %359 = vst [vmem:[#allocation2 + $0x88] sm:$0xff] 0.0
          %360 = vst [vmem:[#allocation2 + $0x90] sm:$0xff] 0.0
          %361 = vst [vmem:[#allocation2 + $0x98] sm:$0xff] 0.0
          %362 = vst [vmem:[#allocation2 + $0xa0] sm:$0xff] 0.0
          %363 = vst [vmem:[#allocation2 + $0xa8] sm:$0xff] 0.0
          %364 = vst [vmem:[#allocation2 + $0xb0] sm:$0xff] 0.0
          %365 = vst [vmem:[#allocation2 + $0xb8] sm:$0xff] 0.0
        $region56: #{tpu_custom_call.1} parent=35 // pred_fallthru
          _
        %v366 = vld [vmem:[%s283] sm:$0xff]
        %v367 = vld [vmem:[%s283 + $0x8] sm:$0xf]
        %v368 = vld [vmem:[%s283 + $0xc] sm:$0xff]
        %v369 = vld [vmem:[%s283 + $0x14] sm:$0xf]
        %v370 = vld [vmem:[%s283 + $0x18] sm:$0xff]
        %v371 = vld [vmem:[%s283 + $0x20] sm:$0xf]
        %v372 = vld [vmem:[%s283 + $0x24] sm:$0xff]
        %v373 = vld [vmem:[%s283 + $0x2c] sm:$0xf]
        %v374 = vld [vmem:[%s283 + $0x30] sm:$0xff]
        %v375 = vld [vmem:[%s283 + $0x38] sm:$0xf]
        %v376 = vld [vmem:[%s283 + $0x3c] sm:$0xff]
        %v377 = vld [vmem:[%s283 + $0x44] sm:$0xf]
        %v378 = vld [vmem:[%s283 + $0x48] sm:$0xff]
        %v379 = vld [vmem:[%s283 + $0x50] sm:$0xf]
        %v380 = vld [vmem:[%s283 + $0x54] sm:$0xff]
        %v381 = vld [vmem:[%s283 + $0x5c] sm:$0xf]
        %v382 = vld [vmem:[#allocation2] sm:$0xff]
        %v383 = vld [vmem:[#allocation2 + $0x8] sm:$0xff]
        %v384 = vld [vmem:[#allocation2 + $0x10] sm:$0xff]
        %v385 = vld [vmem:[#allocation2 + $0x18] sm:$0xff]
        %v386 = vld [vmem:[#allocation2 + $0x20] sm:$0xff]
        %v387 = vld [vmem:[#allocation2 + $0x28] sm:$0xff]
        %v388 = vld [vmem:[#allocation2 + $0x30] sm:$0xff]
        %v389 = vld [vmem:[#allocation2 + $0x38] sm:$0xff]
        %v390 = vld [vmem:[#allocation2 + $0x40] sm:$0xff]
        %v391 = vld [vmem:[#allocation2 + $0x48] sm:$0xff]
        %v392 = vld [vmem:[#allocation2 + $0x50] sm:$0xff]
        %v393 = vld [vmem:[#allocation2 + $0x58] sm:$0xff]
        %v394 = vld [vmem:[#allocation2 + $0x60] sm:$0xff]
        %v395 = vld [vmem:[#allocation2 + $0x68] sm:$0xff]
        %v396 = vld [vmem:[#allocation2 + $0x70] sm:$0xff]
        %v397 = vld [vmem:[#allocation2 + $0x78] sm:$0xff]
        %v398 = vld [vmem:[#allocation2 + $0x80] sm:$0xff]
        %v399 = vld [vmem:[#allocation2 + $0x88] sm:$0xff]
        %v400 = vld [vmem:[#allocation2 + $0x90] sm:$0xff]
        %v401 = vld [vmem:[#allocation2 + $0x98] sm:$0xff]
        %v402 = vld [vmem:[#allocation2 + $0xa0] sm:$0xff]
        %v403 = vld [vmem:[#allocation2 + $0xa8] sm:$0xff]
        %v404 = vld [vmem:[#allocation2 + $0xb0] sm:$0xff]
        %v405 = vld [vmem:[#allocation2 + $0xb8] sm:$0xff]
        %v406 = vld [vmem:[%s293] sm:$0xf]
        %v407 = vld [vmem:[%s293 + $0x4] sm:$0xf]
        %v408 = vld [vmem:[%s293 + $0x8] sm:$0xf]
        %v409 = vld [vmem:[%s293 + $0xc] sm:$0xf]
        %v410 = vld [vmem:[%s293 + $0x10] sm:$0xf]
        %v411 = vld [vmem:[%s293 + $0x14] sm:$0xf]
        %v412 = vld [vmem:[%s293 + $0x18] sm:$0xf]
        %v413 = vld [vmem:[%s293 + $0x1c] sm:$0xf]
        %v414 = vunpack.c.l.bf16 %v406
        %v415 = vunpack.c.l.bf16 %v407
        %v416 = vunpack.c.l.bf16 %v408
        %v417 = vunpack.c.l.bf16 %v409
        %v418 = vunpack.c.l.bf16 %v410
        %v419 = vunpack.c.l.bf16 %v411
        %v420 = vunpack.c.l.bf16 %v412
        %v421 = vunpack.c.l.bf16 %v413
        %vm422 = vcmp.ne.f32.partialorder %v414, 0.0
        %vm423 = vcmp.ne.f32.partialorder %v415, 0.0
        %vm424 = vcmp.ne.f32.partialorder %v416, 0.0
        %vm425 = vcmp.ne.f32.partialorder %v417, 0.0
        %vm426 = vcmp.ne.f32.partialorder %v418, 0.0
        %vm427 = vcmp.ne.f32.partialorder %v419, 0.0
        %vm428 = vcmp.ne.f32.partialorder %v420, 0.0
        %vm429 = vcmp.ne.f32.partialorder %v421, 0.0
        %v430 = vsel %vm422, 1, 0
        %v431 = vsel %vm423, 1, 0
        %v432 = vsel %vm424, 1, 0
        %v433 = vsel %vm425, 1, 0
        %v434 = vsel %vm426, 1, 0
        %v435 = vsel %vm427, 1, 0
        %v436 = vsel %vm428, 1, 0
        %v437 = vsel %vm429, 1, 0
        %v438 = vcvt.s32.f32 %v430
        %v439 = vcvt.s32.f32 %v431
        %v440 = vcvt.s32.f32 %v432
        %v441 = vcvt.s32.f32 %v433
        %v442 = vcvt.s32.f32 %v434
        %v443 = vcvt.s32.f32 %v435
        %v444 = vcvt.s32.f32 %v436
        %v445 = vcvt.s32.f32 %v437
        %v446 = vpack.c.bf16 %v439, %v438
        %v447 = vpack.c.bf16 %v441, %v440
        %v448 = vpack.c.bf16 %v443, %v442
        %v449 = vpack.c.bf16 %v445, %v444
        %450 = vxpose.xlu0.c.b16.start [1/8] %v446, 128
        %451 = vxpose.xlu0.c.b16.cont [2/8] %v447, 128
        %452 = vxpose.xlu0.c.b16.cont [3/8] %v448, 128
        %453 = vxpose.xlu0.c.b16.cont [4/8] %v449, 128
        %454 = vxpose.xlu0.c.b16.cont [5/8] 0, 128
        %455 = vxpose.xlu0.c.b16.cont [6/8] 0, 128
        %456 = vxpose.xlu0.c.b16.cont [7/8] 0, 128
        %457 = vxpose.xlu0.c.b16.end [8/8] 0, 128
        %v458 = vpop.trf.xlu0
        %v459 = vpop.trf.xlu0
        %v460 = vpop.trf.xlu0
        %v461 = vpop.trf.xlu0
        %v462 = vpop.trf.xlu0
        %v463 = vpop.trf.xlu0
        %v464 = vpop.trf.xlu0
        %v465 = vpop.trf.xlu0
        %v482 = vunpack.c.l.b16 %v366
        %v483 = vunpack.c.h.b16 %v366
        %v484 = vunpack.c.l.b16 %v367
        %v485 = vunpack.c.l.b16 %v368
        %v486 = vunpack.c.h.b16 %v368
        %v487 = vunpack.c.l.b16 %v369
        %v488 = vunpack.c.l.b16 %v370
        %v489 = vunpack.c.h.b16 %v370
        %v490 = vunpack.c.l.b16 %v371
        %v491 = vunpack.c.l.b16 %v372
        %v492 = vunpack.c.h.b16 %v372
        %v493 = vunpack.c.l.b16 %v373
        %v494 = vunpack.c.l.b16 %v374
        %v495 = vunpack.c.h.b16 %v374
        %v496 = vunpack.c.l.b16 %v375
        %v497 = vunpack.c.l.b16 %v376
        %v498 = vunpack.c.h.b16 %v376
        %v499 = vunpack.c.l.b16 %v377
        %v500 = vunpack.c.l.b16 %v378
        %v501 = vunpack.c.h.b16 %v378
        %v502 = vunpack.c.l.b16 %v379
        %v503 = vunpack.c.l.b16 %v380
        %v504 = vunpack.c.h.b16 %v380
        %v505 = vunpack.c.l.b16 %v381
        %v506 = vpack.c.b16 %v485, %v482
        %v507 = vpack.c.b16 %v486, %v483
        %v508 = vpack.c.b16 %v487, %v484
        %v509 = vpack.c.b16 %v491, %v488
        %v510 = vpack.c.b16 %v492, %v489
        %v511 = vpack.c.b16 %v493, %v490
        %v512 = vpack.c.b16 %v497, %v494
        %v513 = vpack.c.b16 %v498, %v495
        %v514 = vpack.c.b16 %v499, %v496
        %v515 = vpack.c.b16 %v503, %v500
        %v516 = vpack.c.b16 %v504, %v501
        %v517 = vpack.c.b16 %v505, %v502
        %vm530 = vcmask 523264
        %v532 = vsel %vm530, %v458, 0
        %v535 = vsel %vm530, %v459, 0
        %v538 = vsel %vm530, %v460, 0
        %v541 = vsel %vm530, %v461, 0
        %v544 = vsel %vm530, %v462, 0
        %v547 = vsel %vm530, %v463, 0
        %v550 = vsel %vm530, %v464, 0
        %v553 = vsel %vm530, %v465, 0
        %555 = vmatpush.bf16.msra.mxu0 0
        %556 = vmatpush.bf16.msra.mxu0 0
        %557 = vmatpush.bf16.msra.mxu0 0
        %558 = vmatpush.bf16.msra.mxu0 0
        %559 = vmatpush.bf16.msra.mxu0 %v515
        %560 = vmatpush.bf16.msra.mxu0 %v512
        %561 = vmatpush.bf16.msra.mxu0 %v509
        %562 = vmatpush.bf16.msra.mxu0 %v506
        %563 = vmatmul.bf16.gmra.mxu0 %v532
        %v564 = vpop.f32.mrf.mxu0
        %v565 = vadd.f32 0.0, %v564
        %v566 = vpop.f32.mrf.mxu0
        %v567 = vadd.f32 0.0, %v566
        %568 = vmatmul.bf16.gmra.mxu0 %v535
        %v569 = vpop.f32.mrf.mxu0
        %v570 = vadd.f32 0.0, %v569
        %v571 = vpop.f32.mrf.mxu0
        %v572 = vadd.f32 0.0, %v571
        %573 = vmatmul.bf16.gmra.mxu0 %v538
        %v574 = vpop.f32.mrf.mxu0
        %v575 = vadd.f32 0.0, %v574
        %v576 = vpop.f32.mrf.mxu0
        %v577 = vadd.f32 0.0, %v576
        %578 = vmatmul.bf16.gmra.mxu0 %v541
        %v579 = vpop.f32.mrf.mxu0
        %v580 = vadd.f32 0.0, %v579
        %v581 = vpop.f32.mrf.mxu0
        %v582 = vadd.f32 0.0, %v581
        %583 = vmatmul.bf16.gmra.mxu0 %v544
        %v584 = vpop.f32.mrf.mxu0
        %v585 = vadd.f32 0.0, %v584
        %v586 = vpop.f32.mrf.mxu0
        %v587 = vadd.f32 0.0, %v586
        %588 = vmatmul.bf16.gmra.mxu0 %v547
        %v589 = vpop.f32.mrf.mxu0
        %v590 = vadd.f32 0.0, %v589
        %v591 = vpop.f32.mrf.mxu0
        %v592 = vadd.f32 0.0, %v591
        %593 = vmatmul.bf16.gmra.mxu0 %v550
        %v594 = vpop.f32.mrf.mxu0
        %v595 = vadd.f32 0.0, %v594
        %v596 = vpop.f32.mrf.mxu0
        %v597 = vadd.f32 0.0, %v596
        %598 = vmatmul.bf16.gmra.mxu0 %v553
        %v599 = vpop.f32.mrf.mxu0
        %v600 = vadd.f32 0.0, %v599
        %v601 = vpop.f32.mrf.mxu0
        %v602 = vadd.f32 0.0, %v601
        %603 = vdwg.mxu0
        %604 = vmatpush.bf16.msra.mxu0 0
        %605 = vmatpush.bf16.msra.mxu0 0
        %606 = vmatpush.bf16.msra.mxu0 0
        %607 = vmatpush.bf16.msra.mxu0 0
        %608 = vmatpush.bf16.msra.mxu0 %v516
        %609 = vmatpush.bf16.msra.mxu0 %v513
        %610 = vmatpush.bf16.msra.mxu0 %v510
        %611 = vmatpush.bf16.msra.mxu0 %v507
        %612 = vmatmul.bf16.gmra.mxu0 %v532
        %v613 = vpop.f32.mrf.mxu0
        %v614 = vadd.f32 0.0, %v613
        %v615 = vpop.f32.mrf.mxu0
        %v616 = vadd.f32 0.0, %v615
        %617 = vmatmul.bf16.gmra.mxu0 %v535
        %v618 = vpop.f32.mrf.mxu0
        %v619 = vadd.f32 0.0, %v618
        %v620 = vpop.f32.mrf.mxu0
        %v621 = vadd.f32 0.0, %v620
        %622 = vmatmul.bf16.gmra.mxu0 %v538
        %v623 = vpop.f32.mrf.mxu0
        %v624 = vadd.f32 0.0, %v623
        %v625 = vpop.f32.mrf.mxu0
        %v626 = vadd.f32 0.0, %v625
        %627 = vmatmul.bf16.gmra.mxu0 %v541
        %v628 = vpop.f32.mrf.mxu0
        %v629 = vadd.f32 0.0, %v628
        %v630 = vpop.f32.mrf.mxu0
        %v631 = vadd.f32 0.0, %v630
        %632 = vmatmul.bf16.gmra.mxu0 %v544
        %v633 = vpop.f32.mrf.mxu0
        %v634 = vadd.f32 0.0, %v633
        %v635 = vpop.f32.mrf.mxu0
        %v636 = vadd.f32 0.0, %v635
        %637 = vmatmul.bf16.gmra.mxu0 %v547
        %v638 = vpop.f32.mrf.mxu0
        %v639 = vadd.f32 0.0, %v638
        %v640 = vpop.f32.mrf.mxu0
        %v641 = vadd.f32 0.0, %v640
        %642 = vmatmul.bf16.gmra.mxu0 %v550
        %v643 = vpop.f32.mrf.mxu0
        %v644 = vadd.f32 0.0, %v643
        %v645 = vpop.f32.mrf.mxu0
        %v646 = vadd.f32 0.0, %v645
        %647 = vmatmul.bf16.gmra.mxu0 %v553
        %v648 = vpop.f32.mrf.mxu0
        %v649 = vadd.f32 0.0, %v648
        %v650 = vpop.f32.mrf.mxu0
        %v651 = vadd.f32 0.0, %v650
        %652 = vdwg.mxu0
        %653 = vmatpush.bf16.msra.mxu0 0
        %654 = vmatpush.bf16.msra.mxu0 0
        %655 = vmatpush.bf16.msra.mxu0 0
        %656 = vmatpush.bf16.msra.mxu0 0
        %657 = vmatpush.bf16.msra.mxu0 %v517
        %658 = vmatpush.bf16.msra.mxu0 %v514
        %659 = vmatpush.bf16.msra.mxu0 %v511
        %660 = vmatpush.bf16.msra.mxu0 %v508
        %661 = vmatmul.bf16.gmra.mxu0 %v532
        %v662 = vpop.f32.mrf.mxu0
        %v663 = vadd.f32 0.0, %v662
        %v664 = vpop.f32.mrf.mxu0
        %v665 = vadd.f32 0.0, %v664
        %666 = vmatmul.bf16.gmra.mxu0 %v535
        %v667 = vpop.f32.mrf.mxu0
        %v668 = vadd.f32 0.0, %v667
        %v669 = vpop.f32.mrf.mxu0
        %v670 = vadd.f32 0.0, %v669
        %671 = vmatmul.bf16.gmra.mxu0 %v538
        %v672 = vpop.f32.mrf.mxu0
        %v673 = vadd.f32 0.0, %v672
        %v674 = vpop.f32.mrf.mxu0
        %v675 = vadd.f32 0.0, %v674
        %676 = vmatmul.bf16.gmra.mxu0 %v541
        %v677 = vpop.f32.mrf.mxu0
        %v678 = vadd.f32 0.0, %v677
        %v679 = vpop.f32.mrf.mxu0
        %v680 = vadd.f32 0.0, %v679
        %681 = vmatmul.bf16.gmra.mxu0 %v544
        %v682 = vpop.f32.mrf.mxu0
        %v683 = vadd.f32 0.0, %v682
        %v684 = vpop.f32.mrf.mxu0
        %v685 = vadd.f32 0.0, %v684
        %686 = vmatmul.bf16.gmra.mxu0 %v547
        %v687 = vpop.f32.mrf.mxu0
        %v688 = vadd.f32 0.0, %v687
        %v689 = vpop.f32.mrf.mxu0
        %v690 = vadd.f32 0.0, %v689
        %691 = vmatmul.bf16.gmra.mxu0 %v550
        %v692 = vpop.f32.mrf.mxu0
        %v693 = vadd.f32 0.0, %v692
        %v694 = vpop.f32.mrf.mxu0
        %v695 = vadd.f32 0.0, %v694
        %696 = vmatmul.bf16.gmra.mxu0 %v553
        %v697 = vpop.f32.mrf.mxu0
        %v698 = vadd.f32 0.0, %v697
        %v699 = vpop.f32.mrf.mxu0
        %v700 = vadd.f32 0.0, %v699
        %701 = vdwg.mxu0
        %v702 = vpack.c.bf16 %v567, %v565
        %v703 = vpack.c.bf16 %v616, %v614
        %v704 = vpack.c.bf16 %v665, %v663
        %v705 = vpack.c.bf16 %v572, %v570
        %v706 = vpack.c.bf16 %v621, %v619
        %v707 = vpack.c.bf16 %v670, %v668
        %v708 = vpack.c.bf16 %v577, %v575
        %v709 = vpack.c.bf16 %v626, %v624
        %v710 = vpack.c.bf16 %v675, %v673
        %v711 = vpack.c.bf16 %v582, %v580
        %v712 = vpack.c.bf16 %v631, %v629
        %v713 = vpack.c.bf16 %v680, %v678
        %v714 = vpack.c.bf16 %v587, %v585
        %v715 = vpack.c.bf16 %v636, %v634
        %v716 = vpack.c.bf16 %v685, %v683
        %v717 = vpack.c.bf16 %v592, %v590
        %v718 = vpack.c.bf16 %v641, %v639
        %v719 = vpack.c.bf16 %v690, %v688
        %v720 = vpack.c.bf16 %v597, %v595
        %v721 = vpack.c.bf16 %v646, %v644
        %v722 = vpack.c.bf16 %v695, %v693
        %v723 = vpack.c.bf16 %v602, %v600
        %v724 = vpack.c.bf16 %v651, %v649
        %v725 = vpack.c.bf16 %v700, %v698
        %v726 = vld [vmem:[#allocation8] sm:$0xff]
        %v727 = vld [vmem:[#allocation8 + $0x8] sm:$0xf]
        %v728 = vld [vmem:[#allocation8 + $0xc] sm:$0xff]
        %v729 = vld [vmem:[#allocation8 + $0x14] sm:$0xf]
        %v730 = vld [vmem:[#allocation8 + $0x18] sm:$0xff]
        %v731 = vld [vmem:[#allocation8 + $0x20] sm:$0xf]
        %v732 = vld [vmem:[#allocation8 + $0x24] sm:$0xff]
        %v733 = vld [vmem:[#allocation8 + $0x2c] sm:$0xf]
        %v734 = vld [vmem:[#allocation8 + $0x30] sm:$0xff]
        %v735 = vld [vmem:[#allocation8 + $0x38] sm:$0xf]
        %v736 = vld [vmem:[#allocation8 + $0x3c] sm:$0xff]
        %v737 = vld [vmem:[#allocation8 + $0x44] sm:$0xf]
        %v738 = vld [vmem:[#allocation8 + $0x48] sm:$0xff]
        %v739 = vld [vmem:[#allocation8 + $0x50] sm:$0xf]
        %v740 = vld [vmem:[#allocation8 + $0x54] sm:$0xff]
        %v741 = vld [vmem:[#allocation8 + $0x5c] sm:$0xf]
        %v742 = vld [vmem:[#allocation8 + $0x60] sm:$0xff]
        %v743 = vld [vmem:[#allocation8 + $0x68] sm:$0xf]
        %v744 = vld [vmem:[#allocation8 + $0x6c] sm:$0xff]
        %v745 = vld [vmem:[#allocation8 + $0x74] sm:$0xf]
        %v746 = vld [vmem:[#allocation8 + $0x78] sm:$0xff]
        %v747 = vld [vmem:[#allocation8 + $0x80] sm:$0xf]
        %v748 = vld [vmem:[#allocation8 + $0x84] sm:$0xff]
        %v749 = vld [vmem:[#allocation8 + $0x8c] sm:$0xf]
        %v750 = vld [vmem:[#allocation8 + $0x90] sm:$0xff]
        %v751 = vld [vmem:[#allocation8 + $0x98] sm:$0xf]
        %v752 = vld [vmem:[#allocation8 + $0x9c] sm:$0xff]
        %v753 = vld [vmem:[#allocation8 + $0xa4] sm:$0xf]
        %v754 = vld [vmem:[#allocation8 + $0xa8] sm:$0xff]
        %v755 = vld [vmem:[#allocation8 + $0xb0] sm:$0xf]
        %v756 = vld [vmem:[#allocation8 + $0xb4] sm:$0xff]
        %v757 = vld [vmem:[#allocation8 + $0xbc] sm:$0xf]
        %v758 = vld [vmem:[#allocation8 + $0xc0] sm:$0xff]
        %v759 = vld [vmem:[#allocation8 + $0xc8] sm:$0xf]
        %v760 = vld [vmem:[#allocation8 + $0xcc] sm:$0xff]
        %v761 = vld [vmem:[#allocation8 + $0xd4] sm:$0xf]
        %v762 = vld [vmem:[#allocation8 + $0xd8] sm:$0xff]
        %v763 = vld [vmem:[#allocation8 + $0xe0] sm:$0xf]
        %v764 = vld [vmem:[#allocation8 + $0xe4] sm:$0xff]
        %v765 = vld [vmem:[#allocation8 + $0xec] sm:$0xf]
        %v766 = vld [vmem:[#allocation8 + $0xf0] sm:$0xff]
        %v767 = vld [vmem:[#allocation8 + $0xf8] sm:$0xf]
        %v768 = vld [vmem:[#allocation8 + $0xfc] sm:$0xff]
        %v769 = vld [vmem:[#allocation8 + $0x104] sm:$0xf]
        %v770 = vld [vmem:[#allocation8 + $0x108] sm:$0xff]
        %v771 = vld [vmem:[#allocation8 + $0x110] sm:$0xf]
        %v772 = vld [vmem:[#allocation8 + $0x114] sm:$0xff]
        %v773 = vld [vmem:[#allocation8 + $0x11c] sm:$0xf]
        %v774 = vld [vmem:[#allocation8 + $0x120] sm:$0xff]
        %v775 = vld [vmem:[#allocation8 + $0x128] sm:$0xf]
        %v776 = vld [vmem:[#allocation8 + $0x12c] sm:$0xff]
        %v777 = vld [vmem:[#allocation8 + $0x134] sm:$0xf]
        %v778 = vld [vmem:[#allocation8 + $0x138] sm:$0xff]
        %v779 = vld [vmem:[#allocation8 + $0x140] sm:$0xf]
        %v780 = vld [vmem:[#allocation8 + $0x144] sm:$0xff]
        %v781 = vld [vmem:[#allocation8 + $0x14c] sm:$0xf]
        %v782 = vld [vmem:[#allocation8 + $0x150] sm:$0xff]
        %v783 = vld [vmem:[#allocation8 + $0x158] sm:$0xf]
        %v784 = vld [vmem:[#allocation8 + $0x15c] sm:$0xff]
        %v785 = vld [vmem:[#allocation8 + $0x164] sm:$0xf]
        %v786 = vld [vmem:[#allocation8 + $0x168] sm:$0xff]
        %v787 = vld [vmem:[#allocation8 + $0x170] sm:$0xf]
        %v788 = vld [vmem:[#allocation8 + $0x174] sm:$0xff]
        %v789 = vld [vmem:[#allocation8 + $0x17c] sm:$0xf]
        %v790 = vld [vmem:[#allocation8 + $0x180] sm:$0xff]
        %v791 = vld [vmem:[#allocation8 + $0x188] sm:$0xf]
        %v792 = vld [vmem:[#allocation8 + $0x18c] sm:$0xff]
        %v793 = vld [vmem:[#allocation8 + $0x194] sm:$0xf]
        %v794 = vld [vmem:[#allocation8 + $0x198] sm:$0xff]
        %v795 = vld [vmem:[#allocation8 + $0x1a0] sm:$0xf]
        %v796 = vld [vmem:[#allocation8 + $0x1a4] sm:$0xff]
        %v797 = vld [vmem:[#allocation8 + $0x1ac] sm:$0xf]
        %v798 = vld [vmem:[#allocation8 + $0x1b0] sm:$0xff]
        %v799 = vld [vmem:[#allocation8 + $0x1b8] sm:$0xf]
        %v800 = vld [vmem:[#allocation8 + $0x1bc] sm:$0xff]
        %v801 = vld [vmem:[#allocation8 + $0x1c4] sm:$0xf]
        %v802 = vld [vmem:[#allocation8 + $0x1c8] sm:$0xff]
        %v803 = vld [vmem:[#allocation8 + $0x1d0] sm:$0xf]
        %v804 = vld [vmem:[#allocation8 + $0x1d4] sm:$0xff]
        %v805 = vld [vmem:[#allocation8 + $0x1dc] sm:$0xf]
        %v806 = vld [vmem:[#allocation8 + $0x1e0] sm:$0xff]
        %v807 = vld [vmem:[#allocation8 + $0x1e8] sm:$0xf]
        %v808 = vld [vmem:[#allocation8 + $0x1ec] sm:$0xff]
        %v809 = vld [vmem:[#allocation8 + $0x1f4] sm:$0xf]
        %v810 = vld [vmem:[#allocation8 + $0x1f8] sm:$0xff]
        %v811 = vld [vmem:[#allocation8 + $0x200] sm:$0xf]
        %v812 = vld [vmem:[#allocation8 + $0x204] sm:$0xff]
        %v813 = vld [vmem:[#allocation8 + $0x20c] sm:$0xf]
        %v814 = vld [vmem:[#allocation8 + $0x210] sm:$0xff]
        %v815 = vld [vmem:[#allocation8 + $0x218] sm:$0xf]
        %v816 = vld [vmem:[#allocation8 + $0x21c] sm:$0xff]
        %v817 = vld [vmem:[#allocation8 + $0x224] sm:$0xf]
        %v818 = vld [vmem:[#allocation8 + $0x228] sm:$0xff]
        %v819 = vld [vmem:[#allocation8 + $0x230] sm:$0xf]
        %v820 = vld [vmem:[#allocation8 + $0x234] sm:$0xff]
        %v821 = vld [vmem:[#allocation8 + $0x23c] sm:$0xf]
        %v822 = vld [vmem:[#allocation9] sm:$0x7]
        %v824 = vperm.slane %v822, 0
        %v825 = vperm.slane %v822, 1
        %v826 = vperm.slane %v822, 2
        %v926 = vunpack.c.l.b16 %v726
        %v927 = vunpack.c.h.b16 %v726
        %v928 = vunpack.c.l.b16 %v727
        %v929 = vunpack.c.l.b16 %v728
        %v930 = vunpack.c.h.b16 %v728
        %v931 = vunpack.c.l.b16 %v729
        %v932 = vunpack.c.l.b16 %v730
        %v933 = vunpack.c.h.b16 %v730
        %v934 = vunpack.c.l.b16 %v731
        %v935 = vunpack.c.l.b16 %v732
        %v936 = vunpack.c.h.b16 %v732
        %v937 = vunpack.c.l.b16 %v733
        %v938 = vunpack.c.l.b16 %v734
        %v939 = vunpack.c.h.b16 %v734
        %v940 = vunpack.c.l.b16 %v735
        %v941 = vunpack.c.l.b16 %v736
        %v942 = vunpack.c.h.b16 %v736
        %v943 = vunpack.c.l.b16 %v737
        %v944 = vunpack.c.l.b16 %v738
        %v945 = vunpack.c.h.b16 %v738
        %v946 = vunpack.c.l.b16 %v739
        %v947 = vunpack.c.l.b16 %v740
        %v948 = vunpack.c.h.b16 %v740
        %v949 = vunpack.c.l.b16 %v741
        %v950 = vunpack.c.l.b16 %v742
        %v951 = vunpack.c.h.b16 %v742
        %v952 = vunpack.c.l.b16 %v743
        %v953 = vunpack.c.l.b16 %v744
        %v954 = vunpack.c.h.b16 %v744
        %v955 = vunpack.c.l.b16 %v745
        %v956 = vunpack.c.l.b16 %v746
        %v957 = vunpack.c.h.b16 %v746
        %v958 = vunpack.c.l.b16 %v747
        %v959 = vunpack.c.l.b16 %v748
        %v960 = vunpack.c.h.b16 %v748
        %v961 = vunpack.c.l.b16 %v749
        %v962 = vunpack.c.l.b16 %v750
        %v963 = vunpack.c.h.b16 %v750
        %v964 = vunpack.c.l.b16 %v751
        %v965 = vunpack.c.l.b16 %v752
        %v966 = vunpack.c.h.b16 %v752
        %v967 = vunpack.c.l.b16 %v753
        %v968 = vunpack.c.l.b16 %v754
        %v969 = vunpack.c.h.b16 %v754
        %v970 = vunpack.c.l.b16 %v755
        %v971 = vunpack.c.l.b16 %v756
        %v972 = vunpack.c.h.b16 %v756
        %v973 = vunpack.c.l.b16 %v757
        %v974 = vunpack.c.l.b16 %v758
        %v975 = vunpack.c.h.b16 %v758
        %v976 = vunpack.c.l.b16 %v759
        %v977 = vunpack.c.l.b16 %v760
        %v978 = vunpack.c.h.b16 %v760
        %v979 = vunpack.c.l.b16 %v761
        %v980 = vunpack.c.l.b16 %v762
        %v981 = vunpack.c.h.b16 %v762
        %v982 = vunpack.c.l.b16 %v763
        %v983 = vunpack.c.l.b16 %v764
        %v984 = vunpack.c.h.b16 %v764
        %v985 = vunpack.c.l.b16 %v765
        %v986 = vunpack.c.l.b16 %v766
        %v987 = vunpack.c.h.b16 %v766
        %v988 = vunpack.c.l.b16 %v767
        %v989 = vunpack.c.l.b16 %v768
        %v990 = vunpack.c.h.b16 %v768
        %v991 = vunpack.c.l.b16 %v769
        %v992 = vunpack.c.l.b16 %v770
        %v993 = vunpack.c.h.b16 %v770
        %v994 = vunpack.c.l.b16 %v771
        %v995 = vunpack.c.l.b16 %v772
        %v996 = vunpack.c.h.b16 %v772
        %v997 = vunpack.c.l.b16 %v773
        %v998 = vunpack.c.l.b16 %v774
        %v999 = vunpack.c.h.b16 %v774
        %v1000 = vunpack.c.l.b16 %v775
        %v1001 = vunpack.c.l.b16 %v776
        %v1002 = vunpack.c.h.b16 %v776
        %v1003 = vunpack.c.l.b16 %v777
        %v1004 = vunpack.c.l.b16 %v778
        %v1005 = vunpack.c.h.b16 %v778
        %v1006 = vunpack.c.l.b16 %v779
        %v1007 = vunpack.c.l.b16 %v780
        %v1008 = vunpack.c.h.b16 %v780
        %v1009 = vunpack.c.l.b16 %v781
        %v1010 = vunpack.c.l.b16 %v782
        %v1011 = vunpack.c.h.b16 %v782
        %v1012 = vunpack.c.l.b16 %v783
        %v1013 = vunpack.c.l.b16 %v784
        %v1014 = vunpack.c.h.b16 %v784
        %v1015 = vunpack.c.l.b16 %v785
        %v1016 = vunpack.c.l.b16 %v786
        %v1017 = vunpack.c.h.b16 %v786
        %v1018 = vunpack.c.l.b16 %v787
        %v1019 = vunpack.c.l.b16 %v788
        %v1020 = vunpack.c.h.b16 %v788
        %v1021 = vunpack.c.l.b16 %v789
        %v1022 = vunpack.c.l.b16 %v790
        %v1023 = vunpack.c.h.b16 %v790
        %v1024 = vunpack.c.l.b16 %v791
        %v1025 = vunpack.c.l.b16 %v792
        %v1026 = vunpack.c.h.b16 %v792
        %v1027 = vunpack.c.l.b16 %v793
        %v1028 = vunpack.c.l.b16 %v794
        %v1029 = vunpack.c.h.b16 %v794
        %v1030 = vunpack.c.l.b16 %v795
        %v1031 = vunpack.c.l.b16 %v796
        %v1032 = vunpack.c.h.b16 %v796
        %v1033 = vunpack.c.l.b16 %v797
        %v1034 = vunpack.c.l.b16 %v798
        %v1035 = vunpack.c.h.b16 %v798
        %v1036 = vunpack.c.l.b16 %v799
        %v1037 = vunpack.c.l.b16 %v800
        %v1038 = vunpack.c.h.b16 %v800
        %v1039 = vunpack.c.l.b16 %v801
        %v1040 = vunpack.c.l.b16 %v802
        %v1041 = vunpack.c.h.b16 %v802
        %v1042 = vunpack.c.l.b16 %v803
        %v1043 = vunpack.c.l.b16 %v804
        %v1044 = vunpack.c.h.b16 %v804
        %v1045 = vunpack.c.l.b16 %v805
        %v1046 = vunpack.c.l.b16 %v806
        %v1047 = vunpack.c.h.b16 %v806
        %v1048 = vunpack.c.l.b16 %v807
        %v1049 = vunpack.c.l.b16 %v808
        %v1050 = vunpack.c.h.b16 %v808
        %v1051 = vunpack.c.l.b16 %v809
        %v1052 = vunpack.c.l.b16 %v810
        %v1053 = vunpack.c.h.b16 %v810
        %v1054 = vunpack.c.l.b16 %v811
        %v1055 = vunpack.c.l.b16 %v812
        %v1056 = vunpack.c.h.b16 %v812
        %v1057 = vunpack.c.l.b16 %v813
        %v1058 = vunpack.c.l.b16 %v814
        %v1059 = vunpack.c.h.b16 %v814
        %v1060 = vunpack.c.l.b16 %v815
        %v1061 = vunpack.c.l.b16 %v816
        %v1062 = vunpack.c.h.b16 %v816
        %v1063 = vunpack.c.l.b16 %v817
        %v1064 = vunpack.c.l.b16 %v818
        %v1065 = vunpack.c.h.b16 %v818
        %v1066 = vunpack.c.l.b16 %v819
        %v1067 = vunpack.c.l.b16 %v820
        %v1068 = vunpack.c.h.b16 %v820
        %v1069 = vunpack.c.l.b16 %v821
        %v1070 = vpack.c.b16 %v929, %v926
        %v1071 = vpack.c.b16 %v930, %v927
        %v1072 = vpack.c.b16 %v931, %v928
        %v1073 = vpack.c.b16 %v935, %v932
        %v1074 = vpack.c.b16 %v936, %v933
        %v1075 = vpack.c.b16 %v937, %v934
        %v1076 = vpack.c.b16 %v941, %v938
        %v1077 = vpack.c.b16 %v942, %v939
        %v1078 = vpack.c.b16 %v943, %v940
        %v1079 = vpack.c.b16 %v947, %v944
        %v1080 = vpack.c.b16 %v948, %v945
        %v1081 = vpack.c.b16 %v949, %v946
        %v1082 = vpack.c.b16 %v953, %v950
        %v1083 = vpack.c.b16 %v954, %v951
        %v1084 = vpack.c.b16 %v955, %v952
        %v1085 = vpack.c.b16 %v959, %v956
        %v1086 = vpack.c.b16 %v960, %v957
        %v1087 = vpack.c.b16 %v961, %v958
        %v1088 = vpack.c.b16 %v965, %v962
        %v1089 = vpack.c.b16 %v966, %v963
        %v1090 = vpack.c.b16 %v967, %v964
        %v1091 = vpack.c.b16 %v971, %v968
        %v1092 = vpack.c.b16 %v972, %v969
        %v1093 = vpack.c.b16 %v973, %v970
        %v1094 = vpack.c.b16 %v977, %v974
        %v1095 = vpack.c.b16 %v978, %v975
        %v1096 = vpack.c.b16 %v979, %v976
        %v1097 = vpack.c.b16 %v983, %v980
        %v1098 = vpack.c.b16 %v984, %v981
        %v1099 = vpack.c.b16 %v985, %v982
        %v1100 = vpack.c.b16 %v989, %v986
        %v1101 = vpack.c.b16 %v990, %v987
        %v1102 = vpack.c.b16 %v991, %v988
        %v1103 = vpack.c.b16 %v995, %v992
        %v1104 = vpack.c.b16 %v996, %v993
        %v1105 = vpack.c.b16 %v997, %v994
        %v1106 = vpack.c.b16 %v1001, %v998
        %v1107 = vpack.c.b16 %v1002, %v999
        %v1108 = vpack.c.b16 %v1003, %v1000
        %v1109 = vpack.c.b16 %v1007, %v1004
        %v1110 = vpack.c.b16 %v1008, %v1005
        %v1111 = vpack.c.b16 %v1009, %v1006
        %v1112 = vpack.c.b16 %v1013, %v1010
        %v1113 = vpack.c.b16 %v1014, %v1011
        %v1114 = vpack.c.b16 %v1015, %v1012
        %v1115 = vpack.c.b16 %v1019, %v1016
        %v1116 = vpack.c.b16 %v1020, %v1017
        %v1117 = vpack.c.b16 %v1021, %v1018
        %v1118 = vpack.c.b16 %v1025, %v1022
        %v1119 = vpack.c.b16 %v1026, %v1023
        %v1120 = vpack.c.b16 %v1027, %v1024
        %v1121 = vpack.c.b16 %v1031, %v1028
        %v1122 = vpack.c.b16 %v1032, %v1029
        %v1123 = vpack.c.b16 %v1033, %v1030
        %v1124 = vpack.c.b16 %v1037, %v1034
        %v1125 = vpack.c.b16 %v1038, %v1035
        %v1126 = vpack.c.b16 %v1039, %v1036
        %v1127 = vpack.c.b16 %v1043, %v1040
        %v1128 = vpack.c.b16 %v1044, %v1041
        %v1129 = vpack.c.b16 %v1045, %v1042
        %v1130 = vpack.c.b16 %v1049, %v1046
        %v1131 = vpack.c.b16 %v1050, %v1047
        %v1132 = vpack.c.b16 %v1051, %v1048
        %v1133 = vpack.c.b16 %v1055, %v1052
        %v1134 = vpack.c.b16 %v1056, %v1053
        %v1135 = vpack.c.b16 %v1057, %v1054
        %v1136 = vpack.c.b16 %v1061, %v1058
        %v1137 = vpack.c.b16 %v1062, %v1059
        %v1138 = vpack.c.b16 %v1063, %v1060
        %v1139 = vpack.c.b16 %v1067, %v1064
        %v1140 = vpack.c.b16 %v1068, %v1065
        %v1141 = vpack.c.b16 %v1069, %v1066
        %1214 = vmatpush.bf16.msra.mxu0 %v1091
        %1215 = vmatpush.bf16.msra.mxu0 %v1088
        %1216 = vmatpush.bf16.msra.mxu0 %v1085
        %1217 = vmatpush.bf16.msra.mxu0 %v1082
        %1218 = vmatpush.bf16.msra.mxu0 %v1079
        %1219 = vmatpush.bf16.msra.mxu0 %v1076
        %1220 = vmatpush.bf16.msra.mxu0 %v1073
        %1221 = vmatpush.bf16.msra.mxu0 %v1070
        %1222 = vmatmul.bf16.gmra.mxu0 %v702
        %v1223 = vpop.f32.mrf.mxu0
        %v1224 = vadd.f32 %v824, %v1223
        %v1225 = vpop.f32.mrf.mxu0
        %v1226 = vadd.f32 %v824, %v1225
        %1227 = vmatmul.bf16.gmra.mxu0 %v705
        %v1228 = vpop.f32.mrf.mxu0
        %v1229 = vadd.f32 %v824, %v1228
        %v1230 = vpop.f32.mrf.mxu0
        %v1231 = vadd.f32 %v824, %v1230
        %1232 = vmatmul.bf16.gmra.mxu0 %v708
        %v1233 = vpop.f32.mrf.mxu0
        %v1234 = vadd.f32 %v824, %v1233
        %v1235 = vpop.f32.mrf.mxu0
        %v1236 = vadd.f32 %v824, %v1235
        %1237 = vmatmul.bf16.gmra.mxu0 %v711
        %v1238 = vpop.f32.mrf.mxu0
        %v1239 = vadd.f32 %v824, %v1238
        %v1240 = vpop.f32.mrf.mxu0
        %v1241 = vadd.f32 %v824, %v1240
        %1242 = vmatmul.bf16.gmra.mxu0 %v714
        %v1243 = vpop.f32.mrf.mxu0
        %v1244 = vadd.f32 %v824, %v1243
        %v1245 = vpop.f32.mrf.mxu0
        %v1246 = vadd.f32 %v824, %v1245
        %1247 = vmatmul.bf16.gmra.mxu0 %v717
        %v1248 = vpop.f32.mrf.mxu0
        %v1249 = vadd.f32 %v824, %v1248
        %v1250 = vpop.f32.mrf.mxu0
        %v1251 = vadd.f32 %v824, %v1250
        %1252 = vmatmul.bf16.gmra.mxu0 %v720
        %v1253 = vpop.f32.mrf.mxu0
        %v1254 = vadd.f32 %v824, %v1253
        %v1255 = vpop.f32.mrf.mxu0
        %v1256 = vadd.f32 %v824, %v1255
        %1257 = vmatmul.bf16.gmra.mxu0 %v723
        %v1258 = vpop.f32.mrf.mxu0
        %v1259 = vadd.f32 %v824, %v1258
        %v1260 = vpop.f32.mrf.mxu0
        %v1261 = vadd.f32 %v824, %v1260
        %1262 = vdwg.mxu0
        %1263 = vmatpush.bf16.msra.mxu0 %v1115
        %1264 = vmatpush.bf16.msra.mxu0 %v1112
        %1265 = vmatpush.bf16.msra.mxu0 %v1109
        %1266 = vmatpush.bf16.msra.mxu0 %v1106
        %1267 = vmatpush.bf16.msra.mxu0 %v1103
        %1268 = vmatpush.bf16.msra.mxu0 %v1100
        %1269 = vmatpush.bf16.msra.mxu0 %v1097
        %1270 = vmatpush.bf16.msra.mxu0 %v1094
        %1271 = vmatmul.bf16.gmra.mxu0 %v703
        %v1272 = vpop.f32.mrf.mxu0
        %v1273 = vadd.f32 %v1224, %v1272
        %v1274 = vpop.f32.mrf.mxu0
        %v1275 = vadd.f32 %v1226, %v1274
        %1276 = vmatmul.bf16.gmra.mxu0 %v706
        %v1277 = vpop.f32.mrf.mxu0
        %v1278 = vadd.f32 %v1229, %v1277
        %v1279 = vpop.f32.mrf.mxu0
        %v1280 = vadd.f32 %v1231, %v1279
        %1281 = vmatmul.bf16.gmra.mxu0 %v709
        %v1282 = vpop.f32.mrf.mxu0
        %v1283 = vadd.f32 %v1234, %v1282
        %v1284 = vpop.f32.mrf.mxu0
        %v1285 = vadd.f32 %v1236, %v1284
        %1286 = vmatmul.bf16.gmra.mxu0 %v712
        %v1287 = vpop.f32.mrf.mxu0
        %v1288 = vadd.f32 %v1239, %v1287
        %v1289 = vpop.f32.mrf.mxu0
        %v1290 = vadd.f32 %v1241, %v1289
        %1291 = vmatmul.bf16.gmra.mxu0 %v715
        %v1292 = vpop.f32.mrf.mxu0
        %v1293 = vadd.f32 %v1244, %v1292
        %v1294 = vpop.f32.mrf.mxu0
        %v1295 = vadd.f32 %v1246, %v1294
        %1296 = vmatmul.bf16.gmra.mxu0 %v718
        %v1297 = vpop.f32.mrf.mxu0
        %v1298 = vadd.f32 %v1249, %v1297
        %v1299 = vpop.f32.mrf.mxu0
        %v1300 = vadd.f32 %v1251, %v1299
        %1301 = vmatmul.bf16.gmra.mxu0 %v721
        %v1302 = vpop.f32.mrf.mxu0
        %v1303 = vadd.f32 %v1254, %v1302
        %v1304 = vpop.f32.mrf.mxu0
        %v1305 = vadd.f32 %v1256, %v1304
        %1306 = vmatmul.bf16.gmra.mxu0 %v724
        %v1307 = vpop.f32.mrf.mxu0
        %v1308 = vadd.f32 %v1259, %v1307
        %v1309 = vpop.f32.mrf.mxu0
        %v1310 = vadd.f32 %v1261, %v1309
        %1311 = vdwg.mxu0
        %1312 = vmatpush.bf16.msra.mxu0 %v1139
        %1313 = vmatpush.bf16.msra.mxu0 %v1136
        %1314 = vmatpush.bf16.msra.mxu0 %v1133
        %1315 = vmatpush.bf16.msra.mxu0 %v1130
        %1316 = vmatpush.bf16.msra.mxu0 %v1127
        %1317 = vmatpush.bf16.msra.mxu0 %v1124
        %1318 = vmatpush.bf16.msra.mxu0 %v1121
        %1319 = vmatpush.bf16.msra.mxu0 %v1118
        %1320 = vmatmul.bf16.gmra.mxu0 %v704
        %v1321 = vpop.f32.mrf.mxu0
        %v1322 = vadd.f32 %v1273, %v1321
        %v1323 = vpop.f32.mrf.mxu0
        %v1324 = vadd.f32 %v1275, %v1323
        %1325 = vmatmul.bf16.gmra.mxu0 %v707
        %v1326 = vpop.f32.mrf.mxu0
        %v1327 = vadd.f32 %v1278, %v1326
        %v1328 = vpop.f32.mrf.mxu0
        %v1329 = vadd.f32 %v1280, %v1328
        %1330 = vmatmul.bf16.gmra.mxu0 %v710
        %v1331 = vpop.f32.mrf.mxu0
        %v1332 = vadd.f32 %v1283, %v1331
        %v1333 = vpop.f32.mrf.mxu0
        %v1334 = vadd.f32 %v1285, %v1333
        %1335 = vmatmul.bf16.gmra.mxu0 %v713
        %v1336 = vpop.f32.mrf.mxu0
        %v1337 = vadd.f32 %v1288, %v1336
        %v1338 = vpop.f32.mrf.mxu0
        %v1339 = vadd.f32 %v1290, %v1338
        %1340 = vmatmul.bf16.gmra.mxu0 %v716
        %v1341 = vpop.f32.mrf.mxu0
        %v1342 = vadd.f32 %v1293, %v1341
        %v1343 = vpop.f32.mrf.mxu0
        %v1344 = vadd.f32 %v1295, %v1343
        %1345 = vmatmul.bf16.gmra.mxu0 %v719
        %v1346 = vpop.f32.mrf.mxu0
        %v1347 = vadd.f32 %v1298, %v1346
        %v1348 = vpop.f32.mrf.mxu0
        %v1349 = vadd.f32 %v1300, %v1348
        %1350 = vmatmul.bf16.gmra.mxu0 %v722
        %v1351 = vpop.f32.mrf.mxu0
        %v1352 = vadd.f32 %v1303, %v1351
        %v1353 = vpop.f32.mrf.mxu0
        %v1354 = vadd.f32 %v1305, %v1353
        %1355 = vmatmul.bf16.gmra.mxu0 %v725
        %v1356 = vpop.f32.mrf.mxu0
        %v1357 = vadd.f32 %v1308, %v1356
        %v1358 = vpop.f32.mrf.mxu0
        %v1359 = vadd.f32 %v1310, %v1358
        %1360 = vdwg.mxu0
        %1361 = vmatpush.bf16.msra.mxu0 %v1092
        %1362 = vmatpush.bf16.msra.mxu0 %v1089
        %1363 = vmatpush.bf16.msra.mxu0 %v1086
        %1364 = vmatpush.bf16.msra.mxu0 %v1083
        %1365 = vmatpush.bf16.msra.mxu0 %v1080
        %1366 = vmatpush.bf16.msra.mxu0 %v1077
        %1367 = vmatpush.bf16.msra.mxu0 %v1074
        %1368 = vmatpush.bf16.msra.mxu0 %v1071
        %1369 = vmatmul.bf16.gmra.mxu0 %v702
        %v1370 = vpop.f32.mrf.mxu0
        %v1371 = vadd.f32 %v825, %v1370
        %v1372 = vpop.f32.mrf.mxu0
        %v1373 = vadd.f32 %v825, %v1372
        %1374 = vmatmul.bf16.gmra.mxu0 %v705
        %v1375 = vpop.f32.mrf.mxu0
        %v1376 = vadd.f32 %v825, %v1375
        %v1377 = vpop.f32.mrf.mxu0
        %v1378 = vadd.f32 %v825, %v1377
        %1379 = vmatmul.bf16.gmra.mxu0 %v708
        %v1380 = vpop.f32.mrf.mxu0
        %v1381 = vadd.f32 %v825, %v1380
        %v1382 = vpop.f32.mrf.mxu0
        %v1383 = vadd.f32 %v825, %v1382
        %1384 = vmatmul.bf16.gmra.mxu0 %v711
        %v1385 = vpop.f32.mrf.mxu0
        %v1386 = vadd.f32 %v825, %v1385
        %v1387 = vpop.f32.mrf.mxu0
        %v1388 = vadd.f32 %v825, %v1387
        %1389 = vmatmul.bf16.gmra.mxu0 %v714
        %v1390 = vpop.f32.mrf.mxu0
        %v1391 = vadd.f32 %v825, %v1390
        %v1392 = vpop.f32.mrf.mxu0
        %v1393 = vadd.f32 %v825, %v1392
        %1394 = vmatmul.bf16.gmra.mxu0 %v717
        %v1395 = vpop.f32.mrf.mxu0
        %v1396 = vadd.f32 %v825, %v1395
        %v1397 = vpop.f32.mrf.mxu0
        %v1398 = vadd.f32 %v825, %v1397
        %1399 = vmatmul.bf16.gmra.mxu0 %v720
        %v1400 = vpop.f32.mrf.mxu0
        %v1401 = vadd.f32 %v825, %v1400
        %v1402 = vpop.f32.mrf.mxu0
        %v1403 = vadd.f32 %v825, %v1402
        %1404 = vmatmul.bf16.gmra.mxu0 %v723
        %v1405 = vpop.f32.mrf.mxu0
        %v1406 = vadd.f32 %v825, %v1405
        %v1407 = vpop.f32.mrf.mxu0
        %v1408 = vadd.f32 %v825, %v1407
        %1409 = vdwg.mxu0
        %1410 = vmatpush.bf16.msra.mxu0 %v1116
        %1411 = vmatpush.bf16.msra.mxu0 %v1113
        %1412 = vmatpush.bf16.msra.mxu0 %v1110
        %1413 = vmatpush.bf16.msra.mxu0 %v1107
        %1414 = vmatpush.bf16.msra.mxu0 %v1104
        %1415 = vmatpush.bf16.msra.mxu0 %v1101
        %1416 = vmatpush.bf16.msra.mxu0 %v1098
        %1417 = vmatpush.bf16.msra.mxu0 %v1095
        %1418 = vmatmul.bf16.gmra.mxu0 %v703
        %v1419 = vpop.f32.mrf.mxu0
        %v1420 = vadd.f32 %v1371, %v1419
        %v1421 = vpop.f32.mrf.mxu0
        %v1422 = vadd.f32 %v1373, %v1421
        %1423 = vmatmul.bf16.gmra.mxu0 %v706
        %v1424 = vpop.f32.mrf.mxu0
        %v1425 = vadd.f32 %v1376, %v1424
        %v1426 = vpop.f32.mrf.mxu0
        %v1427 = vadd.f32 %v1378, %v1426
        %1428 = vmatmul.bf16.gmra.mxu0 %v709
        %v1429 = vpop.f32.mrf.mxu0
        %v1430 = vadd.f32 %v1381, %v1429
        %v1431 = vpop.f32.mrf.mxu0
        %v1432 = vadd.f32 %v1383, %v1431
        %1433 = vmatmul.bf16.gmra.mxu0 %v712
        %v1434 = vpop.f32.mrf.mxu0
        %v1435 = vadd.f32 %v1386, %v1434
        %v1436 = vpop.f32.mrf.mxu0
        %v1437 = vadd.f32 %v1388, %v1436
        %1438 = vmatmul.bf16.gmra.mxu0 %v715
        %v1439 = vpop.f32.mrf.mxu0
        %v1440 = vadd.f32 %v1391, %v1439
        %v1441 = vpop.f32.mrf.mxu0
        %v1442 = vadd.f32 %v1393, %v1441
        %1443 = vmatmul.bf16.gmra.mxu0 %v718
        %v1444 = vpop.f32.mrf.mxu0
        %v1445 = vadd.f32 %v1396, %v1444
        %v1446 = vpop.f32.mrf.mxu0
        %v1447 = vadd.f32 %v1398, %v1446
        %1448 = vmatmul.bf16.gmra.mxu0 %v721
        %v1449 = vpop.f32.mrf.mxu0
        %v1450 = vadd.f32 %v1401, %v1449
        %v1451 = vpop.f32.mrf.mxu0
        %v1452 = vadd.f32 %v1403, %v1451
        %1453 = vmatmul.bf16.gmra.mxu0 %v724
        %v1454 = vpop.f32.mrf.mxu0
        %v1455 = vadd.f32 %v1406, %v1454
        %v1456 = vpop.f32.mrf.mxu0
        %v1457 = vadd.f32 %v1408, %v1456
        %1458 = vdwg.mxu0
        %1459 = vmatpush.bf16.msra.mxu0 %v1140
        %1460 = vmatpush.bf16.msra.mxu0 %v1137
        %1461 = vmatpush.bf16.msra.mxu0 %v1134
        %1462 = vmatpush.bf16.msra.mxu0 %v1131
        %1463 = vmatpush.bf16.msra.mxu0 %v1128
        %1464 = vmatpush.bf16.msra.mxu0 %v1125
        %1465 = vmatpush.bf16.msra.mxu0 %v1122
        %1466 = vmatpush.bf16.msra.mxu0 %v1119
        %1467 = vmatmul.bf16.gmra.mxu0 %v704
        %v1468 = vpop.f32.mrf.mxu0
        %v1469 = vadd.f32 %v1420, %v1468
        %v1470 = vpop.f32.mrf.mxu0
        %v1471 = vadd.f32 %v1422, %v1470
        %1472 = vmatmul.bf16.gmra.mxu0 %v707
        %v1473 = vpop.f32.mrf.mxu0
        %v1474 = vadd.f32 %v1425, %v1473
        %v1475 = vpop.f32.mrf.mxu0
        %v1476 = vadd.f32 %v1427, %v1475
        %1477 = vmatmul.bf16.gmra.mxu0 %v710
        %v1478 = vpop.f32.mrf.mxu0
        %v1479 = vadd.f32 %v1430, %v1478
        %v1480 = vpop.f32.mrf.mxu0
        %v1481 = vadd.f32 %v1432, %v1480
        %1482 = vmatmul.bf16.gmra.mxu0 %v713
        %v1483 = vpop.f32.mrf.mxu0
        %v1484 = vadd.f32 %v1435, %v1483
        %v1485 = vpop.f32.mrf.mxu0
        %v1486 = vadd.f32 %v1437, %v1485
        %1487 = vmatmul.bf16.gmra.mxu0 %v716
        %v1488 = vpop.f32.mrf.mxu0
        %v1489 = vadd.f32 %v1440, %v1488
        %v1490 = vpop.f32.mrf.mxu0
        %v1491 = vadd.f32 %v1442, %v1490
        %1492 = vmatmul.bf16.gmra.mxu0 %v719
        %v1493 = vpop.f32.mrf.mxu0
        %v1494 = vadd.f32 %v1445, %v1493
        %v1495 = vpop.f32.mrf.mxu0
        %v1496 = vadd.f32 %v1447, %v1495
        %1497 = vmatmul.bf16.gmra.mxu0 %v722
        %v1498 = vpop.f32.mrf.mxu0
        %v1499 = vadd.f32 %v1450, %v1498
        %v1500 = vpop.f32.mrf.mxu0
        %v1501 = vadd.f32 %v1452, %v1500
        %1502 = vmatmul.bf16.gmra.mxu0 %v725
        %v1503 = vpop.f32.mrf.mxu0
        %v1504 = vadd.f32 %v1455, %v1503
        %v1505 = vpop.f32.mrf.mxu0
        %v1506 = vadd.f32 %v1457, %v1505
        %1507 = vdwg.mxu0
        %1508 = vmatpush.bf16.msra.mxu0 %v1093
        %1509 = vmatpush.bf16.msra.mxu0 %v1090
        %1510 = vmatpush.bf16.msra.mxu0 %v1087
        %1511 = vmatpush.bf16.msra.mxu0 %v1084
        %1512 = vmatpush.bf16.msra.mxu0 %v1081
        %1513 = vmatpush.bf16.msra.mxu0 %v1078
        %1514 = vmatpush.bf16.msra.mxu0 %v1075
        %1515 = vmatpush.bf16.msra.mxu0 %v1072
        %1516 = vmatmul.bf16.gmra.mxu0 %v702
        %v1517 = vpop.f32.mrf.mxu0
        %v1518 = vadd.f32 %v826, %v1517
        %v1519 = vpop.f32.mrf.mxu0
        %v1520 = vadd.f32 %v826, %v1519
        %1521 = vmatmul.bf16.gmra.mxu0 %v705
        %v1522 = vpop.f32.mrf.mxu0
        %v1523 = vadd.f32 %v826, %v1522
        %v1524 = vpop.f32.mrf.mxu0
        %v1525 = vadd.f32 %v826, %v1524
        %1526 = vmatmul.bf16.gmra.mxu0 %v708
        %v1527 = vpop.f32.mrf.mxu0
        %v1528 = vadd.f32 %v826, %v1527
        %v1529 = vpop.f32.mrf.mxu0
        %v1530 = vadd.f32 %v826, %v1529
        %1531 = vmatmul.bf16.gmra.mxu0 %v711
        %v1532 = vpop.f32.mrf.mxu0
        %v1533 = vadd.f32 %v826, %v1532
        %v1534 = vpop.f32.mrf.mxu0
        %v1535 = vadd.f32 %v826, %v1534
        %1536 = vmatmul.bf16.gmra.mxu0 %v714
        %v1537 = vpop.f32.mrf.mxu0
        %v1538 = vadd.f32 %v826, %v1537
        %v1539 = vpop.f32.mrf.mxu0
        %v1540 = vadd.f32 %v826, %v1539
        %1541 = vmatmul.bf16.gmra.mxu0 %v717
        %v1542 = vpop.f32.mrf.mxu0
        %v1543 = vadd.f32 %v826, %v1542
        %v1544 = vpop.f32.mrf.mxu0
        %v1545 = vadd.f32 %v826, %v1544
        %1546 = vmatmul.bf16.gmra.mxu0 %v720
        %v1547 = vpop.f32.mrf.mxu0
        %v1548 = vadd.f32 %v826, %v1547
        %v1549 = vpop.f32.mrf.mxu0
        %v1550 = vadd.f32 %v826, %v1549
        %1551 = vmatmul.bf16.gmra.mxu0 %v723
        %v1552 = vpop.f32.mrf.mxu0
        %v1553 = vadd.f32 %v826, %v1552
        %v1554 = vpop.f32.mrf.mxu0
        %v1555 = vadd.f32 %v826, %v1554
        %1556 = vdwg.mxu0
        %1557 = vmatpush.bf16.msra.mxu0 %v1117
        %1558 = vmatpush.bf16.msra.mxu0 %v1114
        %1559 = vmatpush.bf16.msra.mxu0 %v1111
        %1560 = vmatpush.bf16.msra.mxu0 %v1108
        %1561 = vmatpush.bf16.msra.mxu0 %v1105
        %1562 = vmatpush.bf16.msra.mxu0 %v1102
        %1563 = vmatpush.bf16.msra.mxu0 %v1099
        %1564 = vmatpush.bf16.msra.mxu0 %v1096
        %1565 = vmatmul.bf16.gmra.mxu0 %v703
        %v1566 = vpop.f32.mrf.mxu0
        %v1567 = vadd.f32 %v1518, %v1566
        %v1568 = vpop.f32.mrf.mxu0
        %v1569 = vadd.f32 %v1520, %v1568
        %1570 = vmatmul.bf16.gmra.mxu0 %v706
        %v1571 = vpop.f32.mrf.mxu0
        %v1572 = vadd.f32 %v1523, %v1571
        %v1573 = vpop.f32.mrf.mxu0
        %v1574 = vadd.f32 %v1525, %v1573
        %1575 = vmatmul.bf16.gmra.mxu0 %v709
        %v1576 = vpop.f32.mrf.mxu0
        %v1577 = vadd.f32 %v1528, %v1576
        %v1578 = vpop.f32.mrf.mxu0
        %v1579 = vadd.f32 %v1530, %v1578
        %1580 = vmatmul.bf16.gmra.mxu0 %v712
        %v1581 = vpop.f32.mrf.mxu0
        %v1582 = vadd.f32 %v1533, %v1581
        %v1583 = vpop.f32.mrf.mxu0
        %v1584 = vadd.f32 %v1535, %v1583
        %1585 = vmatmul.bf16.gmra.mxu0 %v715
        %v1586 = vpop.f32.mrf.mxu0
        %v1587 = vadd.f32 %v1538, %v1586
        %v1588 = vpop.f32.mrf.mxu0
        %v1589 = vadd.f32 %v1540, %v1588
        %1590 = vmatmul.bf16.gmra.mxu0 %v718
        %v1591 = vpop.f32.mrf.mxu0
        %v1592 = vadd.f32 %v1543, %v1591
        %v1593 = vpop.f32.mrf.mxu0
        %v1594 = vadd.f32 %v1545, %v1593
        %1595 = vmatmul.bf16.gmra.mxu0 %v721
        %v1596 = vpop.f32.mrf.mxu0
        %v1597 = vadd.f32 %v1548, %v1596
        %v1598 = vpop.f32.mrf.mxu0
        %v1599 = vadd.f32 %v1550, %v1598
        %1600 = vmatmul.bf16.gmra.mxu0 %v724
        %v1601 = vpop.f32.mrf.mxu0
        %v1602 = vadd.f32 %v1553, %v1601
        %v1603 = vpop.f32.mrf.mxu0
        %v1604 = vadd.f32 %v1555, %v1603
        %1605 = vdwg.mxu0
        %1606 = vmatpush.bf16.msra.mxu0 %v1141
        %1607 = vmatpush.bf16.msra.mxu0 %v1138
        %1608 = vmatpush.bf16.msra.mxu0 %v1135
        %1609 = vmatpush.bf16.msra.mxu0 %v1132
        %1610 = vmatpush.bf16.msra.mxu0 %v1129
        %1611 = vmatpush.bf16.msra.mxu0 %v1126
        %1612 = vmatpush.bf16.msra.mxu0 %v1123
        %1613 = vmatpush.bf16.msra.mxu0 %v1120
        %1614 = vmatmul.bf16.gmra.mxu0 %v704
        %v1615 = vpop.f32.mrf.mxu0
        %v1616 = vadd.f32 %v1567, %v1615
        %v1617 = vpop.f32.mrf.mxu0
        %v1618 = vadd.f32 %v1569, %v1617
        %1619 = vmatmul.bf16.gmra.mxu0 %v707
        %v1620 = vpop.f32.mrf.mxu0
        %v1621 = vadd.f32 %v1572, %v1620
        %v1622 = vpop.f32.mrf.mxu0
        %v1623 = vadd.f32 %v1574, %v1622
        %1624 = vmatmul.bf16.gmra.mxu0 %v710
        %v1625 = vpop.f32.mrf.mxu0
        %v1626 = vadd.f32 %v1577, %v1625
        %v1627 = vpop.f32.mrf.mxu0
        %v1628 = vadd.f32 %v1579, %v1627
        %1629 = vmatmul.bf16.gmra.mxu0 %v713
        %v1630 = vpop.f32.mrf.mxu0
        %v1631 = vadd.f32 %v1582, %v1630
        %v1632 = vpop.f32.mrf.mxu0
        %v1633 = vadd.f32 %v1584, %v1632
        %1634 = vmatmul.bf16.gmra.mxu0 %v716
        %v1635 = vpop.f32.mrf.mxu0
        %v1636 = vadd.f32 %v1587, %v1635
        %v1637 = vpop.f32.mrf.mxu0
        %v1638 = vadd.f32 %v1589, %v1637
        %1639 = vmatmul.bf16.gmra.mxu0 %v719
        %v1640 = vpop.f32.mrf.mxu0
        %v1641 = vadd.f32 %v1592, %v1640
        %v1642 = vpop.f32.mrf.mxu0
        %v1643 = vadd.f32 %v1594, %v1642
        %1644 = vmatmul.bf16.gmra.mxu0 %v722
        %v1645 = vpop.f32.mrf.mxu0
        %v1646 = vadd.f32 %v1597, %v1645
        %v1647 = vpop.f32.mrf.mxu0
        %v1648 = vadd.f32 %v1599, %v1647
        %1649 = vmatmul.bf16.gmra.mxu0 %v725
        %v1650 = vpop.f32.mrf.mxu0
        %v1651 = vadd.f32 %v1602, %v1650
        %v1652 = vpop.f32.mrf.mxu0
        %v1653 = vadd.f32 %v1604, %v1652
        %1654 = vdwg.mxu0
        %v1655 = vpack.c.bf16 %v1324, %v1322
        %v1656 = vpack.c.bf16 %v1471, %v1469
        %v1657 = vpack.c.bf16 %v1618, %v1616
        %v1658 = vpack.c.bf16 %v1329, %v1327
        %v1659 = vpack.c.bf16 %v1476, %v1474
        %v1660 = vpack.c.bf16 %v1623, %v1621
        %v1661 = vpack.c.bf16 %v1334, %v1332
        %v1662 = vpack.c.bf16 %v1481, %v1479
        %v1663 = vpack.c.bf16 %v1628, %v1626
        %v1664 = vpack.c.bf16 %v1339, %v1337
        %v1665 = vpack.c.bf16 %v1486, %v1484
        %v1666 = vpack.c.bf16 %v1633, %v1631
        %v1667 = vpack.c.bf16 %v1344, %v1342
        %v1668 = vpack.c.bf16 %v1491, %v1489
        %v1669 = vpack.c.bf16 %v1638, %v1636
        %v1670 = vpack.c.bf16 %v1349, %v1347
        %v1671 = vpack.c.bf16 %v1496, %v1494
        %v1672 = vpack.c.bf16 %v1643, %v1641
        %v1673 = vpack.c.bf16 %v1354, %v1352
        %v1674 = vpack.c.bf16 %v1501, %v1499
        %v1675 = vpack.c.bf16 %v1648, %v1646
        %v1676 = vpack.c.bf16 %v1359, %v1357
        %v1677 = vpack.c.bf16 %v1506, %v1504
        %v1678 = vpack.c.bf16 %v1653, %v1651
        %v1687 = vunpack.c.l.b16 %v406
        %v1688 = vunpack.c.l.b16 %v407
        %v1689 = vunpack.c.l.b16 %v408
        %v1690 = vunpack.c.l.b16 %v409
        %v1691 = vunpack.c.l.b16 %v410
        %v1692 = vunpack.c.l.b16 %v411
        %v1693 = vunpack.c.l.b16 %v412
        %v1694 = vunpack.c.l.b16 %v413
        %v1695 = vpack.c.b16 %v1688, %v1687
        %v1696 = vpack.c.b16 %v1690, %v1689
        %v1697 = vpack.c.b16 %v1692, %v1691
        %v1698 = vpack.c.b16 %v1694, %v1693
        %1703 = vmatpush.bf16.msra.mxu0 %v1676
        %1704 = vmatpush.bf16.msra.mxu0 %v1673
        %1705 = vmatpush.bf16.msra.mxu0 %v1670
        %1706 = vmatpush.bf16.msra.mxu0 %v1667
        %1707 = vmatpush.bf16.msra.mxu0 %v1664
        %1708 = vmatpush.bf16.msra.mxu0 %v1661
        %1709 = vmatpush.bf16.msra.mxu0 %v1658
        %1710 = vmatpush.bf16.msra.mxu0 %v1655
        %1711 = vmatmul.bf16.gmra.mxu0 %v1695
        %v1712 = vpop.f32.mrf.mxu0
        %v1713 = vadd.f32 0.0, %v1712
        %v1714 = vpop.f32.mrf.mxu0
        %v1715 = vadd.f32 0.0, %v1714
        %1716 = vmatmul.bf16.gmra.mxu0 %v1696
        %v1717 = vpop.f32.mrf.mxu0
        %v1718 = vadd.f32 0.0, %v1717
        %v1719 = vpop.f32.mrf.mxu0
        %v1720 = vadd.f32 0.0, %v1719
        %1721 = vmatmul.bf16.gmra.mxu0 %v1697
        %v1722 = vpop.f32.mrf.mxu0
        %v1723 = vadd.f32 0.0, %v1722
        %v1724 = vpop.f32.mrf.mxu0
        %v1725 = vadd.f32 0.0, %v1724
        %1726 = vmatmul.bf16.gmra.mxu0 %v1698
        %v1727 = vpop.f32.mrf.mxu0
        %v1728 = vadd.f32 0.0, %v1727
        %v1729 = vpop.f32.mrf.mxu0
        %v1730 = vadd.f32 0.0, %v1729
        %1731 = vdwg.mxu0
        %1732 = vmatpush.bf16.msra.mxu0 %v1677
        %1733 = vmatpush.bf16.msra.mxu0 %v1674
        %1734 = vmatpush.bf16.msra.mxu0 %v1671
        %1735 = vmatpush.bf16.msra.mxu0 %v1668
        %1736 = vmatpush.bf16.msra.mxu0 %v1665
        %1737 = vmatpush.bf16.msra.mxu0 %v1662
        %1738 = vmatpush.bf16.msra.mxu0 %v1659
        %1739 = vmatpush.bf16.msra.mxu0 %v1656
        %1740 = vmatmul.bf16.gmra.mxu0 %v1695
        %v1741 = vpop.f32.mrf.mxu0
        %v1742 = vadd.f32 0.0, %v1741
        %v1743 = vpop.f32.mrf.mxu0
        %v1744 = vadd.f32 0.0, %v1743
        %1745 = vmatmul.bf16.gmra.mxu0 %v1696
        %v1746 = vpop.f32.mrf.mxu0
        %v1747 = vadd.f32 0.0, %v1746
        %v1748 = vpop.f32.mrf.mxu0
        %v1749 = vadd.f32 0.0, %v1748
        %1750 = vmatmul.bf16.gmra.mxu0 %v1697
        %v1751 = vpop.f32.mrf.mxu0
        %v1752 = vadd.f32 0.0, %v1751
        %v1753 = vpop.f32.mrf.mxu0
        %v1754 = vadd.f32 0.0, %v1753
        %1755 = vmatmul.bf16.gmra.mxu0 %v1698
        %v1756 = vpop.f32.mrf.mxu0
        %v1757 = vadd.f32 0.0, %v1756
        %v1758 = vpop.f32.mrf.mxu0
        %v1759 = vadd.f32 0.0, %v1758
        %1760 = vdwg.mxu0
        %1761 = vmatpush.bf16.msra.mxu0 %v1678
        %1762 = vmatpush.bf16.msra.mxu0 %v1675
        %1763 = vmatpush.bf16.msra.mxu0 %v1672
        %1764 = vmatpush.bf16.msra.mxu0 %v1669
        %1765 = vmatpush.bf16.msra.mxu0 %v1666
        %1766 = vmatpush.bf16.msra.mxu0 %v1663
        %1767 = vmatpush.bf16.msra.mxu0 %v1660
        %1768 = vmatpush.bf16.msra.mxu0 %v1657
        %1769 = vmatmul.bf16.gmra.mxu0 %v1695
        %v1770 = vpop.f32.mrf.mxu0
        %v1771 = vadd.f32 0.0, %v1770
        %v1772 = vpop.f32.mrf.mxu0
        %v1773 = vadd.f32 0.0, %v1772
        %1774 = vmatmul.bf16.gmra.mxu0 %v1696
        %v1775 = vpop.f32.mrf.mxu0
        %v1776 = vadd.f32 0.0, %v1775
        %v1777 = vpop.f32.mrf.mxu0
        %v1778 = vadd.f32 0.0, %v1777
        %1779 = vmatmul.bf16.gmra.mxu0 %v1697
        %v1780 = vpop.f32.mrf.mxu0
        %v1781 = vadd.f32 0.0, %v1780
        %v1782 = vpop.f32.mrf.mxu0
        %v1783 = vadd.f32 0.0, %v1782
        %1784 = vmatmul.bf16.gmra.mxu0 %v1698
        %v1785 = vpop.f32.mrf.mxu0
        %v1786 = vadd.f32 0.0, %v1785
        %v1787 = vpop.f32.mrf.mxu0
        %v1788 = vadd.f32 0.0, %v1787
        %1789 = vdwg.mxu0
        %v1790 = vadd.f32 %v382, %v1713
        %v1791 = vadd.f32 %v383, %v1742
        %v1792 = vadd.f32 %v384, %v1771
        %v1793 = vadd.f32 %v385, %v1715
        %v1794 = vadd.f32 %v386, %v1744
        %v1795 = vadd.f32 %v387, %v1773
        %v1796 = vadd.f32 %v388, %v1718
        %v1797 = vadd.f32 %v389, %v1747
        %v1798 = vadd.f32 %v390, %v1776
        %v1799 = vadd.f32 %v391, %v1720
        %v1800 = vadd.f32 %v392, %v1749
        %v1801 = vadd.f32 %v393, %v1778
        %v1802 = vadd.f32 %v394, %v1723
        %v1803 = vadd.f32 %v395, %v1752
        %v1804 = vadd.f32 %v396, %v1781
        %v1805 = vadd.f32 %v397, %v1725
        %v1806 = vadd.f32 %v398, %v1754
        %v1807 = vadd.f32 %v399, %v1783
        %v1808 = vadd.f32 %v400, %v1728
        %v1809 = vadd.f32 %v401, %v1757
        %v1810 = vadd.f32 %v402, %v1786
        %v1811 = vadd.f32 %v403, %v1730
        %v1812 = vadd.f32 %v404, %v1759
        %v1813 = vadd.f32 %v405, %v1788
        %s1814 = scalar_lea.vmem %s293, 32 [#allocation6]
        %v1815 = vld [vmem:[%s1814] sm:$0xf]
        %v1816 = vld [vmem:[%s1814 + $0x4] sm:$0xf]
        %v1817 = vld [vmem:[%s1814 + $0x8] sm:$0xf]
        %v1818 = vld [vmem:[%s1814 + $0xc] sm:$0xf]
        %v1819 = vld [vmem:[%s1814 + $0x10] sm:$0xf]
        %v1820 = vld [vmem:[%s1814 + $0x14] sm:$0xf]
        %v1821 = vld [vmem:[%s1814 + $0x18] sm:$0xf]
        %v1822 = vld [vmem:[%s1814 + $0x1c] sm:$0xf]
        %v1823 = vunpack.c.l.bf16 %v1815
        %v1824 = vunpack.c.l.bf16 %v1816
        %v1825 = vunpack.c.l.bf16 %v1817
        %v1826 = vunpack.c.l.bf16 %v1818
        %v1827 = vunpack.c.l.bf16 %v1819
        %v1828 = vunpack.c.l.bf16 %v1820
        %v1829 = vunpack.c.l.bf16 %v1821
        %v1830 = vunpack.c.l.bf16 %v1822
        %vm1831 = vcmp.ne.f32.partialorder %v1823, 0.0
        %vm1832 = vcmp.ne.f32.partialorder %v1824, 0.0
        %vm1833 = vcmp.ne.f32.partialorder %v1825, 0.0
        %vm1834 = vcmp.ne.f32.partialorder %v1826, 0.0
        %vm1835 = vcmp.ne.f32.partialorder %v1827, 0.0
        %vm1836 = vcmp.ne.f32.partialorder %v1828, 0.0
        %vm1837 = vcmp.ne.f32.partialorder %v1829, 0.0
        %vm1838 = vcmp.ne.f32.partialorder %v1830, 0.0
        %v1839 = vsel %vm1831, 1, 0
        %v1840 = vsel %vm1832, 1, 0
        %v1841 = vsel %vm1833, 1, 0
        %v1842 = vsel %vm1834, 1, 0
        %v1843 = vsel %vm1835, 1, 0
        %v1844 = vsel %vm1836, 1, 0
        %v1845 = vsel %vm1837, 1, 0
        %v1846 = vsel %vm1838, 1, 0
        %v1847 = vcvt.s32.f32 %v1839
        %v1848 = vcvt.s32.f32 %v1840
        %v1849 = vcvt.s32.f32 %v1841
        %v1850 = vcvt.s32.f32 %v1842
        %v1851 = vcvt.s32.f32 %v1843
        %v1852 = vcvt.s32.f32 %v1844
        %v1853 = vcvt.s32.f32 %v1845
        %v1854 = vcvt.s32.f32 %v1846
        %v1855 = vpack.c.bf16 %v1848, %v1847
        %v1856 = vpack.c.bf16 %v1850, %v1849
        %v1857 = vpack.c.bf16 %v1852, %v1851
        %v1858 = vpack.c.bf16 %v1854, %v1853
        %1859 = vxpose.xlu0.c.b16.start [1/8] %v1855, 128
        %1860 = vxpose.xlu0.c.b16.cont [2/8] %v1856, 128
        %1861 = vxpose.xlu0.c.b16.cont [3/8] %v1857, 128
        %1862 = vxpose.xlu0.c.b16.cont [4/8] %v1858, 128
        %1863 = vxpose.xlu0.c.b16.cont [5/8] 0, 128
        %1864 = vxpose.xlu0.c.b16.cont [6/8] 0, 128
        %1865 = vxpose.xlu0.c.b16.cont [7/8] 0, 128
        %1866 = vxpose.xlu0.c.b16.end [8/8] 0, 128
        %v1867 = vpop.trf.xlu0
        %v1868 = vpop.trf.xlu0
        %v1869 = vpop.trf.xlu0
        %v1870 = vpop.trf.xlu0
        %v1871 = vpop.trf.xlu0
        %v1872 = vpop.trf.xlu0
        %v1873 = vpop.trf.xlu0
        %v1874 = vpop.trf.xlu0
        %v1876 = vsel %vm530, %v1867, 0
        %v1879 = vsel %vm530, %v1868, 0
        %v1882 = vsel %vm530, %v1869, 0
        %v1885 = vsel %vm530, %v1870, 0
        %v1888 = vsel %vm530, %v1871, 0
        %v1891 = vsel %vm530, %v1872, 0
        %v1894 = vsel %vm530, %v1873, 0
        %v1897 = vsel %vm530, %v1874, 0
        %1899 = vmatpush.bf16.msra.mxu0 0
        %1900 = vmatpush.bf16.msra.mxu0 0
        %1901 = vmatpush.bf16.msra.mxu0 0
        %1902 = vmatpush.bf16.msra.mxu0 0
        %1903 = vmatpush.bf16.msra.mxu0 %v515
        %1904 = vmatpush.bf16.msra.mxu0 %v512
        %1905 = vmatpush.bf16.msra.mxu0 %v509
        %1906 = vmatpush.bf16.msra.mxu0 %v506
        %1907 = vmatmul.bf16.gmra.mxu0 %v1876
        %v1908 = vpop.f32.mrf.mxu0
        %v1909 = vadd.f32 0.0, %v1908
        %v1910 = vpop.f32.mrf.mxu0
        %v1911 = vadd.f32 0.0, %v1910
        %1912 = vmatmul.bf16.gmra.mxu0 %v1879
        %v1913 = vpop.f32.mrf.mxu0
        %v1914 = vadd.f32 0.0, %v1913
        %v1915 = vpop.f32.mrf.mxu0
        %v1916 = vadd.f32 0.0, %v1915
        %1917 = vmatmul.bf16.gmra.mxu0 %v1882
        %v1918 = vpop.f32.mrf.mxu0
        %v1919 = vadd.f32 0.0, %v1918
        %v1920 = vpop.f32.mrf.mxu0
        %v1921 = vadd.f32 0.0, %v1920
        %1922 = vmatmul.bf16.gmra.mxu0 %v1885
        %v1923 = vpop.f32.mrf.mxu0
        %v1924 = vadd.f32 0.0, %v1923
        %v1925 = vpop.f32.mrf.mxu0
        %v1926 = vadd.f32 0.0, %v1925
        %1927 = vmatmul.bf16.gmra.mxu0 %v1888
        %v1928 = vpop.f32.mrf.mxu0
        %v1929 = vadd.f32 0.0, %v1928
        %v1930 = vpop.f32.mrf.mxu0
        %v1931 = vadd.f32 0.0, %v1930
        %1932 = vmatmul.bf16.gmra.mxu0 %v1891
        %v1933 = vpop.f32.mrf.mxu0
        %v1934 = vadd.f32 0.0, %v1933
        %v1935 = vpop.f32.mrf.mxu0
        %v1936 = vadd.f32 0.0, %v1935
        %1937 = vmatmul.bf16.gmra.mxu0 %v1894
        %v1938 = vpop.f32.mrf.mxu0
        %v1939 = vadd.f32 0.0, %v1938
        %v1940 = vpop.f32.mrf.mxu0
        %v1941 = vadd.f32 0.0, %v1940
        %1942 = vmatmul.bf16.gmra.mxu0 %v1897
        %v1943 = vpop.f32.mrf.mxu0
        %v1944 = vadd.f32 0.0, %v1943
        %v1945 = vpop.f32.mrf.mxu0
        %v1946 = vadd.f32 0.0, %v1945
        %1947 = vdwg.mxu0
        %1948 = vmatpush.bf16.msra.mxu0 0
        %1949 = vmatpush.bf16.msra.mxu0 0
        %1950 = vmatpush.bf16.msra.mxu0 0
        %1951 = vmatpush.bf16.msra.mxu0 0
        %1952 = vmatpush.bf16.msra.mxu0 %v516
        %1953 = vmatpush.bf16.msra.mxu0 %v513
        %1954 = vmatpush.bf16.msra.mxu0 %v510
        %1955 = vmatpush.bf16.msra.mxu0 %v507
        %1956 = vmatmul.bf16.gmra.mxu0 %v1876
        %v1957 = vpop.f32.mrf.mxu0
        %v1958 = vadd.f32 0.0, %v1957
        %v1959 = vpop.f32.mrf.mxu0
        %v1960 = vadd.f32 0.0, %v1959
        %1961 = vmatmul.bf16.gmra.mxu0 %v1879
        %v1962 = vpop.f32.mrf.mxu0
        %v1963 = vadd.f32 0.0, %v1962
        %v1964 = vpop.f32.mrf.mxu0
        %v1965 = vadd.f32 0.0, %v1964
        %1966 = vmatmul.bf16.gmra.mxu0 %v1882
        %v1967 = vpop.f32.mrf.mxu0
        %v1968 = vadd.f32 0.0, %v1967
        %v1969 = vpop.f32.mrf.mxu0
        %v1970 = vadd.f32 0.0, %v1969
        %1971 = vmatmul.bf16.gmra.mxu0 %v1885
        %v1972 = vpop.f32.mrf.mxu0
        %v1973 = vadd.f32 0.0, %v1972
        %v1974 = vpop.f32.mrf.mxu0
        %v1975 = vadd.f32 0.0, %v1974
        %1976 = vmatmul.bf16.gmra.mxu0 %v1888
        %v1977 = vpop.f32.mrf.mxu0
        %v1978 = vadd.f32 0.0, %v1977
        %v1979 = vpop.f32.mrf.mxu0
        %v1980 = vadd.f32 0.0, %v1979
        %1981 = vmatmul.bf16.gmra.mxu0 %v1891
        %v1982 = vpop.f32.mrf.mxu0
        %v1983 = vadd.f32 0.0, %v1982
        %v1984 = vpop.f32.mrf.mxu0
        %v1985 = vadd.f32 0.0, %v1984
        %1986 = vmatmul.bf16.gmra.mxu0 %v1894
        %v1987 = vpop.f32.mrf.mxu0
        %v1988 = vadd.f32 0.0, %v1987
        %v1989 = vpop.f32.mrf.mxu0
        %v1990 = vadd.f32 0.0, %v1989
        %1991 = vmatmul.bf16.gmra.mxu0 %v1897
        %v1992 = vpop.f32.mrf.mxu0
        %v1993 = vadd.f32 0.0, %v1992
        %v1994 = vpop.f32.mrf.mxu0
        %v1995 = vadd.f32 0.0, %v1994
        %1996 = vdwg.mxu0
        %1997 = vmatpush.bf16.msra.mxu0 0
        %1998 = vmatpush.bf16.msra.mxu0 0
        %1999 = vmatpush.bf16.msra.mxu0 0
        %2000 = vmatpush.bf16.msra.mxu0 0
        %2001 = vmatpush.bf16.msra.mxu0 %v517
        %2002 = vmatpush.bf16.msra.mxu0 %v514
        %2003 = vmatpush.bf16.msra.mxu0 %v511
        %2004 = vmatpush.bf16.msra.mxu0 %v508
        %2005 = vmatmul.bf16.gmra.mxu0 %v1876
        %v2006 = vpop.f32.mrf.mxu0
        %v2007 = vadd.f32 0.0, %v2006
        %v2008 = vpop.f32.mrf.mxu0
        %v2009 = vadd.f32 0.0, %v2008
        %2010 = vmatmul.bf16.gmra.mxu0 %v1879
        %v2011 = vpop.f32.mrf.mxu0
        %v2012 = vadd.f32 0.0, %v2011
        %v2013 = vpop.f32.mrf.mxu0
        %v2014 = vadd.f32 0.0, %v2013
        %2015 = vmatmul.bf16.gmra.mxu0 %v1882
        %v2016 = vpop.f32.mrf.mxu0
        %v2017 = vadd.f32 0.0, %v2016
        %v2018 = vpop.f32.mrf.mxu0
        %v2019 = vadd.f32 0.0, %v2018
        %2020 = vmatmul.bf16.gmra.mxu0 %v1885
        %v2021 = vpop.f32.mrf.mxu0
        %v2022 = vadd.f32 0.0, %v2021
        %v2023 = vpop.f32.mrf.mxu0
        %v2024 = vadd.f32 0.0, %v2023
        %2025 = vmatmul.bf16.gmra.mxu0 %v1888
        %v2026 = vpop.f32.mrf.mxu0
        %v2027 = vadd.f32 0.0, %v2026
        %v2028 = vpop.f32.mrf.mxu0
        %v2029 = vadd.f32 0.0, %v2028
        %2030 = vmatmul.bf16.gmra.mxu0 %v1891
        %v2031 = vpop.f32.mrf.mxu0
        %v2032 = vadd.f32 0.0, %v2031
        %v2033 = vpop.f32.mrf.mxu0
        %v2034 = vadd.f32 0.0, %v2033
        %2035 = vmatmul.bf16.gmra.mxu0 %v1894
        %v2036 = vpop.f32.mrf.mxu0
        %v2037 = vadd.f32 0.0, %v2036
        %v2038 = vpop.f32.mrf.mxu0
        %v2039 = vadd.f32 0.0, %v2038
        %2040 = vmatmul.bf16.gmra.mxu0 %v1897
        %v2041 = vpop.f32.mrf.mxu0
        %v2042 = vadd.f32 0.0, %v2041
        %v2043 = vpop.f32.mrf.mxu0
        %v2044 = vadd.f32 0.0, %v2043
        %2045 = vdwg.mxu0
        %v2046 = vpack.c.bf16 %v1911, %v1909
        %v2047 = vpack.c.bf16 %v1960, %v1958
        %v2048 = vpack.c.bf16 %v2009, %v2007
        %v2049 = vpack.c.bf16 %v1916, %v1914
        %v2050 = vpack.c.bf16 %v1965, %v1963
        %v2051 = vpack.c.bf16 %v2014, %v2012
        %v2052 = vpack.c.bf16 %v1921, %v1919
        %v2053 = vpack.c.bf16 %v1970, %v1968
        %v2054 = vpack.c.bf16 %v2019, %v2017
        %v2055 = vpack.c.bf16 %v1926, %v1924
        %v2056 = vpack.c.bf16 %v1975, %v1973
        %v2057 = vpack.c.bf16 %v2024, %v2022
        %v2058 = vpack.c.bf16 %v1931, %v1929
        %v2059 = vpack.c.bf16 %v1980, %v1978
        %v2060 = vpack.c.bf16 %v2029, %v2027
        %v2061 = vpack.c.bf16 %v1936, %v1934
        %v2062 = vpack.c.bf16 %v1985, %v1983
        %v2063 = vpack.c.bf16 %v2034, %v2032
        %v2064 = vpack.c.bf16 %v1941, %v1939
        %v2065 = vpack.c.bf16 %v1990, %v1988
        %v2066 = vpack.c.bf16 %v2039, %v2037
        %v2067 = vpack.c.bf16 %v1946, %v1944
        %v2068 = vpack.c.bf16 %v1995, %v1993
        %v2069 = vpack.c.bf16 %v2044, %v2042
        %s2070 = scalar_lea.vmem [#allocation8], 576
        %v2071 = vld [vmem:[%s2070] sm:$0xff]
        %v2072 = vld [vmem:[%s2070 + $0x8] sm:$0xf]
        %v2073 = vld [vmem:[%s2070 + $0xc] sm:$0xff]
        %v2074 = vld [vmem:[%s2070 + $0x14] sm:$0xf]
        %v2075 = vld [vmem:[%s2070 + $0x18] sm:$0xff]
        %v2076 = vld [vmem:[%s2070 + $0x20] sm:$0xf]
        %v2077 = vld [vmem:[%s2070 + $0x24] sm:$0xff]
        %v2078 = vld [vmem:[%s2070 + $0x2c] sm:$0xf]
        %v2079 = vld [vmem:[%s2070 + $0x30] sm:$0xff]
        %v2080 = vld [vmem:[%s2070 + $0x38] sm:$0xf]
        %v2081 = vld [vmem:[%s2070 + $0x3c] sm:$0xff]
        %v2082 = vld [vmem:[%s2070 + $0x44] sm:$0xf]
        %v2083 = vld [vmem:[%s2070 + $0x48] sm:$0xff]
        %v2084 = vld [vmem:[%s2070 + $0x50] sm:$0xf]
        %v2085 = vld [vmem:[%s2070 + $0x54] sm:$0xff]
        %v2086 = vld [vmem:[%s2070 + $0x5c] sm:$0xf]
        %v2087 = vld [vmem:[%s2070 + $0x60] sm:$0xff]
        %v2088 = vld [vmem:[%s2070 + $0x68] sm:$0xf]
        %v2089 = vld [vmem:[%s2070 + $0x6c] sm:$0xff]
        %v2090 = vld [vmem:[%s2070 + $0x74] sm:$0xf]
        %v2091 = vld [vmem:[%s2070 + $0x78] sm:$0xff]
        %v2092 = vld [vmem:[%s2070 + $0x80] sm:$0xf]
        %v2093 = vld [vmem:[%s2070 + $0x84] sm:$0xff]
        %v2094 = vld [vmem:[%s2070 + $0x8c] sm:$0xf]
        %v2095 = vld [vmem:[%s2070 + $0x90] sm:$0xff]
        %v2096 = vld [vmem:[%s2070 + $0x98] sm:$0xf]
        %v2097 = vld [vmem:[%s2070 + $0x9c] sm:$0xff]
        %v2098 = vld [vmem:[%s2070 + $0xa4] sm:$0xf]
        %v2099 = vld [vmem:[%s2070 + $0xa8] sm:$0xff]
        %v2100 = vld [vmem:[%s2070 + $0xb0] sm:$0xf]
        %v2101 = vld [vmem:[%s2070 + $0xb4] sm:$0xff]
        %v2102 = vld [vmem:[%s2070 + $0xbc] sm:$0xf]
        %v2103 = vld [vmem:[%s2070 + $0xc0] sm:$0xff]
        %v2104 = vld [vmem:[%s2070 + $0xc8] sm:$0xf]
        %v2105 = vld [vmem:[%s2070 + $0xcc] sm:$0xff]
        %v2106 = vld [vmem:[%s2070 + $0xd4] sm:$0xf]
        %v2107 = vld [vmem:[%s2070 + $0xd8] sm:$0xff]
        %v2108 = vld [vmem:[%s2070 + $0xe0] sm:$0xf]
        %v2109 = vld [vmem:[%s2070 + $0xe4] sm:$0xff]
        %v2110 = vld [vmem:[%s2070 + $0xec] sm:$0xf]
        %v2111 = vld [vmem:[%s2070 + $0xf0] sm:$0xff]
        %v2112 = vld [vmem:[%s2070 + $0xf8] sm:$0xf]
        %v2113 = vld [vmem:[%s2070 + $0xfc] sm:$0xff]
        %v2114 = vld [vmem:[%s2070 + $0x104] sm:$0xf]
        %v2115 = vld [vmem:[%s2070 + $0x108] sm:$0xff]
        %v2116 = vld [vmem:[%s2070 + $0x110] sm:$0xf]
        %v2117 = vld [vmem:[%s2070 + $0x114] sm:$0xff]
        %v2118 = vld [vmem:[%s2070 + $0x11c] sm:$0xf]
        %v2119 = vld [vmem:[%s2070 + $0x120] sm:$0xff]
        %v2120 = vld [vmem:[%s2070 + $0x128] sm:$0xf]
        %v2121 = vld [vmem:[%s2070 + $0x12c] sm:$0xff]
        %v2122 = vld [vmem:[%s2070 + $0x134] sm:$0xf]
        %v2123 = vld [vmem:[%s2070 + $0x138] sm:$0xff]
        %v2124 = vld [vmem:[%s2070 + $0x140] sm:$0xf]
        %v2125 = vld [vmem:[%s2070 + $0x144] sm:$0xff]
        %v2126 = vld [vmem:[%s2070 + $0x14c] sm:$0xf]
        %v2127 = vld [vmem:[%s2070 + $0x150] sm:$0xff]
        %v2128 = vld [vmem:[%s2070 + $0x158] sm:$0xf]
        %v2129 = vld [vmem:[%s2070 + $0x15c] sm:$0xff]
        %v2130 = vld [vmem:[%s2070 + $0x164] sm:$0xf]
        %v2131 = vld [vmem:[%s2070 + $0x168] sm:$0xff]
        %v2132 = vld [vmem:[%s2070 + $0x170] sm:$0xf]
        %v2133 = vld [vmem:[%s2070 + $0x174] sm:$0xff]
        %v2134 = vld [vmem:[%s2070 + $0x17c] sm:$0xf]
        %v2135 = vld [vmem:[%s2070 + $0x180] sm:$0xff]
        %v2136 = vld [vmem:[%s2070 + $0x188] sm:$0xf]
        %v2137 = vld [vmem:[%s2070 + $0x18c] sm:$0xff]
        %v2138 = vld [vmem:[%s2070 + $0x194] sm:$0xf]
        %v2139 = vld [vmem:[%s2070 + $0x198] sm:$0xff]
        %v2140 = vld [vmem:[%s2070 + $0x1a0] sm:$0xf]
        %v2141 = vld [vmem:[%s2070 + $0x1a4] sm:$0xff]
        %v2142 = vld [vmem:[%s2070 + $0x1ac] sm:$0xf]
        %v2143 = vld [vmem:[%s2070 + $0x1b0] sm:$0xff]
        %v2144 = vld [vmem:[%s2070 + $0x1b8] sm:$0xf]
        %v2145 = vld [vmem:[%s2070 + $0x1bc] sm:$0xff]
        %v2146 = vld [vmem:[%s2070 + $0x1c4] sm:$0xf]
        %v2147 = vld [vmem:[%s2070 + $0x1c8] sm:$0xff]
        %v2148 = vld [vmem:[%s2070 + $0x1d0] sm:$0xf]
        %v2149 = vld [vmem:[%s2070 + $0x1d4] sm:$0xff]
        %v2150 = vld [vmem:[%s2070 + $0x1dc] sm:$0xf]
        %v2151 = vld [vmem:[%s2070 + $0x1e0] sm:$0xff]
        %v2152 = vld [vmem:[%s2070 + $0x1e8] sm:$0xf]
        %v2153 = vld [vmem:[%s2070 + $0x1ec] sm:$0xff]
        %v2154 = vld [vmem:[%s2070 + $0x1f4] sm:$0xf]
        %v2155 = vld [vmem:[%s2070 + $0x1f8] sm:$0xff]
        %v2156 = vld [vmem:[%s2070 + $0x200] sm:$0xf]
        %v2157 = vld [vmem:[%s2070 + $0x204] sm:$0xff]
        %v2158 = vld [vmem:[%s2070 + $0x20c] sm:$0xf]
        %v2159 = vld [vmem:[%s2070 + $0x210] sm:$0xff]
        %v2160 = vld [vmem:[%s2070 + $0x218] sm:$0xf]
        %v2161 = vld [vmem:[%s2070 + $0x21c] sm:$0xff]
        %v2162 = vld [vmem:[%s2070 + $0x224] sm:$0xf]
        %v2163 = vld [vmem:[%s2070 + $0x228] sm:$0xff]
        %v2164 = vld [vmem:[%s2070 + $0x230] sm:$0xf]
        %v2165 = vld [vmem:[%s2070 + $0x234] sm:$0xff]
        %v2166 = vld [vmem:[%s2070 + $0x23c] sm:$0xf]
        %s2167 = scalar_lea.vmem [#allocation9], 3
        %v2168 = vld [vmem:[%s2167] sm:$0x7]
        %v2170 = vperm.slane %v2168, 0
        %v2171 = vperm.slane %v2168, 1
        %v2172 = vperm.slane %v2168, 2
        %v2272 = vunpack.c.l.b16 %v2071
        %v2273 = vunpack.c.h.b16 %v2071
        %v2274 = vunpack.c.l.b16 %v2072
        %v2275 = vunpack.c.l.b16 %v2073
        %v2276 = vunpack.c.h.b16 %v2073
        %v2277 = vunpack.c.l.b16 %v2074
        %v2278 = vunpack.c.l.b16 %v2075
        %v2279 = vunpack.c.h.b16 %v2075
        %v2280 = vunpack.c.l.b16 %v2076
        %v2281 = vunpack.c.l.b16 %v2077
        %v2282 = vunpack.c.h.b16 %v2077
        %v2283 = vunpack.c.l.b16 %v2078
        %v2284 = vunpack.c.l.b16 %v2079
        %v2285 = vunpack.c.h.b16 %v2079
        %v2286 = vunpack.c.l.b16 %v2080
        %v2287 = vunpack.c.l.b16 %v2081
        %v2288 = vunpack.c.h.b16 %v2081
        %v2289 = vunpack.c.l.b16 %v2082
        %v2290 = vunpack.c.l.b16 %v2083
        %v2291 = vunpack.c.h.b16 %v2083
        %v2292 = vunpack.c.l.b16 %v2084
        %v2293 = vunpack.c.l.b16 %v2085
        %v2294 = vunpack.c.h.b16 %v2085
        %v2295 = vunpack.c.l.b16 %v2086
        %v2296 = vunpack.c.l.b16 %v2087
        %v2297 = vunpack.c.h.b16 %v2087
        %v2298 = vunpack.c.l.b16 %v2088
        %v2299 = vunpack.c.l.b16 %v2089
        %v2300 = vunpack.c.h.b16 %v2089
        %v2301 = vunpack.c.l.b16 %v2090
        %v2302 = vunpack.c.l.b16 %v2091
        %v2303 = vunpack.c.h.b16 %v2091
        %v2304 = vunpack.c.l.b16 %v2092
        %v2305 = vunpack.c.l.b16 %v2093
        %v2306 = vunpack.c.h.b16 %v2093
        %v2307 = vunpack.c.l.b16 %v2094
        %v2308 = vunpack.c.l.b16 %v2095
        %v2309 = vunpack.c.h.b16 %v2095
        %v2310 = vunpack.c.l.b16 %v2096
        %v2311 = vunpack.c.l.b16 %v2097
        %v2312 = vunpack.c.h.b16 %v2097
        %v2313 = vunpack.c.l.b16 %v2098
        %v2314 = vunpack.c.l.b16 %v2099
        %v2315 = vunpack.c.h.b16 %v2099
        %v2316 = vunpack.c.l.b16 %v2100
        %v2317 = vunpack.c.l.b16 %v2101
        %v2318 = vunpack.c.h.b16 %v2101
        %v2319 = vunpack.c.l.b16 %v2102
        %v2320 = vunpack.c.l.b16 %v2103
        %v2321 = vunpack.c.h.b16 %v2103
        %v2322 = vunpack.c.l.b16 %v2104
        %v2323 = vunpack.c.l.b16 %v2105
        %v2324 = vunpack.c.h.b16 %v2105
        %v2325 = vunpack.c.l.b16 %v2106
        %v2326 = vunpack.c.l.b16 %v2107
        %v2327 = vunpack.c.h.b16 %v2107
        %v2328 = vunpack.c.l.b16 %v2108
        %v2329 = vunpack.c.l.b16 %v2109
        %v2330 = vunpack.c.h.b16 %v2109
        %v2331 = vunpack.c.l.b16 %v2110
        %v2332 = vunpack.c.l.b16 %v2111
        %v2333 = vunpack.c.h.b16 %v2111
        %v2334 = vunpack.c.l.b16 %v2112
        %v2335 = vunpack.c.l.b16 %v2113
        %v2336 = vunpack.c.h.b16 %v2113
        %v2337 = vunpack.c.l.b16 %v2114
        %v2338 = vunpack.c.l.b16 %v2115
        %v2339 = vunpack.c.h.b16 %v2115
        %v2340 = vunpack.c.l.b16 %v2116
        %v2341 = vunpack.c.l.b16 %v2117
        %v2342 = vunpack.c.h.b16 %v2117
        %v2343 = vunpack.c.l.b16 %v2118
        %v2344 = vunpack.c.l.b16 %v2119
        %v2345 = vunpack.c.h.b16 %v2119
        %v2346 = vunpack.c.l.b16 %v2120
        %v2347 = vunpack.c.l.b16 %v2121
        %v2348 = vunpack.c.h.b16 %v2121
        %v2349 = vunpack.c.l.b16 %v2122
        %v2350 = vunpack.c.l.b16 %v2123
        %v2351 = vunpack.c.h.b16 %v2123
        %v2352 = vunpack.c.l.b16 %v2124
        %v2353 = vunpack.c.l.b16 %v2125
        %v2354 = vunpack.c.h.b16 %v2125
        %v2355 = vunpack.c.l.b16 %v2126
        %v2356 = vunpack.c.l.b16 %v2127
        %v2357 = vunpack.c.h.b16 %v2127
        %v2358 = vunpack.c.l.b16 %v2128
        %v2359 = vunpack.c.l.b16 %v2129
        %v2360 = vunpack.c.h.b16 %v2129
        %v2361 = vunpack.c.l.b16 %v2130
        %v2362 = vunpack.c.l.b16 %v2131
        %v2363 = vunpack.c.h.b16 %v2131
        %v2364 = vunpack.c.l.b16 %v2132
        %v2365 = vunpack.c.l.b16 %v2133
        %v2366 = vunpack.c.h.b16 %v2133
        %v2367 = vunpack.c.l.b16 %v2134
        %v2368 = vunpack.c.l.b16 %v2135
        %v2369 = vunpack.c.h.b16 %v2135
        %v2370 = vunpack.c.l.b16 %v2136
        %v2371 = vunpack.c.l.b16 %v2137
        %v2372 = vunpack.c.h.b16 %v2137
        %v2373 = vunpack.c.l.b16 %v2138
        %v2374 = vunpack.c.l.b16 %v2139
        %v2375 = vunpack.c.h.b16 %v2139
        %v2376 = vunpack.c.l.b16 %v2140
        %v2377 = vunpack.c.l.b16 %v2141
        %v2378 = vunpack.c.h.b16 %v2141
        %v2379 = vunpack.c.l.b16 %v2142
        %v2380 = vunpack.c.l.b16 %v2143
        %v2381 = vunpack.c.h.b16 %v2143
        %v2382 = vunpack.c.l.b16 %v2144
        %v2383 = vunpack.c.l.b16 %v2145
        %v2384 = vunpack.c.h.b16 %v2145
        %v2385 = vunpack.c.l.b16 %v2146
        %v2386 = vunpack.c.l.b16 %v2147
        %v2387 = vunpack.c.h.b16 %v2147
        %v2388 = vunpack.c.l.b16 %v2148
        %v2389 = vunpack.c.l.b16 %v2149
        %v2390 = vunpack.c.h.b16 %v2149
        %v2391 = vunpack.c.l.b16 %v2150
        %v2392 = vunpack.c.l.b16 %v2151
        %v2393 = vunpack.c.h.b16 %v2151
        %v2394 = vunpack.c.l.b16 %v2152
        %v2395 = vunpack.c.l.b16 %v2153
        %v2396 = vunpack.c.h.b16 %v2153
        %v2397 = vunpack.c.l.b16 %v2154
        %v2398 = vunpack.c.l.b16 %v2155
        %v2399 = vunpack.c.h.b16 %v2155
        %v2400 = vunpack.c.l.b16 %v2156
        %v2401 = vunpack.c.l.b16 %v2157
        %v2402 = vunpack.c.h.b16 %v2157
        %v2403 = vunpack.c.l.b16 %v2158
        %v2404 = vunpack.c.l.b16 %v2159
        %v2405 = vunpack.c.h.b16 %v2159
        %v2406 = vunpack.c.l.b16 %v2160
        %v2407 = vunpack.c.l.b16 %v2161
        %v2408 = vunpack.c.h.b16 %v2161
        %v2409 = vunpack.c.l.b16 %v2162
        %v2410 = vunpack.c.l.b16 %v2163
        %v2411 = vunpack.c.h.b16 %v2163
        %v2412 = vunpack.c.l.b16 %v2164
        %v2413 = vunpack.c.l.b16 %v2165
        %v2414 = vunpack.c.h.b16 %v2165
        %v2415 = vunpack.c.l.b16 %v2166
        %v2416 = vpack.c.b16 %v2275, %v2272
        %v2417 = vpack.c.b16 %v2276, %v2273
        %v2418 = vpack.c.b16 %v2277, %v2274
        %v2419 = vpack.c.b16 %v2281, %v2278
        %v2420 = vpack.c.b16 %v2282, %v2279
        %v2421 = vpack.c.b16 %v2283, %v2280
        %v2422 = vpack.c.b16 %v2287, %v2284
        %v2423 = vpack.c.b16 %v2288, %v2285
        %v2424 = vpack.c.b16 %v2289, %v2286
        %v2425 = vpack.c.b16 %v2293, %v2290
        %v2426 = vpack.c.b16 %v2294, %v2291
        %v2427 = vpack.c.b16 %v2295, %v2292
        %v2428 = vpack.c.b16 %v2299, %v2296
        %v2429 = vpack.c.b16 %v2300, %v2297
        %v2430 = vpack.c.b16 %v2301, %v2298
        %v2431 = vpack.c.b16 %v2305, %v2302
        %v2432 = vpack.c.b16 %v2306, %v2303
        %v2433 = vpack.c.b16 %v2307, %v2304
        %v2434 = vpack.c.b16 %v2311, %v2308
        %v2435 = vpack.c.b16 %v2312, %v2309
        %v2436 = vpack.c.b16 %v2313, %v2310
        %v2437 = vpack.c.b16 %v2317, %v2314
        %v2438 = vpack.c.b16 %v2318, %v2315
        %v2439 = vpack.c.b16 %v2319, %v2316
        %v2440 = vpack.c.b16 %v2323, %v2320
        %v2441 = vpack.c.b16 %v2324, %v2321
        %v2442 = vpack.c.b16 %v2325, %v2322
        %v2443 = vpack.c.b16 %v2329, %v2326
        %v2444 = vpack.c.b16 %v2330, %v2327
        %v2445 = vpack.c.b16 %v2331, %v2328
        %v2446 = vpack.c.b16 %v2335, %v2332
        %v2447 = vpack.c.b16 %v2336, %v2333
        %v2448 = vpack.c.b16 %v2337, %v2334
        %v2449 = vpack.c.b16 %v2341, %v2338
        %v2450 = vpack.c.b16 %v2342, %v2339
        %v2451 = vpack.c.b16 %v2343, %v2340
        %v2452 = vpack.c.b16 %v2347, %v2344
        %v2453 = vpack.c.b16 %v2348, %v2345
        %v2454 = vpack.c.b16 %v2349, %v2346
        %v2455 = vpack.c.b16 %v2353, %v2350
        %v2456 = vpack.c.b16 %v2354, %v2351
        %v2457 = vpack.c.b16 %v2355, %v2352
        %v2458 = vpack.c.b16 %v2359, %v2356
        %v2459 = vpack.c.b16 %v2360, %v2357
        %v2460 = vpack.c.b16 %v2361, %v2358
        %v2461 = vpack.c.b16 %v2365, %v2362
        %v2462 = vpack.c.b16 %v2366, %v2363
        %v2463 = vpack.c.b16 %v2367, %v2364
        %v2464 = vpack.c.b16 %v2371, %v2368
        %v2465 = vpack.c.b16 %v2372, %v2369
        %v2466 = vpack.c.b16 %v2373, %v2370
        %v2467 = vpack.c.b16 %v2377, %v2374
        %v2468 = vpack.c.b16 %v2378, %v2375
        %v2469 = vpack.c.b16 %v2379, %v2376
        %v2470 = vpack.c.b16 %v2383, %v2380
        %v2471 = vpack.c.b16 %v2384, %v2381
        %v2472 = vpack.c.b16 %v2385, %v2382
        %v2473 = vpack.c.b16 %v2389, %v2386
        %v2474 = vpack.c.b16 %v2390, %v2387
        %v2475 = vpack.c.b16 %v2391, %v2388
        %v2476 = vpack.c.b16 %v2395, %v2392
        %v2477 = vpack.c.b16 %v2396, %v2393
        %v2478 = vpack.c.b16 %v2397, %v2394
        %v2479 = vpack.c.b16 %v2401, %v2398
        %v2480 = vpack.c.b16 %v2402, %v2399
        %v2481 = vpack.c.b16 %v2403, %v2400
        %v2482 = vpack.c.b16 %v2407, %v2404
        %v2483 = vpack.c.b16 %v2408, %v2405
        %v2484 = vpack.c.b16 %v2409, %v2406
        %v2485 = vpack.c.b16 %v2413, %v2410
        %v2486 = vpack.c.b16 %v2414, %v2411
        %v2487 = vpack.c.b16 %v2415, %v2412
        %2560 = vmatpush.bf16.msra.mxu0 %v2437
        %2561 = vmatpush.bf16.msra.mxu0 %v2434
        %2562 = vmatpush.bf16.msra.mxu0 %v2431
        %2563 = vmatpush.bf16.msra.mxu0 %v2428
        %2564 = vmatpush.bf16.msra.mxu0 %v2425
        %2565 = vmatpush.bf16.msra.mxu0 %v2422
        %2566 = vmatpush.bf16.msra.mxu0 %v2419
        %2567 = vmatpush.bf16.msra.mxu0 %v2416
        %2568 = vmatmul.bf16.gmra.mxu0 %v2046
        %v2569 = vpop.f32.mrf.mxu0
        %v2570 = vadd.f32 %v2170, %v2569
        %v2571 = vpop.f32.mrf.mxu0
        %v2572 = vadd.f32 %v2170, %v2571
        %2573 = vmatmul.bf16.gmra.mxu0 %v2049
        %v2574 = vpop.f32.mrf.mxu0
        %v2575 = vadd.f32 %v2170, %v2574
        %v2576 = vpop.f32.mrf.mxu0
        %v2577 = vadd.f32 %v2170, %v2576
        %2578 = vmatmul.bf16.gmra.mxu0 %v2052
        %v2579 = vpop.f32.mrf.mxu0
        %v2580 = vadd.f32 %v2170, %v2579
        %v2581 = vpop.f32.mrf.mxu0
        %v2582 = vadd.f32 %v2170, %v2581
        %2583 = vmatmul.bf16.gmra.mxu0 %v2055
        %v2584 = vpop.f32.mrf.mxu0
        %v2585 = vadd.f32 %v2170, %v2584
        %v2586 = vpop.f32.mrf.mxu0
        %v2587 = vadd.f32 %v2170, %v2586
        %2588 = vmatmul.bf16.gmra.mxu0 %v2058
        %v2589 = vpop.f32.mrf.mxu0
        %v2590 = vadd.f32 %v2170, %v2589
        %v2591 = vpop.f32.mrf.mxu0
        %v2592 = vadd.f32 %v2170, %v2591
        %2593 = vmatmul.bf16.gmra.mxu0 %v2061
        %v2594 = vpop.f32.mrf.mxu0
        %v2595 = vadd.f32 %v2170, %v2594
        %v2596 = vpop.f32.mrf.mxu0
        %v2597 = vadd.f32 %v2170, %v2596
        %2598 = vmatmul.bf16.gmra.mxu0 %v2064
        %v2599 = vpop.f32.mrf.mxu0
        %v2600 = vadd.f32 %v2170, %v2599
        %v2601 = vpop.f32.mrf.mxu0
        %v2602 = vadd.f32 %v2170, %v2601
        %2603 = vmatmul.bf16.gmra.mxu0 %v2067
        %v2604 = vpop.f32.mrf.mxu0
        %v2605 = vadd.f32 %v2170, %v2604
        %v2606 = vpop.f32.mrf.mxu0
        %v2607 = vadd.f32 %v2170, %v2606
        %2608 = vdwg.mxu0
        %2609 = vmatpush.bf16.msra.mxu0 %v2461
        %2610 = vmatpush.bf16.msra.mxu0 %v2458
        %2611 = vmatpush.bf16.msra.mxu0 %v2455
        %2612 = vmatpush.bf16.msra.mxu0 %v2452
        %2613 = vmatpush.bf16.msra.mxu0 %v2449
        %2614 = vmatpush.bf16.msra.mxu0 %v2446
        %2615 = vmatpush.bf16.msra.mxu0 %v2443
        %2616 = vmatpush.bf16.msra.mxu0 %v2440
        %2617 = vmatmul.bf16.gmra.mxu0 %v2047
        %v2618 = vpop.f32.mrf.mxu0
        %v2619 = vadd.f32 %v2570, %v2618
        %v2620 = vpop.f32.mrf.mxu0
        %v2621 = vadd.f32 %v2572, %v2620
        %2622 = vmatmul.bf16.gmra.mxu0 %v2050
        %v2623 = vpop.f32.mrf.mxu0
        %v2624 = vadd.f32 %v2575, %v2623
        %v2625 = vpop.f32.mrf.mxu0
        %v2626 = vadd.f32 %v2577, %v2625
        %2627 = vmatmul.bf16.gmra.mxu0 %v2053
        %v2628 = vpop.f32.mrf.mxu0
        %v2629 = vadd.f32 %v2580, %v2628
        %v2630 = vpop.f32.mrf.mxu0
        %v2631 = vadd.f32 %v2582, %v2630
        %2632 = vmatmul.bf16.gmra.mxu0 %v2056
        %v2633 = vpop.f32.mrf.mxu0
        %v2634 = vadd.f32 %v2585, %v2633
        %v2635 = vpop.f32.mrf.mxu0
        %v2636 = vadd.f32 %v2587, %v2635
        %2637 = vmatmul.bf16.gmra.mxu0 %v2059
        %v2638 = vpop.f32.mrf.mxu0
        %v2639 = vadd.f32 %v2590, %v2638
        %v2640 = vpop.f32.mrf.mxu0
        %v2641 = vadd.f32 %v2592, %v2640
        %2642 = vmatmul.bf16.gmra.mxu0 %v2062
        %v2643 = vpop.f32.mrf.mxu0
        %v2644 = vadd.f32 %v2595, %v2643
        %v2645 = vpop.f32.mrf.mxu0
        %v2646 = vadd.f32 %v2597, %v2645
        %2647 = vmatmul.bf16.gmra.mxu0 %v2065
        %v2648 = vpop.f32.mrf.mxu0
        %v2649 = vadd.f32 %v2600, %v2648
        %v2650 = vpop.f32.mrf.mxu0
        %v2651 = vadd.f32 %v2602, %v2650
        %2652 = vmatmul.bf16.gmra.mxu0 %v2068
        %v2653 = vpop.f32.mrf.mxu0
        %v2654 = vadd.f32 %v2605, %v2653
        %v2655 = vpop.f32.mrf.mxu0
        %v2656 = vadd.f32 %v2607, %v2655
        %2657 = vdwg.mxu0
        %2658 = vmatpush.bf16.msra.mxu0 %v2485
        %2659 = vmatpush.bf16.msra.mxu0 %v2482
        %2660 = vmatpush.bf16.msra.mxu0 %v2479
        %2661 = vmatpush.bf16.msra.mxu0 %v2476
        %2662 = vmatpush.bf16.msra.mxu0 %v2473
        %2663 = vmatpush.bf16.msra.mxu0 %v2470
        %2664 = vmatpush.bf16.msra.mxu0 %v2467
        %2665 = vmatpush.bf16.msra.mxu0 %v2464
        %2666 = vmatmul.bf16.gmra.mxu0 %v2048
        %v2667 = vpop.f32.mrf.mxu0
        %v2668 = vadd.f32 %v2619, %v2667
        %v2669 = vpop.f32.mrf.mxu0
        %v2670 = vadd.f32 %v2621, %v2669
        %2671 = vmatmul.bf16.gmra.mxu0 %v2051
        %v2672 = vpop.f32.mrf.mxu0
        %v2673 = vadd.f32 %v2624, %v2672
        %v2674 = vpop.f32.mrf.mxu0
        %v2675 = vadd.f32 %v2626, %v2674
        %2676 = vmatmul.bf16.gmra.mxu0 %v2054
        %v2677 = vpop.f32.mrf.mxu0
        %v2678 = vadd.f32 %v2629, %v2677
        %v2679 = vpop.f32.mrf.mxu0
        %v2680 = vadd.f32 %v2631, %v2679
        %2681 = vmatmul.bf16.gmra.mxu0 %v2057
        %v2682 = vpop.f32.mrf.mxu0
        %v2683 = vadd.f32 %v2634, %v2682
        %v2684 = vpop.f32.mrf.mxu0
        %v2685 = vadd.f32 %v2636, %v2684
        %2686 = vmatmul.bf16.gmra.mxu0 %v2060
        %v2687 = vpop.f32.mrf.mxu0
        %v2688 = vadd.f32 %v2639, %v2687
        %v2689 = vpop.f32.mrf.mxu0
        %v2690 = vadd.f32 %v2641, %v2689
        %2691 = vmatmul.bf16.gmra.mxu0 %v2063
        %v2692 = vpop.f32.mrf.mxu0
        %v2693 = vadd.f32 %v2644, %v2692
        %v2694 = vpop.f32.mrf.mxu0
        %v2695 = vadd.f32 %v2646, %v2694
        %2696 = vmatmul.bf16.gmra.mxu0 %v2066
        %v2697 = vpop.f32.mrf.mxu0
        %v2698 = vadd.f32 %v2649, %v2697
        %v2699 = vpop.f32.mrf.mxu0
        %v2700 = vadd.f32 %v2651, %v2699
        %2701 = vmatmul.bf16.gmra.mxu0 %v2069
        %v2702 = vpop.f32.mrf.mxu0
        %v2703 = vadd.f32 %v2654, %v2702
        %v2704 = vpop.f32.mrf.mxu0
        %v2705 = vadd.f32 %v2656, %v2704
        %2706 = vdwg.mxu0
        %2707 = vmatpush.bf16.msra.mxu0 %v2438
        %2708 = vmatpush.bf16.msra.mxu0 %v2435
        %2709 = vmatpush.bf16.msra.mxu0 %v2432
        %2710 = vmatpush.bf16.msra.mxu0 %v2429
        %2711 = vmatpush.bf16.msra.mxu0 %v2426
        %2712 = vmatpush.bf16.msra.mxu0 %v2423
        %2713 = vmatpush.bf16.msra.mxu0 %v2420
        %2714 = vmatpush.bf16.msra.mxu0 %v2417
        %2715 = vmatmul.bf16.gmra.mxu0 %v2046
        %v2716 = vpop.f32.mrf.mxu0
        %v2717 = vadd.f32 %v2171, %v2716
        %v2718 = vpop.f32.mrf.mxu0
        %v2719 = vadd.f32 %v2171, %v2718
        %2720 = vmatmul.bf16.gmra.mxu0 %v2049
        %v2721 = vpop.f32.mrf.mxu0
        %v2722 = vadd.f32 %v2171, %v2721
        %v2723 = vpop.f32.mrf.mxu0
        %v2724 = vadd.f32 %v2171, %v2723
        %2725 = vmatmul.bf16.gmra.mxu0 %v2052
        %v2726 = vpop.f32.mrf.mxu0
        %v2727 = vadd.f32 %v2171, %v2726
        %v2728 = vpop.f32.mrf.mxu0
        %v2729 = vadd.f32 %v2171, %v2728
        %2730 = vmatmul.bf16.gmra.mxu0 %v2055
        %v2731 = vpop.f32.mrf.mxu0
        %v2732 = vadd.f32 %v2171, %v2731
        %v2733 = vpop.f32.mrf.mxu0
        %v2734 = vadd.f32 %v2171, %v2733
        %2735 = vmatmul.bf16.gmra.mxu0 %v2058
        %v2736 = vpop.f32.mrf.mxu0
        %v2737 = vadd.f32 %v2171, %v2736
        %v2738 = vpop.f32.mrf.mxu0
        %v2739 = vadd.f32 %v2171, %v2738
        %2740 = vmatmul.bf16.gmra.mxu0 %v2061
        %v2741 = vpop.f32.mrf.mxu0
        %v2742 = vadd.f32 %v2171, %v2741
        %v2743 = vpop.f32.mrf.mxu0
        %v2744 = vadd.f32 %v2171, %v2743
        %2745 = vmatmul.bf16.gmra.mxu0 %v2064
        %v2746 = vpop.f32.mrf.mxu0
        %v2747 = vadd.f32 %v2171, %v2746
        %v2748 = vpop.f32.mrf.mxu0
        %v2749 = vadd.f32 %v2171, %v2748
        %2750 = vmatmul.bf16.gmra.mxu0 %v2067
        %v2751 = vpop.f32.mrf.mxu0
        %v2752 = vadd.f32 %v2171, %v2751
        %v2753 = vpop.f32.mrf.mxu0
        %v2754 = vadd.f32 %v2171, %v2753
        %2755 = vdwg.mxu0
        %2756 = vmatpush.bf16.msra.mxu0 %v2462
        %2757 = vmatpush.bf16.msra.mxu0 %v2459
        %2758 = vmatpush.bf16.msra.mxu0 %v2456
        %2759 = vmatpush.bf16.msra.mxu0 %v2453
        %2760 = vmatpush.bf16.msra.mxu0 %v2450
        %2761 = vmatpush.bf16.msra.mxu0 %v2447
        %2762 = vmatpush.bf16.msra.mxu0 %v2444
        %2763 = vmatpush.bf16.msra.mxu0 %v2441
        %2764 = vmatmul.bf16.gmra.mxu0 %v2047
        %v2765 = vpop.f32.mrf.mxu0
        %v2766 = vadd.f32 %v2717, %v2765
        %v2767 = vpop.f32.mrf.mxu0
        %v2768 = vadd.f32 %v2719, %v2767
        %2769 = vmatmul.bf16.gmra.mxu0 %v2050
        %v2770 = vpop.f32.mrf.mxu0
        %v2771 = vadd.f32 %v2722, %v2770
        %v2772 = vpop.f32.mrf.mxu0
        %v2773 = vadd.f32 %v2724, %v2772
        %2774 = vmatmul.bf16.gmra.mxu0 %v2053
        %v2775 = vpop.f32.mrf.mxu0
        %v2776 = vadd.f32 %v2727, %v2775
        %v2777 = vpop.f32.mrf.mxu0
        %v2778 = vadd.f32 %v2729, %v2777
        %2779 = vmatmul.bf16.gmra.mxu0 %v2056
        %v2780 = vpop.f32.mrf.mxu0
        %v2781 = vadd.f32 %v2732, %v2780
        %v2782 = vpop.f32.mrf.mxu0
        %v2783 = vadd.f32 %v2734, %v2782
        %2784 = vmatmul.bf16.gmra.mxu0 %v2059
        %v2785 = vpop.f32.mrf.mxu0
        %v2786 = vadd.f32 %v2737, %v2785
        %v2787 = vpop.f32.mrf.mxu0
        %v2788 = vadd.f32 %v2739, %v2787
        %2789 = vmatmul.bf16.gmra.mxu0 %v2062
        %v2790 = vpop.f32.mrf.mxu0
        %v2791 = vadd.f32 %v2742, %v2790
        %v2792 = vpop.f32.mrf.mxu0
        %v2793 = vadd.f32 %v2744, %v2792
        %2794 = vmatmul.bf16.gmra.mxu0 %v2065
        %v2795 = vpop.f32.mrf.mxu0
        %v2796 = vadd.f32 %v2747, %v2795
        %v2797 = vpop.f32.mrf.mxu0
        %v2798 = vadd.f32 %v2749, %v2797
        %2799 = vmatmul.bf16.gmra.mxu0 %v2068
        %v2800 = vpop.f32.mrf.mxu0
        %v2801 = vadd.f32 %v2752, %v2800
        %v2802 = vpop.f32.mrf.mxu0
        %v2803 = vadd.f32 %v2754, %v2802
        %2804 = vdwg.mxu0
        %2805 = vmatpush.bf16.msra.mxu0 %v2486
        %2806 = vmatpush.bf16.msra.mxu0 %v2483
        %2807 = vmatpush.bf16.msra.mxu0 %v2480
        %2808 = vmatpush.bf16.msra.mxu0 %v2477
        %2809 = vmatpush.bf16.msra.mxu0 %v2474
        %2810 = vmatpush.bf16.msra.mxu0 %v2471
        %2811 = vmatpush.bf16.msra.mxu0 %v2468
        %2812 = vmatpush.bf16.msra.mxu0 %v2465
        %2813 = vmatmul.bf16.gmra.mxu0 %v2048
        %v2814 = vpop.f32.mrf.mxu0
        %v2815 = vadd.f32 %v2766, %v2814
        %v2816 = vpop.f32.mrf.mxu0
        %v2817 = vadd.f32 %v2768, %v2816
        %2818 = vmatmul.bf16.gmra.mxu0 %v2051
        %v2819 = vpop.f32.mrf.mxu0
        %v2820 = vadd.f32 %v2771, %v2819
        %v2821 = vpop.f32.mrf.mxu0
        %v2822 = vadd.f32 %v2773, %v2821
        %2823 = vmatmul.bf16.gmra.mxu0 %v2054
        %v2824 = vpop.f32.mrf.mxu0
        %v2825 = vadd.f32 %v2776, %v2824
        %v2826 = vpop.f32.mrf.mxu0
        %v2827 = vadd.f32 %v2778, %v2826
        %2828 = vmatmul.bf16.gmra.mxu0 %v2057
        %v2829 = vpop.f32.mrf.mxu0
        %v2830 = vadd.f32 %v2781, %v2829
        %v2831 = vpop.f32.mrf.mxu0
        %v2832 = vadd.f32 %v2783, %v2831
        %2833 = vmatmul.bf16.gmra.mxu0 %v2060
        %v2834 = vpop.f32.mrf.mxu0
        %v2835 = vadd.f32 %v2786, %v2834
        %v2836 = vpop.f32.mrf.mxu0
        %v2837 = vadd.f32 %v2788, %v2836
        %2838 = vmatmul.bf16.gmra.mxu0 %v2063
        %v2839 = vpop.f32.mrf.mxu0
        %v2840 = vadd.f32 %v2791, %v2839
        %v2841 = vpop.f32.mrf.mxu0
        %v2842 = vadd.f32 %v2793, %v2841
        %2843 = vmatmul.bf16.gmra.mxu0 %v2066
        %v2844 = vpop.f32.mrf.mxu0
        %v2845 = vadd.f32 %v2796, %v2844
        %v2846 = vpop.f32.mrf.mxu0
        %v2847 = vadd.f32 %v2798, %v2846
        %2848 = vmatmul.bf16.gmra.mxu0 %v2069
        %v2849 = vpop.f32.mrf.mxu0
        %v2850 = vadd.f32 %v2801, %v2849
        %v2851 = vpop.f32.mrf.mxu0
        %v2852 = vadd.f32 %v2803, %v2851
        %2853 = vdwg.mxu0
        %2854 = vmatpush.bf16.msra.mxu0 %v2439
        %2855 = vmatpush.bf16.msra.mxu0 %v2436
        %2856 = vmatpush.bf16.msra.mxu0 %v2433
        %2857 = vmatpush.bf16.msra.mxu0 %v2430
        %2858 = vmatpush.bf16.msra.mxu0 %v2427
        %2859 = vmatpush.bf16.msra.mxu0 %v2424
        %2860 = vmatpush.bf16.msra.mxu0 %v2421
        %2861 = vmatpush.bf16.msra.mxu0 %v2418
        %2862 = vmatmul.bf16.gmra.mxu0 %v2046
        %v2863 = vpop.f32.mrf.mxu0
        %v2864 = vadd.f32 %v2172, %v2863
        %v2865 = vpop.f32.mrf.mxu0
        %v2866 = vadd.f32 %v2172, %v2865
        %2867 = vmatmul.bf16.gmra.mxu0 %v2049
        %v2868 = vpop.f32.mrf.mxu0
        %v2869 = vadd.f32 %v2172, %v2868
        %v2870 = vpop.f32.mrf.mxu0
        %v2871 = vadd.f32 %v2172, %v2870
        %2872 = vmatmul.bf16.gmra.mxu0 %v2052
        %v2873 = vpop.f32.mrf.mxu0
        %v2874 = vadd.f32 %v2172, %v2873
        %v2875 = vpop.f32.mrf.mxu0
        %v2876 = vadd.f32 %v2172, %v2875
        %2877 = vmatmul.bf16.gmra.mxu0 %v2055
        %v2878 = vpop.f32.mrf.mxu0
        %v2879 = vadd.f32 %v2172, %v2878
        %v2880 = vpop.f32.mrf.mxu0
        %v2881 = vadd.f32 %v2172, %v2880
        %2882 = vmatmul.bf16.gmra.mxu0 %v2058
        %v2883 = vpop.f32.mrf.mxu0
        %v2884 = vadd.f32 %v2172, %v2883
        %v2885 = vpop.f32.mrf.mxu0
        %v2886 = vadd.f32 %v2172, %v2885
        %2887 = vmatmul.bf16.gmra.mxu0 %v2061
        %v2888 = vpop.f32.mrf.mxu0
        %v2889 = vadd.f32 %v2172, %v2888
        %v2890 = vpop.f32.mrf.mxu0
        %v2891 = vadd.f32 %v2172, %v2890
        %2892 = vmatmul.bf16.gmra.mxu0 %v2064
        %v2893 = vpop.f32.mrf.mxu0
        %v2894 = vadd.f32 %v2172, %v2893
        %v2895 = vpop.f32.mrf.mxu0
        %v2896 = vadd.f32 %v2172, %v2895
        %2897 = vmatmul.bf16.gmra.mxu0 %v2067
        %v2898 = vpop.f32.mrf.mxu0
        %v2899 = vadd.f32 %v2172, %v2898
        %v2900 = vpop.f32.mrf.mxu0
        %v2901 = vadd.f32 %v2172, %v2900
        %2902 = vdwg.mxu0
        %2903 = vmatpush.bf16.msra.mxu0 %v2463
        %2904 = vmatpush.bf16.msra.mxu0 %v2460
        %2905 = vmatpush.bf16.msra.mxu0 %v2457
        %2906 = vmatpush.bf16.msra.mxu0 %v2454
        %2907 = vmatpush.bf16.msra.mxu0 %v2451
        %2908 = vmatpush.bf16.msra.mxu0 %v2448
        %2909 = vmatpush.bf16.msra.mxu0 %v2445
        %2910 = vmatpush.bf16.msra.mxu0 %v2442
        %2911 = vmatmul.bf16.gmra.mxu0 %v2047
        %v2912 = vpop.f32.mrf.mxu0
        %v2913 = vadd.f32 %v2864, %v2912
        %v2914 = vpop.f32.mrf.mxu0
        %v2915 = vadd.f32 %v2866, %v2914
        %2916 = vmatmul.bf16.gmra.mxu0 %v2050
        %v2917 = vpop.f32.mrf.mxu0
        %v2918 = vadd.f32 %v2869, %v2917
        %v2919 = vpop.f32.mrf.mxu0
        %v2920 = vadd.f32 %v2871, %v2919
        %2921 = vmatmul.bf16.gmra.mxu0 %v2053
        %v2922 = vpop.f32.mrf.mxu0
        %v2923 = vadd.f32 %v2874, %v2922
        %v2924 = vpop.f32.mrf.mxu0
        %v2925 = vadd.f32 %v2876, %v2924
        %2926 = vmatmul.bf16.gmra.mxu0 %v2056
        %v2927 = vpop.f32.mrf.mxu0
        %v2928 = vadd.f32 %v2879, %v2927
        %v2929 = vpop.f32.mrf.mxu0
        %v2930 = vadd.f32 %v2881, %v2929
        %2931 = vmatmul.bf16.gmra.mxu0 %v2059
        %v2932 = vpop.f32.mrf.mxu0
        %v2933 = vadd.f32 %v2884, %v2932
        %v2934 = vpop.f32.mrf.mxu0
        %v2935 = vadd.f32 %v2886, %v2934
        %2936 = vmatmul.bf16.gmra.mxu0 %v2062
        %v2937 = vpop.f32.mrf.mxu0
        %v2938 = vadd.f32 %v2889, %v2937
        %v2939 = vpop.f32.mrf.mxu0
        %v2940 = vadd.f32 %v2891, %v2939
        %2941 = vmatmul.bf16.gmra.mxu0 %v2065
        %v2942 = vpop.f32.mrf.mxu0
        %v2943 = vadd.f32 %v2894, %v2942
        %v2944 = vpop.f32.mrf.mxu0
        %v2945 = vadd.f32 %v2896, %v2944
        %2946 = vmatmul.bf16.gmra.mxu0 %v2068
        %v2947 = vpop.f32.mrf.mxu0
        %v2948 = vadd.f32 %v2899, %v2947
        %v2949 = vpop.f32.mrf.mxu0
        %v2950 = vadd.f32 %v2901, %v2949
        %2951 = vdwg.mxu0
        %2952 = vmatpush.bf16.msra.mxu0 %v2487
        %2953 = vmatpush.bf16.msra.mxu0 %v2484
        %2954 = vmatpush.bf16.msra.mxu0 %v2481
        %2955 = vmatpush.bf16.msra.mxu0 %v2478
        %2956 = vmatpush.bf16.msra.mxu0 %v2475
        %2957 = vmatpush.bf16.msra.mxu0 %v2472
        %2958 = vmatpush.bf16.msra.mxu0 %v2469
        %2959 = vmatpush.bf16.msra.mxu0 %v2466
        %2960 = vmatmul.bf16.gmra.mxu0 %v2048
        %v2961 = vpop.f32.mrf.mxu0
        %v2962 = vadd.f32 %v2913, %v2961
        %v2963 = vpop.f32.mrf.mxu0
        %v2964 = vadd.f32 %v2915, %v2963
        %2965 = vmatmul.bf16.gmra.mxu0 %v2051
        %v2966 = vpop.f32.mrf.mxu0
        %v2967 = vadd.f32 %v2918, %v2966
        %v2968 = vpop.f32.mrf.mxu0
        %v2969 = vadd.f32 %v2920, %v2968
        %2970 = vmatmul.bf16.gmra.mxu0 %v2054
        %v2971 = vpop.f32.mrf.mxu0
        %v2972 = vadd.f32 %v2923, %v2971
        %v2973 = vpop.f32.mrf.mxu0
        %v2974 = vadd.f32 %v2925, %v2973
        %2975 = vmatmul.bf16.gmra.mxu0 %v2057
        %v2976 = vpop.f32.mrf.mxu0
        %v2977 = vadd.f32 %v2928, %v2976
        %v2978 = vpop.f32.mrf.mxu0
        %v2979 = vadd.f32 %v2930, %v2978
        %2980 = vmatmul.bf16.gmra.mxu0 %v2060
        %v2981 = vpop.f32.mrf.mxu0
        %v2982 = vadd.f32 %v2933, %v2981
        %v2983 = vpop.f32.mrf.mxu0
        %v2984 = vadd.f32 %v2935, %v2983
        %2985 = vmatmul.bf16.gmra.mxu0 %v2063
        %v2986 = vpop.f32.mrf.mxu0
        %v2987 = vadd.f32 %v2938, %v2986
        %v2988 = vpop.f32.mrf.mxu0
        %v2989 = vadd.f32 %v2940, %v2988
        %2990 = vmatmul.bf16.gmra.mxu0 %v2066
        %v2991 = vpop.f32.mrf.mxu0
        %v2992 = vadd.f32 %v2943, %v2991
        %v2993 = vpop.f32.mrf.mxu0
        %v2994 = vadd.f32 %v2945, %v2993
        %2995 = vmatmul.bf16.gmra.mxu0 %v2069
        %v2996 = vpop.f32.mrf.mxu0
        %v2997 = vadd.f32 %v2948, %v2996
        %v2998 = vpop.f32.mrf.mxu0
        %v2999 = vadd.f32 %v2950, %v2998
        %3000 = vdwg.mxu0
        %v3001 = vpack.c.bf16 %v2670, %v2668
        %v3002 = vpack.c.bf16 %v2817, %v2815
        %v3003 = vpack.c.bf16 %v2964, %v2962
        %v3004 = vpack.c.bf16 %v2675, %v2673
        %v3005 = vpack.c.bf16 %v2822, %v2820
        %v3006 = vpack.c.bf16 %v2969, %v2967
        %v3007 = vpack.c.bf16 %v2680, %v2678
        %v3008 = vpack.c.bf16 %v2827, %v2825
        %v3009 = vpack.c.bf16 %v2974, %v2972
        %v3010 = vpack.c.bf16 %v2685, %v2683
        %v3011 = vpack.c.bf16 %v2832, %v2830
        %v3012 = vpack.c.bf16 %v2979, %v2977
        %v3013 = vpack.c.bf16 %v2690, %v2688
        %v3014 = vpack.c.bf16 %v2837, %v2835
        %v3015 = vpack.c.bf16 %v2984, %v2982
        %v3016 = vpack.c.bf16 %v2695, %v2693
        %v3017 = vpack.c.bf16 %v2842, %v2840
        %v3018 = vpack.c.bf16 %v2989, %v2987
        %v3019 = vpack.c.bf16 %v2700, %v2698
        %v3020 = vpack.c.bf16 %v2847, %v2845
        %v3021 = vpack.c.bf16 %v2994, %v2992
        %v3022 = vpack.c.bf16 %v2705, %v2703
        %v3023 = vpack.c.bf16 %v2852, %v2850
        %v3024 = vpack.c.bf16 %v2999, %v2997
        %v3033 = vunpack.c.l.b16 %v1815
        %v3034 = vunpack.c.l.b16 %v1816
        %v3035 = vunpack.c.l.b16 %v1817
        %v3036 = vunpack.c.l.b16 %v1818
        %v3037 = vunpack.c.l.b16 %v1819
        %v3038 = vunpack.c.l.b16 %v1820
        %v3039 = vunpack.c.l.b16 %v1821
        %v3040 = vunpack.c.l.b16 %v1822
        %v3041 = vpack.c.b16 %v3034, %v3033
        %v3042 = vpack.c.b16 %v3036, %v3035
        %v3043 = vpack.c.b16 %v3038, %v3037
        %v3044 = vpack.c.b16 %v3040, %v3039
        %3049 = vmatpush.bf16.msra.mxu0 %v3022
        %3050 = vmatpush.bf16.msra.mxu0 %v3019
        %3051 = vmatpush.bf16.msra.mxu0 %v3016
        %3052 = vmatpush.bf16.msra.mxu0 %v3013
        %3053 = vmatpush.bf16.msra.mxu0 %v3010
        %3054 = vmatpush.bf16.msra.mxu0 %v3007
        %3055 = vmatpush.bf16.msra.mxu0 %v3004
        %3056 = vmatpush.bf16.msra.mxu0 %v3001
        %3057 = vmatmul.bf16.gmra.mxu0 %v3041
        %v3058 = vpop.f32.mrf.mxu0
        %v3059 = vadd.f32 0.0, %v3058
        %v3060 = vpop.f32.mrf.mxu0
        %v3061 = vadd.f32 0.0, %v3060
        %3062 = vmatmul.bf16.gmra.mxu0 %v3042
        %v3063 = vpop.f32.mrf.mxu0
        %v3064 = vadd.f32 0.0, %v3063
        %v3065 = vpop.f32.mrf.mxu0
        %v3066 = vadd.f32 0.0, %v3065
        %3067 = vmatmul.bf16.gmra.mxu0 %v3043
        %v3068 = vpop.f32.mrf.mxu0
        %v3069 = vadd.f32 0.0, %v3068
        %v3070 = vpop.f32.mrf.mxu0
        %v3071 = vadd.f32 0.0, %v3070
        %3072 = vmatmul.bf16.gmra.mxu0 %v3044
        %v3073 = vpop.f32.mrf.mxu0
        %v3074 = vadd.f32 0.0, %v3073
        %v3075 = vpop.f32.mrf.mxu0
        %v3076 = vadd.f32 0.0, %v3075
        %3077 = vdwg.mxu0
        %3078 = vmatpush.bf16.msra.mxu0 %v3023
        %3079 = vmatpush.bf16.msra.mxu0 %v3020
        %3080 = vmatpush.bf16.msra.mxu0 %v3017
        %3081 = vmatpush.bf16.msra.mxu0 %v3014
        %3082 = vmatpush.bf16.msra.mxu0 %v3011
        %3083 = vmatpush.bf16.msra.mxu0 %v3008
        %3084 = vmatpush.bf16.msra.mxu0 %v3005
        %3085 = vmatpush.bf16.msra.mxu0 %v3002
        %3086 = vmatmul.bf16.gmra.mxu0 %v3041
        %v3087 = vpop.f32.mrf.mxu0
        %v3088 = vadd.f32 0.0, %v3087
        %v3089 = vpop.f32.mrf.mxu0
        %v3090 = vadd.f32 0.0, %v3089
        %3091 = vmatmul.bf16.gmra.mxu0 %v3042
        %v3092 = vpop.f32.mrf.mxu0
        %v3093 = vadd.f32 0.0, %v3092
        %v3094 = vpop.f32.mrf.mxu0
        %v3095 = vadd.f32 0.0, %v3094
        %3096 = vmatmul.bf16.gmra.mxu0 %v3043
        %v3097 = vpop.f32.mrf.mxu0
        %v3098 = vadd.f32 0.0, %v3097
        %v3099 = vpop.f32.mrf.mxu0
        %v3100 = vadd.f32 0.0, %v3099
        %3101 = vmatmul.bf16.gmra.mxu0 %v3044
        %v3102 = vpop.f32.mrf.mxu0
        %v3103 = vadd.f32 0.0, %v3102
        %v3104 = vpop.f32.mrf.mxu0
        %v3105 = vadd.f32 0.0, %v3104
        %3106 = vdwg.mxu0
        %3107 = vmatpush.bf16.msra.mxu0 %v3024
        %3108 = vmatpush.bf16.msra.mxu0 %v3021
        %3109 = vmatpush.bf16.msra.mxu0 %v3018
        %3110 = vmatpush.bf16.msra.mxu0 %v3015
        %3111 = vmatpush.bf16.msra.mxu0 %v3012
        %3112 = vmatpush.bf16.msra.mxu0 %v3009
        %3113 = vmatpush.bf16.msra.mxu0 %v3006
        %3114 = vmatpush.bf16.msra.mxu0 %v3003
        %3115 = vmatmul.bf16.gmra.mxu0 %v3041
        %v3116 = vpop.f32.mrf.mxu0
        %v3117 = vadd.f32 0.0, %v3116
        %v3118 = vpop.f32.mrf.mxu0
        %v3119 = vadd.f32 0.0, %v3118
        %3120 = vmatmul.bf16.gmra.mxu0 %v3042
        %v3121 = vpop.f32.mrf.mxu0
        %v3122 = vadd.f32 0.0, %v3121
        %v3123 = vpop.f32.mrf.mxu0
        %v3124 = vadd.f32 0.0, %v3123
        %3125 = vmatmul.bf16.gmra.mxu0 %v3043
        %v3126 = vpop.f32.mrf.mxu0
        %v3127 = vadd.f32 0.0, %v3126
        %v3128 = vpop.f32.mrf.mxu0
        %v3129 = vadd.f32 0.0, %v3128
        %3130 = vmatmul.bf16.gmra.mxu0 %v3044
        %v3131 = vpop.f32.mrf.mxu0
        %v3132 = vadd.f32 0.0, %v3131
        %v3133 = vpop.f32.mrf.mxu0
        %v3134 = vadd.f32 0.0, %v3133
        %3135 = vdwg.mxu0
        %v3136 = vadd.f32 %v1790, %v3059
        %v3137 = vadd.f32 %v1791, %v3088
        %v3138 = vadd.f32 %v1792, %v3117
        %v3139 = vadd.f32 %v1793, %v3061
        %v3140 = vadd.f32 %v1794, %v3090
        %v3141 = vadd.f32 %v1795, %v3119
        %v3142 = vadd.f32 %v1796, %v3064
        %v3143 = vadd.f32 %v1797, %v3093
        %v3144 = vadd.f32 %v1798, %v3122
        %v3145 = vadd.f32 %v1799, %v3066
        %v3146 = vadd.f32 %v1800, %v3095
        %v3147 = vadd.f32 %v1801, %v3124
        %v3148 = vadd.f32 %v1802, %v3069
        %v3149 = vadd.f32 %v1803, %v3098
        %v3150 = vadd.f32 %v1804, %v3127
        %v3151 = vadd.f32 %v1805, %v3071
        %v3152 = vadd.f32 %v1806, %v3100
        %v3153 = vadd.f32 %v1807, %v3129
        %v3154 = vadd.f32 %v1808, %v3074
        %v3155 = vadd.f32 %v1809, %v3103
        %v3156 = vadd.f32 %v1810, %v3132
        %v3157 = vadd.f32 %v1811, %v3076
        %v3158 = vadd.f32 %v1812, %v3105
        %v3159 = vadd.f32 %v1813, %v3134
        %s3160 = scalar_lea.vmem %s293, 64 [#allocation6]
        %v3161 = vld [vmem:[%s3160] sm:$0xf]
        %v3162 = vld [vmem:[%s3160 + $0x4] sm:$0xf]
        %v3163 = vld [vmem:[%s3160 + $0x8] sm:$0xf]
        %v3164 = vld [vmem:[%s3160 + $0xc] sm:$0xf]
        %v3165 = vld [vmem:[%s3160 + $0x10] sm:$0xf]
        %v3166 = vld [vmem:[%s3160 + $0x14] sm:$0xf]
        %v3167 = vld [vmem:[%s3160 + $0x18] sm:$0xf]
        %v3168 = vld [vmem:[%s3160 + $0x1c] sm:$0xf]
        %v3169 = vunpack.c.l.bf16 %v3161
        %v3170 = vunpack.c.l.bf16 %v3162
        %v3171 = vunpack.c.l.bf16 %v3163
        %v3172 = vunpack.c.l.bf16 %v3164
        %v3173 = vunpack.c.l.bf16 %v3165
        %v3174 = vunpack.c.l.bf16 %v3166
        %v3175 = vunpack.c.l.bf16 %v3167
        %v3176 = vunpack.c.l.bf16 %v3168
        %vm3177 = vcmp.ne.f32.partialorder %v3169, 0.0
        %vm3178 = vcmp.ne.f32.partialorder %v3170, 0.0
        %vm3179 = vcmp.ne.f32.partialorder %v3171, 0.0
        %vm3180 = vcmp.ne.f32.partialorder %v3172, 0.0
        %vm3181 = vcmp.ne.f32.partialorder %v3173, 0.0
        %vm3182 = vcmp.ne.f32.partialorder %v3174, 0.0
        %vm3183 = vcmp.ne.f32.partialorder %v3175, 0.0
        %vm3184 = vcmp.ne.f32.partialorder %v3176, 0.0
        %v3185 = vsel %vm3177, 1, 0
        %v3186 = vsel %vm3178, 1, 0
        %v3187 = vsel %vm3179, 1, 0
        %v3188 = vsel %vm3180, 1, 0
        %v3189 = vsel %vm3181, 1, 0
        %v3190 = vsel %vm3182, 1, 0
        %v3191 = vsel %vm3183, 1, 0
        %v3192 = vsel %vm3184, 1, 0
        %v3193 = vcvt.s32.f32 %v3185
        %v3194 = vcvt.s32.f32 %v3186
        %v3195 = vcvt.s32.f32 %v3187
        %v3196 = vcvt.s32.f32 %v3188
        %v3197 = vcvt.s32.f32 %v3189
        %v3198 = vcvt.s32.f32 %v3190
        %v3199 = vcvt.s32.f32 %v3191
        %v3200 = vcvt.s32.f32 %v3192
        %v3201 = vpack.c.bf16 %v3194, %v3193
        %v3202 = vpack.c.bf16 %v3196, %v3195
        %v3203 = vpack.c.bf16 %v3198, %v3197
        %v3204 = vpack.c.bf16 %v3200, %v3199
        %3205 = vxpose.xlu0.c.b16.start [1/8] %v3201, 128
        %3206 = vxpose.xlu0.c.b16.cont [2/8] %v3202, 128
        %3207 = vxpose.xlu0.c.b16.cont [3/8] %v3203, 128
        %3208 = vxpose.xlu0.c.b16.cont [4/8] %v3204, 128
        %3209 = vxpose.xlu0.c.b16.cont [5/8] 0, 128
        %3210 = vxpose.xlu0.c.b16.cont [6/8] 0, 128
        %3211 = vxpose.xlu0.c.b16.cont [7/8] 0, 128
        %3212 = vxpose.xlu0.c.b16.end [8/8] 0, 128
        %v3213 = vpop.trf.xlu0
        %v3214 = vpop.trf.xlu0
        %v3215 = vpop.trf.xlu0
        %v3216 = vpop.trf.xlu0
        %v3217 = vpop.trf.xlu0
        %v3218 = vpop.trf.xlu0
        %v3219 = vpop.trf.xlu0
        %v3220 = vpop.trf.xlu0
        %v3222 = vsel %vm530, %v3213, 0
        %v3225 = vsel %vm530, %v3214, 0
        %v3228 = vsel %vm530, %v3215, 0
        %v3231 = vsel %vm530, %v3216, 0
        %v3234 = vsel %vm530, %v3217, 0
        %v3237 = vsel %vm530, %v3218, 0
        %v3240 = vsel %vm530, %v3219, 0
        %v3243 = vsel %vm530, %v3220, 0
        %3245 = vmatpush.bf16.msra.mxu0 0
        %3246 = vmatpush.bf16.msra.mxu0 0
        %3247 = vmatpush.bf16.msra.mxu0 0
        %3248 = vmatpush.bf16.msra.mxu0 0
        %3249 = vmatpush.bf16.msra.mxu0 %v515
        %3250 = vmatpush.bf16.msra.mxu0 %v512
        %3251 = vmatpush.bf16.msra.mxu0 %v509
        %3252 = vmatpush.bf16.msra.mxu0 %v506
        %3253 = vmatmul.bf16.gmra.mxu0 %v3222
        %v3254 = vpop.f32.mrf.mxu0
        %v3255 = vadd.f32 0.0, %v3254
        %v3256 = vpop.f32.mrf.mxu0
        %v3257 = vadd.f32 0.0, %v3256
        %3258 = vmatmul.bf16.gmra.mxu0 %v3225
        %v3259 = vpop.f32.mrf.mxu0
        %v3260 = vadd.f32 0.0, %v3259
        %v3261 = vpop.f32.mrf.mxu0
        %v3262 = vadd.f32 0.0, %v3261
        %3263 = vmatmul.bf16.gmra.mxu0 %v3228
        %v3264 = vpop.f32.mrf.mxu0
        %v3265 = vadd.f32 0.0, %v3264
        %v3266 = vpop.f32.mrf.mxu0
        %v3267 = vadd.f32 0.0, %v3266
        %3268 = vmatmul.bf16.gmra.mxu0 %v3231
        %v3269 = vpop.f32.mrf.mxu0
        %v3270 = vadd.f32 0.0, %v3269
        %v3271 = vpop.f32.mrf.mxu0
        %v3272 = vadd.f32 0.0, %v3271
        %3273 = vmatmul.bf16.gmra.mxu0 %v3234
        %v3274 = vpop.f32.mrf.mxu0
        %v3275 = vadd.f32 0.0, %v3274
        %v3276 = vpop.f32.mrf.mxu0
        %v3277 = vadd.f32 0.0, %v3276
        %3278 = vmatmul.bf16.gmra.mxu0 %v3237
        %v3279 = vpop.f32.mrf.mxu0
        %v3280 = vadd.f32 0.0, %v3279
        %v3281 = vpop.f32.mrf.mxu0
        %v3282 = vadd.f32 0.0, %v3281
        %3283 = vmatmul.bf16.gmra.mxu0 %v3240
        %v3284 = vpop.f32.mrf.mxu0
        %v3285 = vadd.f32 0.0, %v3284
        %v3286 = vpop.f32.mrf.mxu0
        %v3287 = vadd.f32 0.0, %v3286
        %3288 = vmatmul.bf16.gmra.mxu0 %v3243
        %v3289 = vpop.f32.mrf.mxu0
        %v3290 = vadd.f32 0.0, %v3289
        %v3291 = vpop.f32.mrf.mxu0
        %v3292 = vadd.f32 0.0, %v3291
        %3293 = vdwg.mxu0
        %3294 = vmatpush.bf16.msra.mxu0 0
        %3295 = vmatpush.bf16.msra.mxu0 0
        %3296 = vmatpush.bf16.msra.mxu0 0
        %3297 = vmatpush.bf16.msra.mxu0 0
        %3298 = vmatpush.bf16.msra.mxu0 %v516
        %3299 = vmatpush.bf16.msra.mxu0 %v513
        %3300 = vmatpush.bf16.msra.mxu0 %v510
        %3301 = vmatpush.bf16.msra.mxu0 %v507
        %3302 = vmatmul.bf16.gmra.mxu0 %v3222
        %v3303 = vpop.f32.mrf.mxu0
        %v3304 = vadd.f32 0.0, %v3303
        %v3305 = vpop.f32.mrf.mxu0
        %v3306 = vadd.f32 0.0, %v3305
        %3307 = vmatmul.bf16.gmra.mxu0 %v3225
        %v3308 = vpop.f32.mrf.mxu0
        %v3309 = vadd.f32 0.0, %v3308
        %v3310 = vpop.f32.mrf.mxu0
        %v3311 = vadd.f32 0.0, %v3310
        %3312 = vmatmul.bf16.gmra.mxu0 %v3228
        %v3313 = vpop.f32.mrf.mxu0
        %v3314 = vadd.f32 0.0, %v3313
        %v3315 = vpop.f32.mrf.mxu0
        %v3316 = vadd.f32 0.0, %v3315
        %3317 = vmatmul.bf16.gmra.mxu0 %v3231
        %v3318 = vpop.f32.mrf.mxu0
        %v3319 = vadd.f32 0.0, %v3318
        %v3320 = vpop.f32.mrf.mxu0
        %v3321 = vadd.f32 0.0, %v3320
        %3322 = vmatmul.bf16.gmra.mxu0 %v3234
        %v3323 = vpop.f32.mrf.mxu0
        %v3324 = vadd.f32 0.0, %v3323
        %v3325 = vpop.f32.mrf.mxu0
        %v3326 = vadd.f32 0.0, %v3325
        %3327 = vmatmul.bf16.gmra.mxu0 %v3237
        %v3328 = vpop.f32.mrf.mxu0
        %v3329 = vadd.f32 0.0, %v3328
        %v3330 = vpop.f32.mrf.mxu0
        %v3331 = vadd.f32 0.0, %v3330
        %3332 = vmatmul.bf16.gmra.mxu0 %v3240
        %v3333 = vpop.f32.mrf.mxu0
        %v3334 = vadd.f32 0.0, %v3333
        %v3335 = vpop.f32.mrf.mxu0
        %v3336 = vadd.f32 0.0, %v3335
        %3337 = vmatmul.bf16.gmra.mxu0 %v3243
        %v3338 = vpop.f32.mrf.mxu0
        %v3339 = vadd.f32 0.0, %v3338
        %v3340 = vpop.f32.mrf.mxu0
        %v3341 = vadd.f32 0.0, %v3340
        %3342 = vdwg.mxu0
        %3343 = vmatpush.bf16.msra.mxu0 0
        %3344 = vmatpush.bf16.msra.mxu0 0
        %3345 = vmatpush.bf16.msra.mxu0 0
        %3346 = vmatpush.bf16.msra.mxu0 0
        %3347 = vmatpush.bf16.msra.mxu0 %v517
        %3348 = vmatpush.bf16.msra.mxu0 %v514
        %3349 = vmatpush.bf16.msra.mxu0 %v511
        %3350 = vmatpush.bf16.msra.mxu0 %v508
        %3351 = vmatmul.bf16.gmra.mxu0 %v3222
        %v3352 = vpop.f32.mrf.mxu0
        %v3353 = vadd.f32 0.0, %v3352
        %v3354 = vpop.f32.mrf.mxu0
        %v3355 = vadd.f32 0.0, %v3354
        %3356 = vmatmul.bf16.gmra.mxu0 %v3225
        %v3357 = vpop.f32.mrf.mxu0
        %v3358 = vadd.f32 0.0, %v3357
        %v3359 = vpop.f32.mrf.mxu0
        %v3360 = vadd.f32 0.0, %v3359
        %3361 = vmatmul.bf16.gmra.mxu0 %v3228
        %v3362 = vpop.f32.mrf.mxu0
        %v3363 = vadd.f32 0.0, %v3362
        %v3364 = vpop.f32.mrf.mxu0
        %v3365 = vadd.f32 0.0, %v3364
        %3366 = vmatmul.bf16.gmra.mxu0 %v3231
        %v3367 = vpop.f32.mrf.mxu0
        %v3368 = vadd.f32 0.0, %v3367
        %v3369 = vpop.f32.mrf.mxu0
        %v3370 = vadd.f32 0.0, %v3369
        %3371 = vmatmul.bf16.gmra.mxu0 %v3234
        %v3372 = vpop.f32.mrf.mxu0
        %v3373 = vadd.f32 0.0, %v3372
        %v3374 = vpop.f32.mrf.mxu0
        %v3375 = vadd.f32 0.0, %v3374
        %3376 = vmatmul.bf16.gmra.mxu0 %v3237
        %v3377 = vpop.f32.mrf.mxu0
        %v3378 = vadd.f32 0.0, %v3377
        %v3379 = vpop.f32.mrf.mxu0
        %v3380 = vadd.f32 0.0, %v3379
        %3381 = vmatmul.bf16.gmra.mxu0 %v3240
        %v3382 = vpop.f32.mrf.mxu0
        %v3383 = vadd.f32 0.0, %v3382
        %v3384 = vpop.f32.mrf.mxu0
        %v3385 = vadd.f32 0.0, %v3384
        %3386 = vmatmul.bf16.gmra.mxu0 %v3243
        %v3387 = vpop.f32.mrf.mxu0
        %v3388 = vadd.f32 0.0, %v3387
        %v3389 = vpop.f32.mrf.mxu0
        %v3390 = vadd.f32 0.0, %v3389
        %3391 = vdwg.mxu0
        %v3392 = vpack.c.bf16 %v3257, %v3255
        %v3393 = vpack.c.bf16 %v3306, %v3304
        %v3394 = vpack.c.bf16 %v3355, %v3353
        %v3395 = vpack.c.bf16 %v3262, %v3260
        %v3396 = vpack.c.bf16 %v3311, %v3309
        %v3397 = vpack.c.bf16 %v3360, %v3358
        %v3398 = vpack.c.bf16 %v3267, %v3265
        %v3399 = vpack.c.bf16 %v3316, %v3314
        %v3400 = vpack.c.bf16 %v3365, %v3363
        %v3401 = vpack.c.bf16 %v3272, %v3270
        %v3402 = vpack.c.bf16 %v3321, %v3319
        %v3403 = vpack.c.bf16 %v3370, %v3368
        %v3404 = vpack.c.bf16 %v3277, %v3275
        %v3405 = vpack.c.bf16 %v3326, %v3324
        %v3406 = vpack.c.bf16 %v3375, %v3373
        %v3407 = vpack.c.bf16 %v3282, %v3280
        %v3408 = vpack.c.bf16 %v3331, %v3329
        %v3409 = vpack.c.bf16 %v3380, %v3378
        %v3410 = vpack.c.bf16 %v3287, %v3285
        %v3411 = vpack.c.bf16 %v3336, %v3334
        %v3412 = vpack.c.bf16 %v3385, %v3383
        %v3413 = vpack.c.bf16 %v3292, %v3290
        %v3414 = vpack.c.bf16 %v3341, %v3339
        %v3415 = vpack.c.bf16 %v3390, %v3388
        %s3416 = scalar_lea.vmem [#allocation8], 1152
        %v3417 = vld [vmem:[%s3416] sm:$0xff]
        %v3418 = vld [vmem:[%s3416 + $0x8] sm:$0xf]
        %v3419 = vld [vmem:[%s3416 + $0xc] sm:$0xff]
        %v3420 = vld [vmem:[%s3416 + $0x14] sm:$0xf]
        %v3421 = vld [vmem:[%s3416 + $0x18] sm:$0xff]
        %v3422 = vld [vmem:[%s3416 + $0x20] sm:$0xf]
        %v3423 = vld [vmem:[%s3416 + $0x24] sm:$0xff]
        %v3424 = vld [vmem:[%s3416 + $0x2c] sm:$0xf]
        %v3425 = vld [vmem:[%s3416 + $0x30] sm:$0xff]
        %v3426 = vld [vmem:[%s3416 + $0x38] sm:$0xf]
        %v3427 = vld [vmem:[%s3416 + $0x3c] sm:$0xff]
        %v3428 = vld [vmem:[%s3416 + $0x44] sm:$0xf]
        %v3429 = vld [vmem:[%s3416 + $0x48] sm:$0xff]
        %v3430 = vld [vmem:[%s3416 + $0x50] sm:$0xf]
        %v3431 = vld [vmem:[%s3416 + $0x54] sm:$0xff]
        %v3432 = vld [vmem:[%s3416 + $0x5c] sm:$0xf]
        %v3433 = vld [vmem:[%s3416 + $0x60] sm:$0xff]
        %v3434 = vld [vmem:[%s3416 + $0x68] sm:$0xf]
        %v3435 = vld [vmem:[%s3416 + $0x6c] sm:$0xff]
        %v3436 = vld [vmem:[%s3416 + $0x74] sm:$0xf]
        %v3437 = vld [vmem:[%s3416 + $0x78] sm:$0xff]
        %v3438 = vld [vmem:[%s3416 + $0x80] sm:$0xf]
        %v3439 = vld [vmem:[%s3416 + $0x84] sm:$0xff]
        %v3440 = vld [vmem:[%s3416 + $0x8c] sm:$0xf]
        %v3441 = vld [vmem:[%s3416 + $0x90] sm:$0xff]
        %v3442 = vld [vmem:[%s3416 + $0x98] sm:$0xf]
        %v3443 = vld [vmem:[%s3416 + $0x9c] sm:$0xff]
        %v3444 = vld [vmem:[%s3416 + $0xa4] sm:$0xf]
        %v3445 = vld [vmem:[%s3416 + $0xa8] sm:$0xff]
        %v3446 = vld [vmem:[%s3416 + $0xb0] sm:$0xf]
        %v3447 = vld [vmem:[%s3416 + $0xb4] sm:$0xff]
        %v3448 = vld [vmem:[%s3416 + $0xbc] sm:$0xf]
        %v3449 = vld [vmem:[%s3416 + $0xc0] sm:$0xff]
        %v3450 = vld [vmem:[%s3416 + $0xc8] sm:$0xf]
        %v3451 = vld [vmem:[%s3416 + $0xcc] sm:$0xff]
        %v3452 = vld [vmem:[%s3416 + $0xd4] sm:$0xf]
        %v3453 = vld [vmem:[%s3416 + $0xd8] sm:$0xff]
        %v3454 = vld [vmem:[%s3416 + $0xe0] sm:$0xf]
        %v3455 = vld [vmem:[%s3416 + $0xe4] sm:$0xff]
        %v3456 = vld [vmem:[%s3416 + $0xec] sm:$0xf]
        %v3457 = vld [vmem:[%s3416 + $0xf0] sm:$0xff]
        %v3458 = vld [vmem:[%s3416 + $0xf8] sm:$0xf]
        %v3459 = vld [vmem:[%s3416 + $0xfc] sm:$0xff]
        %v3460 = vld [vmem:[%s3416 + $0x104] sm:$0xf]
        %v3461 = vld [vmem:[%s3416 + $0x108] sm:$0xff]
        %v3462 = vld [vmem:[%s3416 + $0x110] sm:$0xf]
        %v3463 = vld [vmem:[%s3416 + $0x114] sm:$0xff]
        %v3464 = vld [vmem:[%s3416 + $0x11c] sm:$0xf]
        %v3465 = vld [vmem:[%s3416 + $0x120] sm:$0xff]
        %v3466 = vld [vmem:[%s3416 + $0x128] sm:$0xf]
        %v3467 = vld [vmem:[%s3416 + $0x12c] sm:$0xff]
        %v3468 = vld [vmem:[%s3416 + $0x134] sm:$0xf]
        %v3469 = vld [vmem:[%s3416 + $0x138] sm:$0xff]
        %v3470 = vld [vmem:[%s3416 + $0x140] sm:$0xf]
        %v3471 = vld [vmem:[%s3416 + $0x144] sm:$0xff]
        %v3472 = vld [vmem:[%s3416 + $0x14c] sm:$0xf]
        %v3473 = vld [vmem:[%s3416 + $0x150] sm:$0xff]
        %v3474 = vld [vmem:[%s3416 + $0x158] sm:$0xf]
        %v3475 = vld [vmem:[%s3416 + $0x15c] sm:$0xff]
        %v3476 = vld [vmem:[%s3416 + $0x164] sm:$0xf]
        %v3477 = vld [vmem:[%s3416 + $0x168] sm:$0xff]
        %v3478 = vld [vmem:[%s3416 + $0x170] sm:$0xf]
        %v3479 = vld [vmem:[%s3416 + $0x174] sm:$0xff]
        %v3480 = vld [vmem:[%s3416 + $0x17c] sm:$0xf]
        %v3481 = vld [vmem:[%s3416 + $0x180] sm:$0xff]
        %v3482 = vld [vmem:[%s3416 + $0x188] sm:$0xf]
        %v3483 = vld [vmem:[%s3416 + $0x18c] sm:$0xff]
        %v3484 = vld [vmem:[%s3416 + $0x194] sm:$0xf]
        %v3485 = vld [vmem:[%s3416 + $0x198] sm:$0xff]
        %v3486 = vld [vmem:[%s3416 + $0x1a0] sm:$0xf]
        %v3487 = vld [vmem:[%s3416 + $0x1a4] sm:$0xff]
        %v3488 = vld [vmem:[%s3416 + $0x1ac] sm:$0xf]
        %v3489 = vld [vmem:[%s3416 + $0x1b0] sm:$0xff]
        %v3490 = vld [vmem:[%s3416 + $0x1b8] sm:$0xf]
        %v3491 = vld [vmem:[%s3416 + $0x1bc] sm:$0xff]
        %v3492 = vld [vmem:[%s3416 + $0x1c4] sm:$0xf]
        %v3493 = vld [vmem:[%s3416 + $0x1c8] sm:$0xff]
        %v3494 = vld [vmem:[%s3416 + $0x1d0] sm:$0xf]
        %v3495 = vld [vmem:[%s3416 + $0x1d4] sm:$0xff]
        %v3496 = vld [vmem:[%s3416 + $0x1dc] sm:$0xf]
        %v3497 = vld [vmem:[%s3416 + $0x1e0] sm:$0xff]
        %v3498 = vld [vmem:[%s3416 + $0x1e8] sm:$0xf]
        %v3499 = vld [vmem:[%s3416 + $0x1ec] sm:$0xff]
        %v3500 = vld [vmem:[%s3416 + $0x1f4] sm:$0xf]
        %v3501 = vld [vmem:[%s3416 + $0x1f8] sm:$0xff]
        %v3502 = vld [vmem:[%s3416 + $0x200] sm:$0xf]
        %v3503 = vld [vmem:[%s3416 + $0x204] sm:$0xff]
        %v3504 = vld [vmem:[%s3416 + $0x20c] sm:$0xf]
        %v3505 = vld [vmem:[%s3416 + $0x210] sm:$0xff]
        %v3506 = vld [vmem:[%s3416 + $0x218] sm:$0xf]
        %v3507 = vld [vmem:[%s3416 + $0x21c] sm:$0xff]
        %v3508 = vld [vmem:[%s3416 + $0x224] sm:$0xf]
        %v3509 = vld [vmem:[%s3416 + $0x228] sm:$0xff]
        %v3510 = vld [vmem:[%s3416 + $0x230] sm:$0xf]
        %v3511 = vld [vmem:[%s3416 + $0x234] sm:$0xff]
        %v3512 = vld [vmem:[%s3416 + $0x23c] sm:$0xf]
        %s3513 = scalar_lea.vmem [#allocation9], 6
        %v3514 = vld [vmem:[%s3513] sm:$0x7]
        %v3516 = vperm.slane %v3514, 0
        %v3517 = vperm.slane %v3514, 1
        %v3518 = vperm.slane %v3514, 2
        %v3618 = vunpack.c.l.b16 %v3417
        %v3619 = vunpack.c.h.b16 %v3417
        %v3620 = vunpack.c.l.b16 %v3418
        %v3621 = vunpack.c.l.b16 %v3419
        %v3622 = vunpack.c.h.b16 %v3419
        %v3623 = vunpack.c.l.b16 %v3420
        %v3624 = vunpack.c.l.b16 %v3421
        %v3625 = vunpack.c.h.b16 %v3421
        %v3626 = vunpack.c.l.b16 %v3422
        %v3627 = vunpack.c.l.b16 %v3423
        %v3628 = vunpack.c.h.b16 %v3423
        %v3629 = vunpack.c.l.b16 %v3424
        %v3630 = vunpack.c.l.b16 %v3425
        %v3631 = vunpack.c.h.b16 %v3425
        %v3632 = vunpack.c.l.b16 %v3426
        %v3633 = vunpack.c.l.b16 %v3427
        %v3634 = vunpack.c.h.b16 %v3427
        %v3635 = vunpack.c.l.b16 %v3428
        %v3636 = vunpack.c.l.b16 %v3429
        %v3637 = vunpack.c.h.b16 %v3429
        %v3638 = vunpack.c.l.b16 %v3430
        %v3639 = vunpack.c.l.b16 %v3431
        %v3640 = vunpack.c.h.b16 %v3431
        %v3641 = vunpack.c.l.b16 %v3432
        %v3642 = vunpack.c.l.b16 %v3433
        %v3643 = vunpack.c.h.b16 %v3433
        %v3644 = vunpack.c.l.b16 %v3434
        %v3645 = vunpack.c.l.b16 %v3435
        %v3646 = vunpack.c.h.b16 %v3435
        %v3647 = vunpack.c.l.b16 %v3436
        %v3648 = vunpack.c.l.b16 %v3437
        %v3649 = vunpack.c.h.b16 %v3437
        %v3650 = vunpack.c.l.b16 %v3438
        %v3651 = vunpack.c.l.b16 %v3439
        %v3652 = vunpack.c.h.b16 %v3439
        %v3653 = vunpack.c.l.b16 %v3440
        %v3654 = vunpack.c.l.b16 %v3441
        %v3655 = vunpack.c.h.b16 %v3441
        %v3656 = vunpack.c.l.b16 %v3442
        %v3657 = vunpack.c.l.b16 %v3443
        %v3658 = vunpack.c.h.b16 %v3443
        %v3659 = vunpack.c.l.b16 %v3444
        %v3660 = vunpack.c.l.b16 %v3445
        %v3661 = vunpack.c.h.b16 %v3445
        %v3662 = vunpack.c.l.b16 %v3446
        %v3663 = vunpack.c.l.b16 %v3447
        %v3664 = vunpack.c.h.b16 %v3447
        %v3665 = vunpack.c.l.b16 %v3448
        %v3666 = vunpack.c.l.b16 %v3449
        %v3667 = vunpack.c.h.b16 %v3449
        %v3668 = vunpack.c.l.b16 %v3450
        %v3669 = vunpack.c.l.b16 %v3451
        %v3670 = vunpack.c.h.b16 %v3451
        %v3671 = vunpack.c.l.b16 %v3452
        %v3672 = vunpack.c.l.b16 %v3453
        %v3673 = vunpack.c.h.b16 %v3453
        %v3674 = vunpack.c.l.b16 %v3454
        %v3675 = vunpack.c.l.b16 %v3455
        %v3676 = vunpack.c.h.b16 %v3455
        %v3677 = vunpack.c.l.b16 %v3456
        %v3678 = vunpack.c.l.b16 %v3457
        %v3679 = vunpack.c.h.b16 %v3457
        %v3680 = vunpack.c.l.b16 %v3458
        %v3681 = vunpack.c.l.b16 %v3459
        %v3682 = vunpack.c.h.b16 %v3459
        %v3683 = vunpack.c.l.b16 %v3460
        %v3684 = vunpack.c.l.b16 %v3461
        %v3685 = vunpack.c.h.b16 %v3461
        %v3686 = vunpack.c.l.b16 %v3462
        %v3687 = vunpack.c.l.b16 %v3463
        %v3688 = vunpack.c.h.b16 %v3463
        %v3689 = vunpack.c.l.b16 %v3464
        %v3690 = vunpack.c.l.b16 %v3465
        %v3691 = vunpack.c.h.b16 %v3465
        %v3692 = vunpack.c.l.b16 %v3466
        %v3693 = vunpack.c.l.b16 %v3467
        %v3694 = vunpack.c.h.b16 %v3467
        %v3695 = vunpack.c.l.b16 %v3468
        %v3696 = vunpack.c.l.b16 %v3469
        %v3697 = vunpack.c.h.b16 %v3469
        %v3698 = vunpack.c.l.b16 %v3470
        %v3699 = vunpack.c.l.b16 %v3471
        %v3700 = vunpack.c.h.b16 %v3471
        %v3701 = vunpack.c.l.b16 %v3472
        %v3702 = vunpack.c.l.b16 %v3473
        %v3703 = vunpack.c.h.b16 %v3473
        %v3704 = vunpack.c.l.b16 %v3474
        %v3705 = vunpack.c.l.b16 %v3475
        %v3706 = vunpack.c.h.b16 %v3475
        %v3707 = vunpack.c.l.b16 %v3476
        %v3708 = vunpack.c.l.b16 %v3477
        %v3709 = vunpack.c.h.b16 %v3477
        %v3710 = vunpack.c.l.b16 %v3478
        %v3711 = vunpack.c.l.b16 %v3479
        %v3712 = vunpack.c.h.b16 %v3479
        %v3713 = vunpack.c.l.b16 %v3480
        %v3714 = vunpack.c.l.b16 %v3481
        %v3715 = vunpack.c.h.b16 %v3481
        %v3716 = vunpack.c.l.b16 %v3482
        %v3717 = vunpack.c.l.b16 %v3483
        %v3718 = vunpack.c.h.b16 %v3483
        %v3719 = vunpack.c.l.b16 %v3484
        %v3720 = vunpack.c.l.b16 %v3485
        %v3721 = vunpack.c.h.b16 %v3485
        %v3722 = vunpack.c.l.b16 %v3486
        %v3723 = vunpack.c.l.b16 %v3487
        %v3724 = vunpack.c.h.b16 %v3487
        %v3725 = vunpack.c.l.b16 %v3488
        %v3726 = vunpack.c.l.b16 %v3489
        %v3727 = vunpack.c.h.b16 %v3489
        %v3728 = vunpack.c.l.b16 %v3490
        %v3729 = vunpack.c.l.b16 %v3491
        %v3730 = vunpack.c.h.b16 %v3491
        %v3731 = vunpack.c.l.b16 %v3492
        %v3732 = vunpack.c.l.b16 %v3493
        %v3733 = vunpack.c.h.b16 %v3493
        %v3734 = vunpack.c.l.b16 %v3494
        %v3735 = vunpack.c.l.b16 %v3495
        %v3736 = vunpack.c.h.b16 %v3495
        %v3737 = vunpack.c.l.b16 %v3496
        %v3738 = vunpack.c.l.b16 %v3497
        %v3739 = vunpack.c.h.b16 %v3497
        %v3740 = vunpack.c.l.b16 %v3498
        %v3741 = vunpack.c.l.b16 %v3499
        %v3742 = vunpack.c.h.b16 %v3499
        %v3743 = vunpack.c.l.b16 %v3500
        %v3744 = vunpack.c.l.b16 %v3501
        %v3745 = vunpack.c.h.b16 %v3501
        %v3746 = vunpack.c.l.b16 %v3502
        %v3747 = vunpack.c.l.b16 %v3503
        %v3748 = vunpack.c.h.b16 %v3503
        %v3749 = vunpack.c.l.b16 %v3504
        %v3750 = vunpack.c.l.b16 %v3505
        %v3751 = vunpack.c.h.b16 %v3505
        %v3752 = vunpack.c.l.b16 %v3506
        %v3753 = vunpack.c.l.b16 %v3507
        %v3754 = vunpack.c.h.b16 %v3507
        %v3755 = vunpack.c.l.b16 %v3508
        %v3756 = vunpack.c.l.b16 %v3509
        %v3757 = vunpack.c.h.b16 %v3509
        %v3758 = vunpack.c.l.b16 %v3510
        %v3759 = vunpack.c.l.b16 %v3511
        %v3760 = vunpack.c.h.b16 %v3511
        %v3761 = vunpack.c.l.b16 %v3512
        %v3762 = vpack.c.b16 %v3621, %v3618
        %v3763 = vpack.c.b16 %v3622, %v3619
        %v3764 = vpack.c.b16 %v3623, %v3620
        %v3765 = vpack.c.b16 %v3627, %v3624
        %v3766 = vpack.c.b16 %v3628, %v3625
        %v3767 = vpack.c.b16 %v3629, %v3626
        %v3768 = vpack.c.b16 %v3633, %v3630
        %v3769 = vpack.c.b16 %v3634, %v3631
        %v3770 = vpack.c.b16 %v3635, %v3632
        %v3771 = vpack.c.b16 %v3639, %v3636
        %v3772 = vpack.c.b16 %v3640, %v3637
        %v3773 = vpack.c.b16 %v3641, %v3638
        %v3774 = vpack.c.b16 %v3645, %v3642
        %v3775 = vpack.c.b16 %v3646, %v3643
        %v3776 = vpack.c.b16 %v3647, %v3644
        %v3777 = vpack.c.b16 %v3651, %v3648
        %v3778 = vpack.c.b16 %v3652, %v3649
        %v3779 = vpack.c.b16 %v3653, %v3650
        %v3780 = vpack.c.b16 %v3657, %v3654
        %v3781 = vpack.c.b16 %v3658, %v3655
        %v3782 = vpack.c.b16 %v3659, %v3656
        %v3783 = vpack.c.b16 %v3663, %v3660
        %v3784 = vpack.c.b16 %v3664, %v3661
        %v3785 = vpack.c.b16 %v3665, %v3662
        %v3786 = vpack.c.b16 %v3669, %v3666
        %v3787 = vpack.c.b16 %v3670, %v3667
        %v3788 = vpack.c.b16 %v3671, %v3668
        %v3789 = vpack.c.b16 %v3675, %v3672
        %v3790 = vpack.c.b16 %v3676, %v3673
        %v3791 = vpack.c.b16 %v3677, %v3674
        %v3792 = vpack.c.b16 %v3681, %v3678
        %v3793 = vpack.c.b16 %v3682, %v3679
        %v3794 = vpack.c.b16 %v3683, %v3680
        %v3795 = vpack.c.b16 %v3687, %v3684
        %v3796 = vpack.c.b16 %v3688, %v3685
        %v3797 = vpack.c.b16 %v3689, %v3686
        %v3798 = vpack.c.b16 %v3693, %v3690
        %v3799 = vpack.c.b16 %v3694, %v3691
        %v3800 = vpack.c.b16 %v3695, %v3692
        %v3801 = vpack.c.b16 %v3699, %v3696
        %v3802 = vpack.c.b16 %v3700, %v3697
        %v3803 = vpack.c.b16 %v3701, %v3698
        %v3804 = vpack.c.b16 %v3705, %v3702
        %v3805 = vpack.c.b16 %v3706, %v3703
        %v3806 = vpack.c.b16 %v3707, %v3704
        %v3807 = vpack.c.b16 %v3711, %v3708
        %v3808 = vpack.c.b16 %v3712, %v3709
        %v3809 = vpack.c.b16 %v3713, %v3710
        %v3810 = vpack.c.b16 %v3717, %v3714
        %v3811 = vpack.c.b16 %v3718, %v3715
        %v3812 = vpack.c.b16 %v3719, %v3716
        %v3813 = vpack.c.b16 %v3723, %v3720
        %v3814 = vpack.c.b16 %v3724, %v3721
        %v3815 = vpack.c.b16 %v3725, %v3722
        %v3816 = vpack.c.b16 %v3729, %v3726
        %v3817 = vpack.c.b16 %v3730, %v3727
        %v3818 = vpack.c.b16 %v3731, %v3728
        %v3819 = vpack.c.b16 %v3735, %v3732
        %v3820 = vpack.c.b16 %v3736, %v3733
        %v3821 = vpack.c.b16 %v3737, %v3734
        %v3822 = vpack.c.b16 %v3741, %v3738
        %v3823 = vpack.c.b16 %v3742, %v3739
        %v3824 = vpack.c.b16 %v3743, %v3740
        %v3825 = vpack.c.b16 %v3747, %v3744
        %v3826 = vpack.c.b16 %v3748, %v3745
        %v3827 = vpack.c.b16 %v3749, %v3746
        %v3828 = vpack.c.b16 %v3753, %v3750
        %v3829 = vpack.c.b16 %v3754, %v3751
        %v3830 = vpack.c.b16 %v3755, %v3752
        %v3831 = vpack.c.b16 %v3759, %v3756
        %v3832 = vpack.c.b16 %v3760, %v3757
        %v3833 = vpack.c.b16 %v3761, %v3758
        %3906 = vmatpush.bf16.msra.mxu0 %v3783
        %3907 = vmatpush.bf16.msra.mxu0 %v3780
        %3908 = vmatpush.bf16.msra.mxu0 %v3777
        %3909 = vmatpush.bf16.msra.mxu0 %v3774
        %3910 = vmatpush.bf16.msra.mxu0 %v3771
        %3911 = vmatpush.bf16.msra.mxu0 %v3768
        %3912 = vmatpush.bf16.msra.mxu0 %v3765
        %3913 = vmatpush.bf16.msra.mxu0 %v3762
        %3914 = vmatmul.bf16.gmra.mxu0 %v3392
        %v3915 = vpop.f32.mrf.mxu0
        %v3916 = vadd.f32 %v3516, %v3915
        %v3917 = vpop.f32.mrf.mxu0
        %v3918 = vadd.f32 %v3516, %v3917
        %3919 = vmatmul.bf16.gmra.mxu0 %v3395
        %v3920 = vpop.f32.mrf.mxu0
        %v3921 = vadd.f32 %v3516, %v3920
        %v3922 = vpop.f32.mrf.mxu0
        %v3923 = vadd.f32 %v3516, %v3922
        %3924 = vmatmul.bf16.gmra.mxu0 %v3398
        %v3925 = vpop.f32.mrf.mxu0
        %v3926 = vadd.f32 %v3516, %v3925
        %v3927 = vpop.f32.mrf.mxu0
        %v3928 = vadd.f32 %v3516, %v3927
        %3929 = vmatmul.bf16.gmra.mxu0 %v3401
        %v3930 = vpop.f32.mrf.mxu0
        %v3931 = vadd.f32 %v3516, %v3930
        %v3932 = vpop.f32.mrf.mxu0
        %v3933 = vadd.f32 %v3516, %v3932
        %3934 = vmatmul.bf16.gmra.mxu0 %v3404
        %v3935 = vpop.f32.mrf.mxu0
        %v3936 = vadd.f32 %v3516, %v3935
        %v3937 = vpop.f32.mrf.mxu0
        %v3938 = vadd.f32 %v3516, %v3937
        %3939 = vmatmul.bf16.gmra.mxu0 %v3407
        %v3940 = vpop.f32.mrf.mxu0
        %v3941 = vadd.f32 %v3516, %v3940
        %v3942 = vpop.f32.mrf.mxu0
        %v3943 = vadd.f32 %v3516, %v3942
        %3944 = vmatmul.bf16.gmra.mxu0 %v3410
        %v3945 = vpop.f32.mrf.mxu0
        %v3946 = vadd.f32 %v3516, %v3945
        %v3947 = vpop.f32.mrf.mxu0
        %v3948 = vadd.f32 %v3516, %v3947
        %3949 = vmatmul.bf16.gmra.mxu0 %v3413
        %v3950 = vpop.f32.mrf.mxu0
        %v3951 = vadd.f32 %v3516, %v3950
        %v3952 = vpop.f32.mrf.mxu0
        %v3953 = vadd.f32 %v3516, %v3952
        %3954 = vdwg.mxu0
        %3955 = vmatpush.bf16.msra.mxu0 %v3807
        %3956 = vmatpush.bf16.msra.mxu0 %v3804
        %3957 = vmatpush.bf16.msra.mxu0 %v3801
        %3958 = vmatpush.bf16.msra.mxu0 %v3798
        %3959 = vmatpush.bf16.msra.mxu0 %v3795
        %3960 = vmatpush.bf16.msra.mxu0 %v3792
        %3961 = vmatpush.bf16.msra.mxu0 %v3789
        %3962 = vmatpush.bf16.msra.mxu0 %v3786
        %3963 = vmatmul.bf16.gmra.mxu0 %v3393
        %v3964 = vpop.f32.mrf.mxu0
        %v3965 = vadd.f32 %v3916, %v3964
        %v3966 = vpop.f32.mrf.mxu0
        %v3967 = vadd.f32 %v3918, %v3966
        %3968 = vmatmul.bf16.gmra.mxu0 %v3396
        %v3969 = vpop.f32.mrf.mxu0
        %v3970 = vadd.f32 %v3921, %v3969
        %v3971 = vpop.f32.mrf.mxu0
        %v3972 = vadd.f32 %v3923, %v3971
        %3973 = vmatmul.bf16.gmra.mxu0 %v3399
        %v3974 = vpop.f32.mrf.mxu0
        %v3975 = vadd.f32 %v3926, %v3974
        %v3976 = vpop.f32.mrf.mxu0
        %v3977 = vadd.f32 %v3928, %v3976
        %3978 = vmatmul.bf16.gmra.mxu0 %v3402
        %v3979 = vpop.f32.mrf.mxu0
        %v3980 = vadd.f32 %v3931, %v3979
        %v3981 = vpop.f32.mrf.mxu0
        %v3982 = vadd.f32 %v3933, %v3981
        %3983 = vmatmul.bf16.gmra.mxu0 %v3405
        %v3984 = vpop.f32.mrf.mxu0
        %v3985 = vadd.f32 %v3936, %v3984
        %v3986 = vpop.f32.mrf.mxu0
        %v3987 = vadd.f32 %v3938, %v3986
        %3988 = vmatmul.bf16.gmra.mxu0 %v3408
        %v3989 = vpop.f32.mrf.mxu0
        %v3990 = vadd.f32 %v3941, %v3989
        %v3991 = vpop.f32.mrf.mxu0
        %v3992 = vadd.f32 %v3943, %v3991
        %3993 = vmatmul.bf16.gmra.mxu0 %v3411
        %v3994 = vpop.f32.mrf.mxu0
        %v3995 = vadd.f32 %v3946, %v3994
        %v3996 = vpop.f32.mrf.mxu0
        %v3997 = vadd.f32 %v3948, %v3996
        %3998 = vmatmul.bf16.gmra.mxu0 %v3414
        %v3999 = vpop.f32.mrf.mxu0
        %v4000 = vadd.f32 %v3951, %v3999
        %v4001 = vpop.f32.mrf.mxu0
        %v4002 = vadd.f32 %v3953, %v4001
        %4003 = vdwg.mxu0
        %4004 = vmatpush.bf16.msra.mxu0 %v3831
        %4005 = vmatpush.bf16.msra.mxu0 %v3828
        %4006 = vmatpush.bf16.msra.mxu0 %v3825
        %4007 = vmatpush.bf16.msra.mxu0 %v3822
        %4008 = vmatpush.bf16.msra.mxu0 %v3819
        %4009 = vmatpush.bf16.msra.mxu0 %v3816
        %4010 = vmatpush.bf16.msra.mxu0 %v3813
        %4011 = vmatpush.bf16.msra.mxu0 %v3810
        %4012 = vmatmul.bf16.gmra.mxu0 %v3394
        %v4013 = vpop.f32.mrf.mxu0
        %v4014 = vadd.f32 %v3965, %v4013
        %v4015 = vpop.f32.mrf.mxu0
        %v4016 = vadd.f32 %v3967, %v4015
        %4017 = vmatmul.bf16.gmra.mxu0 %v3397
        %v4018 = vpop.f32.mrf.mxu0
        %v4019 = vadd.f32 %v3970, %v4018
        %v4020 = vpop.f32.mrf.mxu0
        %v4021 = vadd.f32 %v3972, %v4020
        %4022 = vmatmul.bf16.gmra.mxu0 %v3400
        %v4023 = vpop.f32.mrf.mxu0
        %v4024 = vadd.f32 %v3975, %v4023
        %v4025 = vpop.f32.mrf.mxu0
        %v4026 = vadd.f32 %v3977, %v4025
        %4027 = vmatmul.bf16.gmra.mxu0 %v3403
        %v4028 = vpop.f32.mrf.mxu0
        %v4029 = vadd.f32 %v3980, %v4028
        %v4030 = vpop.f32.mrf.mxu0
        %v4031 = vadd.f32 %v3982, %v4030
        %4032 = vmatmul.bf16.gmra.mxu0 %v3406
        %v4033 = vpop.f32.mrf.mxu0
        %v4034 = vadd.f32 %v3985, %v4033
        %v4035 = vpop.f32.mrf.mxu0
        %v4036 = vadd.f32 %v3987, %v4035
        %4037 = vmatmul.bf16.gmra.mxu0 %v3409
        %v4038 = vpop.f32.mrf.mxu0
        %v4039 = vadd.f32 %v3990, %v4038
        %v4040 = vpop.f32.mrf.mxu0
        %v4041 = vadd.f32 %v3992, %v4040
        %4042 = vmatmul.bf16.gmra.mxu0 %v3412
        %v4043 = vpop.f32.mrf.mxu0
        %v4044 = vadd.f32 %v3995, %v4043
        %v4045 = vpop.f32.mrf.mxu0
        %v4046 = vadd.f32 %v3997, %v4045
        %4047 = vmatmul.bf16.gmra.mxu0 %v3415
        %v4048 = vpop.f32.mrf.mxu0
        %v4049 = vadd.f32 %v4000, %v4048
        %v4050 = vpop.f32.mrf.mxu0
        %v4051 = vadd.f32 %v4002, %v4050
        %4052 = vdwg.mxu0
        %4053 = vmatpush.bf16.msra.mxu0 %v3784
        %4054 = vmatpush.bf16.msra.mxu0 %v3781
        %4055 = vmatpush.bf16.msra.mxu0 %v3778
        %4056 = vmatpush.bf16.msra.mxu0 %v3775
        %4057 = vmatpush.bf16.msra.mxu0 %v3772
        %4058 = vmatpush.bf16.msra.mxu0 %v3769
        %4059 = vmatpush.bf16.msra.mxu0 %v3766
        %4060 = vmatpush.bf16.msra.mxu0 %v3763
        %4061 = vmatmul.bf16.gmra.mxu0 %v3392
        %v4062 = vpop.f32.mrf.mxu0
        %v4063 = vadd.f32 %v3517, %v4062
        %v4064 = vpop.f32.mrf.mxu0
        %v4065 = vadd.f32 %v3517, %v4064
        %4066 = vmatmul.bf16.gmra.mxu0 %v3395
        %v4067 = vpop.f32.mrf.mxu0
        %v4068 = vadd.f32 %v3517, %v4067
        %v4069 = vpop.f32.mrf.mxu0
        %v4070 = vadd.f32 %v3517, %v4069
        %4071 = vmatmul.bf16.gmra.mxu0 %v3398
        %v4072 = vpop.f32.mrf.mxu0
        %v4073 = vadd.f32 %v3517, %v4072
        %v4074 = vpop.f32.mrf.mxu0
        %v4075 = vadd.f32 %v3517, %v4074
        %4076 = vmatmul.bf16.gmra.mxu0 %v3401
        %v4077 = vpop.f32.mrf.mxu0
        %v4078 = vadd.f32 %v3517, %v4077
        %v4079 = vpop.f32.mrf.mxu0
        %v4080 = vadd.f32 %v3517, %v4079
        %4081 = vmatmul.bf16.gmra.mxu0 %v3404
        %v4082 = vpop.f32.mrf.mxu0
        %v4083 = vadd.f32 %v3517, %v4082
        %v4084 = vpop.f32.mrf.mxu0
        %v4085 = vadd.f32 %v3517, %v4084
        %4086 = vmatmul.bf16.gmra.mxu0 %v3407
        %v4087 = vpop.f32.mrf.mxu0
        %v4088 = vadd.f32 %v3517, %v4087
        %v4089 = vpop.f32.mrf.mxu0
        %v4090 = vadd.f32 %v3517, %v4089
        %4091 = vmatmul.bf16.gmra.mxu0 %v3410
        %v4092 = vpop.f32.mrf.mxu0
        %v4093 = vadd.f32 %v3517, %v4092
        %v4094 = vpop.f32.mrf.mxu0
        %v4095 = vadd.f32 %v3517, %v4094
        %4096 = vmatmul.bf16.gmra.mxu0 %v3413
        %v4097 = vpop.f32.mrf.mxu0
        %v4098 = vadd.f32 %v3517, %v4097
        %v4099 = vpop.f32.mrf.mxu0
        %v4100 = vadd.f32 %v3517, %v4099
        %4101 = vdwg.mxu0
        %4102 = vmatpush.bf16.msra.mxu0 %v3808
        %4103 = vmatpush.bf16.msra.mxu0 %v3805
        %4104 = vmatpush.bf16.msra.mxu0 %v3802
        %4105 = vmatpush.bf16.msra.mxu0 %v3799
        %4106 = vmatpush.bf16.msra.mxu0 %v3796
        %4107 = vmatpush.bf16.msra.mxu0 %v3793
        %4108 = vmatpush.bf16.msra.mxu0 %v3790
        %4109 = vmatpush.bf16.msra.mxu0 %v3787
        %4110 = vmatmul.bf16.gmra.mxu0 %v3393
        %v4111 = vpop.f32.mrf.mxu0
        %v4112 = vadd.f32 %v4063, %v4111
        %v4113 = vpop.f32.mrf.mxu0
        %v4114 = vadd.f32 %v4065, %v4113
        %4115 = vmatmul.bf16.gmra.mxu0 %v3396
        %v4116 = vpop.f32.mrf.mxu0
        %v4117 = vadd.f32 %v4068, %v4116
        %v4118 = vpop.f32.mrf.mxu0
        %v4119 = vadd.f32 %v4070, %v4118
        %4120 = vmatmul.bf16.gmra.mxu0 %v3399
        %v4121 = vpop.f32.mrf.mxu0
        %v4122 = vadd.f32 %v4073, %v4121
        %v4123 = vpop.f32.mrf.mxu0
        %v4124 = vadd.f32 %v4075, %v4123
        %4125 = vmatmul.bf16.gmra.mxu0 %v3402
        %v4126 = vpop.f32.mrf.mxu0
        %v4127 = vadd.f32 %v4078, %v4126
        %v4128 = vpop.f32.mrf.mxu0
        %v4129 = vadd.f32 %v4080, %v4128
        %4130 = vmatmul.bf16.gmra.mxu0 %v3405
        %v4131 = vpop.f32.mrf.mxu0
        %v4132 = vadd.f32 %v4083, %v4131
        %v4133 = vpop.f32.mrf.mxu0
        %v4134 = vadd.f32 %v4085, %v4133
        %4135 = vmatmul.bf16.gmra.mxu0 %v3408
        %v4136 = vpop.f32.mrf.mxu0
        %v4137 = vadd.f32 %v4088, %v4136
        %v4138 = vpop.f32.mrf.mxu0
        %v4139 = vadd.f32 %v4090, %v4138
        %4140 = vmatmul.bf16.gmra.mxu0 %v3411
        %v4141 = vpop.f32.mrf.mxu0
        %v4142 = vadd.f32 %v4093, %v4141
        %v4143 = vpop.f32.mrf.mxu0
        %v4144 = vadd.f32 %v4095, %v4143
        %4145 = vmatmul.bf16.gmra.mxu0 %v3414
        %v4146 = vpop.f32.mrf.mxu0
        %v4147 = vadd.f32 %v4098, %v4146
        %v4148 = vpop.f32.mrf.mxu0
        %v4149 = vadd.f32 %v4100, %v4148
        %4150 = vdwg.mxu0
        %4151 = vmatpush.bf16.msra.mxu0 %v3832
        %4152 = vmatpush.bf16.msra.mxu0 %v3829
        %4153 = vmatpush.bf16.msra.mxu0 %v3826
        %4154 = vmatpush.bf16.msra.mxu0 %v3823
        %4155 = vmatpush.bf16.msra.mxu0 %v3820
        %4156 = vmatpush.bf16.msra.mxu0 %v3817
        %4157 = vmatpush.bf16.msra.mxu0 %v3814
        %4158 = vmatpush.bf16.msra.mxu0 %v3811
        %4159 = vmatmul.bf16.gmra.mxu0 %v3394
        %v4160 = vpop.f32.mrf.mxu0
        %v4161 = vadd.f32 %v4112, %v4160
        %v4162 = vpop.f32.mrf.mxu0
        %v4163 = vadd.f32 %v4114, %v4162
        %4164 = vmatmul.bf16.gmra.mxu0 %v3397
        %v4165 = vpop.f32.mrf.mxu0
        %v4166 = vadd.f32 %v4117, %v4165
        %v4167 = vpop.f32.mrf.mxu0
        %v4168 = vadd.f32 %v4119, %v4167
        %4169 = vmatmul.bf16.gmra.mxu0 %v3400
        %v4170 = vpop.f32.mrf.mxu0
        %v4171 = vadd.f32 %v4122, %v4170
        %v4172 = vpop.f32.mrf.mxu0
        %v4173 = vadd.f32 %v4124, %v4172
        %4174 = vmatmul.bf16.gmra.mxu0 %v3403
        %v4175 = vpop.f32.mrf.mxu0
        %v4176 = vadd.f32 %v4127, %v4175
        %v4177 = vpop.f32.mrf.mxu0
        %v4178 = vadd.f32 %v4129, %v4177
        %4179 = vmatmul.bf16.gmra.mxu0 %v3406
        %v4180 = vpop.f32.mrf.mxu0
        %v4181 = vadd.f32 %v4132, %v4180
        %v4182 = vpop.f32.mrf.mxu0
        %v4183 = vadd.f32 %v4134, %v4182
        %4184 = vmatmul.bf16.gmra.mxu0 %v3409
        %v4185 = vpop.f32.mrf.mxu0
        %v4186 = vadd.f32 %v4137, %v4185
        %v4187 = vpop.f32.mrf.mxu0
        %v4188 = vadd.f32 %v4139, %v4187
        %4189 = vmatmul.bf16.gmra.mxu0 %v3412
        %v4190 = vpop.f32.mrf.mxu0
        %v4191 = vadd.f32 %v4142, %v4190
        %v4192 = vpop.f32.mrf.mxu0
        %v4193 = vadd.f32 %v4144, %v4192
        %4194 = vmatmul.bf16.gmra.mxu0 %v3415
        %v4195 = vpop.f32.mrf.mxu0
        %v4196 = vadd.f32 %v4147, %v4195
        %v4197 = vpop.f32.mrf.mxu0
        %v4198 = vadd.f32 %v4149, %v4197
        %4199 = vdwg.mxu0
        %4200 = vmatpush.bf16.msra.mxu0 %v3785
        %4201 = vmatpush.bf16.msra.mxu0 %v3782
        %4202 = vmatpush.bf16.msra.mxu0 %v3779
        %4203 = vmatpush.bf16.msra.mxu0 %v3776
        %4204 = vmatpush.bf16.msra.mxu0 %v3773
        %4205 = vmatpush.bf16.msra.mxu0 %v3770
        %4206 = vmatpush.bf16.msra.mxu0 %v3767
        %4207 = vmatpush.bf16.msra.mxu0 %v3764
        %4208 = vmatmul.bf16.gmra.mxu0 %v3392
        %v4209 = vpop.f32.mrf.mxu0
        %v4210 = vadd.f32 %v3518, %v4209
        %v4211 = vpop.f32.mrf.mxu0
        %v4212 = vadd.f32 %v3518, %v4211
        %4213 = vmatmul.bf16.gmra.mxu0 %v3395
        %v4214 = vpop.f32.mrf.mxu0
        %v4215 = vadd.f32 %v3518, %v4214
        %v4216 = vpop.f32.mrf.mxu0
        %v4217 = vadd.f32 %v3518, %v4216
        %4218 = vmatmul.bf16.gmra.mxu0 %v3398
        %v4219 = vpop.f32.mrf.mxu0
        %v4220 = vadd.f32 %v3518, %v4219
        %v4221 = vpop.f32.mrf.mxu0
        %v4222 = vadd.f32 %v3518, %v4221
        %4223 = vmatmul.bf16.gmra.mxu0 %v3401
        %v4224 = vpop.f32.mrf.mxu0
        %v4225 = vadd.f32 %v3518, %v4224
        %v4226 = vpop.f32.mrf.mxu0
        %v4227 = vadd.f32 %v3518, %v4226
        %4228 = vmatmul.bf16.gmra.mxu0 %v3404
        %v4229 = vpop.f32.mrf.mxu0
        %v4230 = vadd.f32 %v3518, %v4229
        %v4231 = vpop.f32.mrf.mxu0
        %v4232 = vadd.f32 %v3518, %v4231
        %4233 = vmatmul.bf16.gmra.mxu0 %v3407
        %v4234 = vpop.f32.mrf.mxu0
        %v4235 = vadd.f32 %v3518, %v4234
        %v4236 = vpop.f32.mrf.mxu0
        %v4237 = vadd.f32 %v3518, %v4236
        %4238 = vmatmul.bf16.gmra.mxu0 %v3410
        %v4239 = vpop.f32.mrf.mxu0
        %v4240 = vadd.f32 %v3518, %v4239
        %v4241 = vpop.f32.mrf.mxu0
        %v4242 = vadd.f32 %v3518, %v4241
        %4243 = vmatmul.bf16.gmra.mxu0 %v3413
        %v4244 = vpop.f32.mrf.mxu0
        %v4245 = vadd.f32 %v3518, %v4244
        %v4246 = vpop.f32.mrf.mxu0
        %v4247 = vadd.f32 %v3518, %v4246
        %4248 = vdwg.mxu0
        %4249 = vmatpush.bf16.msra.mxu0 %v3809
        %4250 = vmatpush.bf16.msra.mxu0 %v3806
        %4251 = vmatpush.bf16.msra.mxu0 %v3803
        %4252 = vmatpush.bf16.msra.mxu0 %v3800
        %4253 = vmatpush.bf16.msra.mxu0 %v3797
        %4254 = vmatpush.bf16.msra.mxu0 %v3794
        %4255 = vmatpush.bf16.msra.mxu0 %v3791
        %4256 = vmatpush.bf16.msra.mxu0 %v3788
        %4257 = vmatmul.bf16.gmra.mxu0 %v3393
        %v4258 = vpop.f32.mrf.mxu0
        %v4259 = vadd.f32 %v4210, %v4258
        %v4260 = vpop.f32.mrf.mxu0
        %v4261 = vadd.f32 %v4212, %v4260
        %4262 = vmatmul.bf16.gmra.mxu0 %v3396
        %v4263 = vpop.f32.mrf.mxu0
        %v4264 = vadd.f32 %v4215, %v4263
        %v4265 = vpop.f32.mrf.mxu0
        %v4266 = vadd.f32 %v4217, %v4265
        %4267 = vmatmul.bf16.gmra.mxu0 %v3399
        %v4268 = vpop.f32.mrf.mxu0
        %v4269 = vadd.f32 %v4220, %v4268
        %v4270 = vpop.f32.mrf.mxu0
        %v4271 = vadd.f32 %v4222, %v4270
        %4272 = vmatmul.bf16.gmra.mxu0 %v3402
        %v4273 = vpop.f32.mrf.mxu0
        %v4274 = vadd.f32 %v4225, %v4273
        %v4275 = vpop.f32.mrf.mxu0
        %v4276 = vadd.f32 %v4227, %v4275
        %4277 = vmatmul.bf16.gmra.mxu0 %v3405
        %v4278 = vpop.f32.mrf.mxu0
        %v4279 = vadd.f32 %v4230, %v4278
        %v4280 = vpop.f32.mrf.mxu0
        %v4281 = vadd.f32 %v4232, %v4280
        %4282 = vmatmul.bf16.gmra.mxu0 %v3408
        %v4283 = vpop.f32.mrf.mxu0
        %v4284 = vadd.f32 %v4235, %v4283
        %v4285 = vpop.f32.mrf.mxu0
        %v4286 = vadd.f32 %v4237, %v4285
        %4287 = vmatmul.bf16.gmra.mxu0 %v3411
        %v4288 = vpop.f32.mrf.mxu0
        %v4289 = vadd.f32 %v4240, %v4288
        %v4290 = vpop.f32.mrf.mxu0
        %v4291 = vadd.f32 %v4242, %v4290
        %4292 = vmatmul.bf16.gmra.mxu0 %v3414
        %v4293 = vpop.f32.mrf.mxu0
        %v4294 = vadd.f32 %v4245, %v4293
        %v4295 = vpop.f32.mrf.mxu0
        %v4296 = vadd.f32 %v4247, %v4295
        %4297 = vdwg.mxu0
        %4298 = vmatpush.bf16.msra.mxu0 %v3833
        %4299 = vmatpush.bf16.msra.mxu0 %v3830
        %4300 = vmatpush.bf16.msra.mxu0 %v3827
        %4301 = vmatpush.bf16.msra.mxu0 %v3824
        %4302 = vmatpush.bf16.msra.mxu0 %v3821
        %4303 = vmatpush.bf16.msra.mxu0 %v3818
        %4304 = vmatpush.bf16.msra.mxu0 %v3815
        %4305 = vmatpush.bf16.msra.mxu0 %v3812
        %4306 = vmatmul.bf16.gmra.mxu0 %v3394
        %v4307 = vpop.f32.mrf.mxu0
        %v4308 = vadd.f32 %v4259, %v4307
        %v4309 = vpop.f32.mrf.mxu0
        %v4310 = vadd.f32 %v4261, %v4309
        %4311 = vmatmul.bf16.gmra.mxu0 %v3397
        %v4312 = vpop.f32.mrf.mxu0
        %v4313 = vadd.f32 %v4264, %v4312
        %v4314 = vpop.f32.mrf.mxu0
        %v4315 = vadd.f32 %v4266, %v4314
        %4316 = vmatmul.bf16.gmra.mxu0 %v3400
        %v4317 = vpop.f32.mrf.mxu0
        %v4318 = vadd.f32 %v4269, %v4317
        %v4319 = vpop.f32.mrf.mxu0
        %v4320 = vadd.f32 %v4271, %v4319
        %4321 = vmatmul.bf16.gmra.mxu0 %v3403
        %v4322 = vpop.f32.mrf.mxu0
        %v4323 = vadd.f32 %v4274, %v4322
        %v4324 = vpop.f32.mrf.mxu0
        %v4325 = vadd.f32 %v4276, %v4324
        %4326 = vmatmul.bf16.gmra.mxu0 %v3406
        %v4327 = vpop.f32.mrf.mxu0
        %v4328 = vadd.f32 %v4279, %v4327
        %v4329 = vpop.f32.mrf.mxu0
        %v4330 = vadd.f32 %v4281, %v4329
        %4331 = vmatmul.bf16.gmra.mxu0 %v3409
        %v4332 = vpop.f32.mrf.mxu0
        %v4333 = vadd.f32 %v4284, %v4332
        %v4334 = vpop.f32.mrf.mxu0
        %v4335 = vadd.f32 %v4286, %v4334
        %4336 = vmatmul.bf16.gmra.mxu0 %v3412
        %v4337 = vpop.f32.mrf.mxu0
        %v4338 = vadd.f32 %v4289, %v4337
        %v4339 = vpop.f32.mrf.mxu0
        %v4340 = vadd.f32 %v4291, %v4339
        %4341 = vmatmul.bf16.gmra.mxu0 %v3415
        %v4342 = vpop.f32.mrf.mxu0
        %v4343 = vadd.f32 %v4294, %v4342
        %v4344 = vpop.f32.mrf.mxu0
        %v4345 = vadd.f32 %v4296, %v4344
        %4346 = vdwg.mxu0
        %v4347 = vpack.c.bf16 %v4016, %v4014
        %v4348 = vpack.c.bf16 %v4163, %v4161
        %v4349 = vpack.c.bf16 %v4310, %v4308
        %v4350 = vpack.c.bf16 %v4021, %v4019
        %v4351 = vpack.c.bf16 %v4168, %v4166
        %v4352 = vpack.c.bf16 %v4315, %v4313
        %v4353 = vpack.c.bf16 %v4026, %v4024
        %v4354 = vpack.c.bf16 %v4173, %v4171
        %v4355 = vpack.c.bf16 %v4320, %v4318
        %v4356 = vpack.c.bf16 %v4031, %v4029
        %v4357 = vpack.c.bf16 %v4178, %v4176
        %v4358 = vpack.c.bf16 %v4325, %v4323
        %v4359 = vpack.c.bf16 %v4036, %v4034
        %v4360 = vpack.c.bf16 %v4183, %v4181
        %v4361 = vpack.c.bf16 %v4330, %v4328
        %v4362 = vpack.c.bf16 %v4041, %v4039
        %v4363 = vpack.c.bf16 %v4188, %v4186
        %v4364 = vpack.c.bf16 %v4335, %v4333
        %v4365 = vpack.c.bf16 %v4046, %v4044
        %v4366 = vpack.c.bf16 %v4193, %v4191
        %v4367 = vpack.c.bf16 %v4340, %v4338
        %v4368 = vpack.c.bf16 %v4051, %v4049
        %v4369 = vpack.c.bf16 %v4198, %v4196
        %v4370 = vpack.c.bf16 %v4345, %v4343
        %v4379 = vunpack.c.l.b16 %v3161
        %v4380 = vunpack.c.l.b16 %v3162
        %v4381 = vunpack.c.l.b16 %v3163
        %v4382 = vunpack.c.l.b16 %v3164
        %v4383 = vunpack.c.l.b16 %v3165
        %v4384 = vunpack.c.l.b16 %v3166
        %v4385 = vunpack.c.l.b16 %v3167
        %v4386 = vunpack.c.l.b16 %v3168
        %v4387 = vpack.c.b16 %v4380, %v4379
        %v4388 = vpack.c.b16 %v4382, %v4381
        %v4389 = vpack.c.b16 %v4384, %v4383
        %v4390 = vpack.c.b16 %v4386, %v4385
        %4395 = vmatpush.bf16.msra.mxu0 %v4368
        %4396 = vmatpush.bf16.msra.mxu0 %v4365
        %4397 = vmatpush.bf16.msra.mxu0 %v4362
        %4398 = vmatpush.bf16.msra.mxu0 %v4359
        %4399 = vmatpush.bf16.msra.mxu0 %v4356
        %4400 = vmatpush.bf16.msra.mxu0 %v4353
        %4401 = vmatpush.bf16.msra.mxu0 %v4350
        %4402 = vmatpush.bf16.msra.mxu0 %v4347
        %4403 = vmatmul.bf16.gmra.mxu0 %v4387
        %v4404 = vpop.f32.mrf.mxu0
        %v4405 = vadd.f32 0.0, %v4404
        %v4406 = vpop.f32.mrf.mxu0
        %v4407 = vadd.f32 0.0, %v4406
        %4408 = vmatmul.bf16.gmra.mxu0 %v4388
        %v4409 = vpop.f32.mrf.mxu0
        %v4410 = vadd.f32 0.0, %v4409
        %v4411 = vpop.f32.mrf.mxu0
        %v4412 = vadd.f32 0.0, %v4411
        %4413 = vmatmul.bf16.gmra.mxu0 %v4389
        %v4414 = vpop.f32.mrf.mxu0
        %v4415 = vadd.f32 0.0, %v4414
        %v4416 = vpop.f32.mrf.mxu0
        %v4417 = vadd.f32 0.0, %v4416
        %4418 = vmatmul.bf16.gmra.mxu0 %v4390
        %v4419 = vpop.f32.mrf.mxu0
        %v4420 = vadd.f32 0.0, %v4419
        %v4421 = vpop.f32.mrf.mxu0
        %v4422 = vadd.f32 0.0, %v4421
        %4423 = vdwg.mxu0
        %4424 = vmatpush.bf16.msra.mxu0 %v4369
        %4425 = vmatpush.bf16.msra.mxu0 %v4366
        %4426 = vmatpush.bf16.msra.mxu0 %v4363
        %4427 = vmatpush.bf16.msra.mxu0 %v4360
        %4428 = vmatpush.bf16.msra.mxu0 %v4357
        %4429 = vmatpush.bf16.msra.mxu0 %v4354
        %4430 = vmatpush.bf16.msra.mxu0 %v4351
        %4431 = vmatpush.bf16.msra.mxu0 %v4348
        %4432 = vmatmul.bf16.gmra.mxu0 %v4387
        %v4433 = vpop.f32.mrf.mxu0
        %v4434 = vadd.f32 0.0, %v4433
        %v4435 = vpop.f32.mrf.mxu0
        %v4436 = vadd.f32 0.0, %v4435
        %4437 = vmatmul.bf16.gmra.mxu0 %v4388
        %v4438 = vpop.f32.mrf.mxu0
        %v4439 = vadd.f32 0.0, %v4438
        %v4440 = vpop.f32.mrf.mxu0
        %v4441 = vadd.f32 0.0, %v4440
        %4442 = vmatmul.bf16.gmra.mxu0 %v4389
        %v4443 = vpop.f32.mrf.mxu0
        %v4444 = vadd.f32 0.0, %v4443
        %v4445 = vpop.f32.mrf.mxu0
        %v4446 = vadd.f32 0.0, %v4445
        %4447 = vmatmul.bf16.gmra.mxu0 %v4390
        %v4448 = vpop.f32.mrf.mxu0
        %v4449 = vadd.f32 0.0, %v4448
        %v4450 = vpop.f32.mrf.mxu0
        %v4451 = vadd.f32 0.0, %v4450
        %4452 = vdwg.mxu0
        %4453 = vmatpush.bf16.msra.mxu0 %v4370
        %4454 = vmatpush.bf16.msra.mxu0 %v4367
        %4455 = vmatpush.bf16.msra.mxu0 %v4364
        %4456 = vmatpush.bf16.msra.mxu0 %v4361
        %4457 = vmatpush.bf16.msra.mxu0 %v4358
        %4458 = vmatpush.bf16.msra.mxu0 %v4355
        %4459 = vmatpush.bf16.msra.mxu0 %v4352
        %4460 = vmatpush.bf16.msra.mxu0 %v4349
        %4461 = vmatmul.bf16.gmra.mxu0 %v4387
        %v4462 = vpop.f32.mrf.mxu0
        %v4463 = vadd.f32 0.0, %v4462
        %v4464 = vpop.f32.mrf.mxu0
        %v4465 = vadd.f32 0.0, %v4464
        %4466 = vmatmul.bf16.gmra.mxu0 %v4388
        %v4467 = vpop.f32.mrf.mxu0
        %v4468 = vadd.f32 0.0, %v4467
        %v4469 = vpop.f32.mrf.mxu0
        %v4470 = vadd.f32 0.0, %v4469
        %4471 = vmatmul.bf16.gmra.mxu0 %v4389
        %v4472 = vpop.f32.mrf.mxu0
        %v4473 = vadd.f32 0.0, %v4472
        %v4474 = vpop.f32.mrf.mxu0
        %v4475 = vadd.f32 0.0, %v4474
        %4476 = vmatmul.bf16.gmra.mxu0 %v4390
        %v4477 = vpop.f32.mrf.mxu0
        %v4478 = vadd.f32 0.0, %v4477
        %v4479 = vpop.f32.mrf.mxu0
        %v4480 = vadd.f32 0.0, %v4479
        %4481 = vdwg.mxu0
        %v4482 = vadd.f32 %v3136, %v4405
        %v4483 = vadd.f32 %v3137, %v4434
        %v4484 = vadd.f32 %v3138, %v4463
        %v4485 = vadd.f32 %v3139, %v4407
        %v4486 = vadd.f32 %v3140, %v4436
        %v4487 = vadd.f32 %v3141, %v4465
        %v4488 = vadd.f32 %v3142, %v4410
        %v4489 = vadd.f32 %v3143, %v4439
        %v4490 = vadd.f32 %v3144, %v4468
        %v4491 = vadd.f32 %v3145, %v4412
        %v4492 = vadd.f32 %v3146, %v4441
        %v4493 = vadd.f32 %v3147, %v4470
        %v4494 = vadd.f32 %v3148, %v4415
        %v4495 = vadd.f32 %v3149, %v4444
        %v4496 = vadd.f32 %v3150, %v4473
        %v4497 = vadd.f32 %v3151, %v4417
        %v4498 = vadd.f32 %v3152, %v4446
        %v4499 = vadd.f32 %v3153, %v4475
        %v4500 = vadd.f32 %v3154, %v4420
        %v4501 = vadd.f32 %v3155, %v4449
        %v4502 = vadd.f32 %v3156, %v4478
        %v4503 = vadd.f32 %v3157, %v4422
        %v4504 = vadd.f32 %v3158, %v4451
        %v4505 = vadd.f32 %v3159, %v4480
        %4506 = vst [vmem:[#allocation2] sm:$0xff] %v4482
        %4507 = vst [vmem:[#allocation2 + $0x8] sm:$0xff] %v4483
        %4508 = vst [vmem:[#allocation2 + $0x10] sm:$0xff] %v4484
        %4509 = vst [vmem:[#allocation2 + $0x18] sm:$0xff] %v4485
        %4510 = vst [vmem:[#allocation2 + $0x20] sm:$0xff] %v4486
        %4511 = vst [vmem:[#allocation2 + $0x28] sm:$0xff] %v4487
        %4512 = vst [vmem:[#allocation2 + $0x30] sm:$0xff] %v4488
        %4513 = vst [vmem:[#allocation2 + $0x38] sm:$0xff] %v4489
        %4514 = vst [vmem:[#allocation2 + $0x40] sm:$0xff] %v4490
        %4515 = vst [vmem:[#allocation2 + $0x48] sm:$0xff] %v4491
        %4516 = vst [vmem:[#allocation2 + $0x50] sm:$0xff] %v4492
        %4517 = vst [vmem:[#allocation2 + $0x58] sm:$0xff] %v4493
        %4518 = vst [vmem:[#allocation2 + $0x60] sm:$0xff] %v4494
        %4519 = vst [vmem:[#allocation2 + $0x68] sm:$0xff] %v4495
        %4520 = vst [vmem:[#allocation2 + $0x70] sm:$0xff] %v4496
        %4521 = vst [vmem:[#allocation2 + $0x78] sm:$0xff] %v4497
        %4522 = vst [vmem:[#allocation2 + $0x80] sm:$0xff] %v4498
        %4523 = vst [vmem:[#allocation2 + $0x88] sm:$0xff] %v4499
        %4524 = vst [vmem:[#allocation2 + $0x90] sm:$0xff] %v4500
        %4525 = vst [vmem:[#allocation2 + $0x98] sm:$0xff] %v4501
        %4526 = vst [vmem:[#allocation2 + $0xa0] sm:$0xff] %v4502
        %4527 = vst [vmem:[#allocation2 + $0xa8] sm:$0xff] %v4503
        %4528 = vst [vmem:[#allocation2 + $0xb0] sm:$0xff] %v4504
        %4529 = vst [vmem:[#allocation2 + $0xb8] sm:$0xff] %v4505
        // Predicated region
        $region57: #{tpu_custom_call.1} parent=35 // pred_check
          %p4530 = pneg %p338
        $region58: #{tpu_custom_call.1} parent=35 // pred_check_branch
          %4532 = sbr.rel (%p4530) target = $region60
        $region59: #{tpu_custom_call.1} parent=35 // pred_region
          %v4533 = vld [vmem:[#allocation2] sm:$0xff]
          %v4534 = vld [vmem:[#allocation2 + $0x8] sm:$0xff]
          %v4535 = vld [vmem:[#allocation2 + $0x10] sm:$0xff]
          %v4536 = vld [vmem:[#allocation2 + $0x18] sm:$0xff]
          %v4537 = vld [vmem:[#allocation2 + $0x20] sm:$0xff]
          %v4538 = vld [vmem:[#allocation2 + $0x28] sm:$0xff]
          %v4539 = vld [vmem:[#allocation2 + $0x30] sm:$0xff]
          %v4540 = vld [vmem:[#allocation2 + $0x38] sm:$0xff]
          %v4541 = vld [vmem:[#allocation2 + $0x40] sm:$0xff]
          %v4542 = vld [vmem:[#allocation2 + $0x48] sm:$0xff]
          %v4543 = vld [vmem:[#allocation2 + $0x50] sm:$0xff]
          %v4544 = vld [vmem:[#allocation2 + $0x58] sm:$0xff]
          %v4545 = vld [vmem:[#allocation2 + $0x60] sm:$0xff]
          %v4546 = vld [vmem:[#allocation2 + $0x68] sm:$0xff]
          %v4547 = vld [vmem:[#allocation2 + $0x70] sm:$0xff]
          %v4548 = vld [vmem:[#allocation2 + $0x78] sm:$0xff]
          %v4549 = vld [vmem:[#allocation2 + $0x80] sm:$0xff]
          %v4550 = vld [vmem:[#allocation2 + $0x88] sm:$0xff]
          %v4551 = vld [vmem:[#allocation2 + $0x90] sm:$0xff]
          %v4552 = vld [vmem:[#allocation2 + $0x98] sm:$0xff]
          %v4553 = vld [vmem:[#allocation2 + $0xa0] sm:$0xff]
          %v4554 = vld [vmem:[#allocation2 + $0xa8] sm:$0xff]
          %v4555 = vld [vmem:[#allocation2 + $0xb0] sm:$0xff]
          %v4556 = vld [vmem:[#allocation2 + $0xb8] sm:$0xff]
          %4557 = vst [vmem:[%s333] sm:$0xff] %v4533
          %4558 = vst [vmem:[%s333 + $0x8] sm:$0xff] %v4534
          %4559 = vst [vmem:[%s333 + $0x10] sm:$0xff] %v4535
          %4560 = vst [vmem:[%s333 + $0x18] sm:$0xff] %v4536
          %4561 = vst [vmem:[%s333 + $0x20] sm:$0xff] %v4537
          %4562 = vst [vmem:[%s333 + $0x28] sm:$0xff] %v4538
          %4563 = vst [vmem:[%s333 + $0x30] sm:$0xff] %v4539
          %4564 = vst [vmem:[%s333 + $0x38] sm:$0xff] %v4540
          %4565 = vst [vmem:[%s333 + $0x40] sm:$0xff] %v4541
          %4566 = vst [vmem:[%s333 + $0x48] sm:$0xff] %v4542
          %4567 = vst [vmem:[%s333 + $0x50] sm:$0xff] %v4543
          %4568 = vst [vmem:[%s333 + $0x58] sm:$0xff] %v4544
          %4569 = vst [vmem:[%s333 + $0x60] sm:$0xff] %v4545
          %4570 = vst [vmem:[%s333 + $0x68] sm:$0xff] %v4546
          %4571 = vst [vmem:[%s333 + $0x70] sm:$0xff] %v4547
          %4572 = vst [vmem:[%s333 + $0x78] sm:$0xff] %v4548
          %4573 = vst [vmem:[%s333 + $0x80] sm:$0xff] %v4549
          %4574 = vst [vmem:[%s333 + $0x88] sm:$0xff] %v4550
          %4575 = vst [vmem:[%s333 + $0x90] sm:$0xff] %v4551
          %4576 = vst [vmem:[%s333 + $0x98] sm:$0xff] %v4552
          %4577 = vst [vmem:[%s333 + $0xa0] sm:$0xff] %v4553
          %4578 = vst [vmem:[%s333 + $0xa8] sm:$0xff] %v4554
          %4579 = vst [vmem:[%s333 + $0xb0] sm:$0xff] %v4555
          %4580 = vst [vmem:[%s333 + $0xb8] sm:$0xff] %v4556
        $region60: #{tpu_custom_call.1} parent=35 // pred_fallthru
          _
        %s4581 = sand.u32 %s141, 1
        %s4582 = scalar_lea.sflag [#allocation5], %s4581
        %s4583 = sand.u32 %s141, 1
        %s4584 = smul.addr %s4583, 192
        %s4585 = scalar_lea.vmem [#allocation11], %s4584
        // Predicated region
        $region61: #{tpu_custom_call.1} parent=35 // pred_check
          %p4586 = pneg %p151
        $region62: #{tpu_custom_call.1} parent=35 // pred_check_branch
          %4588 = sbr.rel (%p4586) target = $region64
        $region63: #{tpu_custom_call.1} parent=35 // pred_region
          %s4589 = smul.u32 8, %s29
          %4591 = vsyncadd %s4582, 0
          %s4592 = smul.addr %s4589, 3
          %s4593 = smul.addr %s4592, 8
          %s4594 = scalar_lea.hbm %s4, %s4593
          %s4595 = sshll.u32 %s4585, 4
          %s4596 = int_to_ptr.vmem [resolvable:$true] %s4595
          %s4597 = sshll.u32 %s4594, 4
          %s4598 = int_to_ptr.hbm [resolvable:$true] %s4597
          %4603 = dma.vmem_to_hbm [thread:$0]  %s4596, 3072, %s4598, %s4582, 384, 384, 24
        $region64: #{tpu_custom_call.1} parent=35 // pred_fallthru
          _
      $region36: #{tpu_custom_call.1} parent=5 // pred_fallthru
        _
      %p4604 = scmp.le.s32.totalorder 2, %s20
      // Predicated region
      $region65: #{tpu_custom_call.1} parent=5 // pred_check
        %p4605 = pneg %p4604
      $region66: #{tpu_custom_call.1} parent=5 // pred_check_branch
        %4607 = sbr.rel (%p4605) target = $region68
      $region67: #{tpu_custom_call.1} parent=5 // pred_region
        %s4608 = ssub.s32 %s20, 2
        // Predicated region
        $region69: #{tpu_custom_call.1} parent=67 // pred_check
          %p4609 = pneg %p157
        $region70: #{tpu_custom_call.1} parent=67 // pred_check_branch
          %4611 = sbr.rel (%p4609) target = $region72
        $region71: #{tpu_custom_call.1} parent=67 // pred_region
          %s4612 = sand.u32 %s142, 1
          %s4613 = scalar_lea.sflag [#allocation5], %s4612
          %s4614 = sand.u32 %s142, 1
          %s4615 = smul.addr %s4614, 192
          %s4616 = scalar_lea.vmem [#allocation11], %s4615
          %4618 = dma.done %s4613, 3072
        $region72: #{tpu_custom_call.1} parent=67 // pred_fallthru
          _
      $region68: #{tpu_custom_call.1} parent=5 // pred_fallthru
        _
    $region6: #{tpu_custom_call.1} parent=1 // loop_footer
      %s24 = sadd.s32 1, %s20
    $region7: #{tpu_custom_call.1} parent=1 // loop_footer_branch
      %19 = sbr.rel target = $region3
    $region8: #{tpu_custom_call.1} parent=1 // loop_exit
      _
    %4619 = vsyncpa [#allocation4], 1
    %s4620 = scalar_lea.sflag [#allocation4], 1
    %4621 = vsyncpa %s4620, 1
    %4622 = vsyncpa [#allocation7], 1
    %s4623 = scalar_lea.sflag [#allocation7], 1
    %4624 = vsyncpa %s4623, 1
    %4625 = vsyncpa [#allocation10], 1
    %4626 = vsyncpa [#allocation5], 1
    %s4627 = scalar_lea.sflag [#allocation5], 1
    %4628 = vsyncpa %s4627, 1

</llo_original>
